<compile_context>
chip_gen: v7x
topology: tpu7x:2x2x1
jax: 0.10.0
libtpu: 0.0.40
codegen_flags: <defaults>
</compile_context>

<pallas_src>
import numpy as np
import jax
import jax.numpy as jnp
from jax.experimental import pallas as pl
from jax.experimental.pallas import tpu as pltpu

LANES = 128  # output-channel lane padding (OC <= 128 for every layer here)


def _round_up(x, m):
    return ((x + m - 1) // m) * m


def _im2col(x, kh, kw, stride):
    """x: (N,C,H,W) -> (N, OH, OW, C*KH*KW); column ordering matches
    PyTorch weight.reshape(OC, C*KH*KW)."""
    n, c, h, w = x.shape
    oh = (h - kh) // stride + 1
    ow = (w - kw) // stride + 1
    cols = []
    for i in range(kh):
        for j in range(kw):
            cols.append(x[:, :,
                          i:i + stride * (oh - 1) + 1:stride,
                          j:j + stride * (ow - 1) + 1:stride])
    p = jnp.stack(cols, axis=2)                   # (N, C, KH*KW, OH, OW)
    p = p.reshape(n, c * kh * kw, oh, ow)
    p = jnp.transpose(p, (0, 2, 3, 1))            # (N, OH, OW, C*KH*KW)
    return p, oh, ow


def _parity_block(p, oh, ow):
    """(N,OH,OW,K) -> (N, 4*hl*wl, K) with rows ordered (y%2, x%2, y//2, x//2).

    With this layout every stride-2 conv tap reads a CONTIGUOUS row range.
    Odd OH/OW are handled by zero-padding the spatial grid to even sizes."""
    n, _, _, kk = p.shape
    hl, wl = -(-oh // 2), -(-ow // 2)
    p = jnp.pad(p, ((0, 0), (0, 2 * hl - oh), (0, 2 * wl - ow), (0, 0)))
    p = p.reshape(n, hl, 2, wl, 2, kk)
    p = jnp.transpose(p, (0, 2, 4, 1, 3, 5))      # (N, py, px, yl, xl, K)
    return p.reshape(n, 4 * hl * wl, kk), hl, wl


def _pack_w_matmul(w, k_pad):
    """(OC,C,KH,KW) -> (k_pad, 128) bf16 in im2col (c,kh,kw) ordering."""
    oc, c, kh, kw = w.shape
    assert oc <= LANES
    wm = w.reshape(oc, c * kh * kw).T
    wm = jnp.pad(wm, ((0, k_pad - c * kh * kw), (0, LANES - oc)))
    return wm.astype(jnp.bfloat16)


def _pack_w_taps(w):
    """(OC,CI,KH,KW) -> (KH*KW, 128, 128) bf16; [tap, ci, oc], zero padded."""
    oc, ci, kh, kw = w.shape
    assert oc <= LANES and ci <= LANES
    wt = jnp.transpose(w, (2, 3, 1, 0)).reshape(kh * kw, ci, oc)
    wt = jnp.pad(wt, ((0, 0), (0, LANES - ci), (0, LANES - oc)))
    return wt.astype(jnp.bfloat16)


def _pack_b(b):
    return jnp.pad(b.astype(jnp.float32), (0, LANES - b.shape[0])).reshape(1, LANES)


def _make_features_kernel(hl, wl, oh3, ow3, k2, k3, t2, t2p, m3p):
    """All sizes are compile-time constants -> fully static loops/slices.

    a1 layout: parity-blocked, row = p*hl*wl + yl*wl + xl, p = (y%2)*2 + x%2.
    a2 layout: "wide", row = y2*wl + x2 (columns x2 >= ow2 are garbage and
    never read for valid outputs)."""
    part = hl * wl                       # rows per parity partition of a1
    t3 = (oh3 - 1) * wl + ow3            # wide row count of layer-3 output
    m3 = oh3 * ow3

    def kernel(p1_ref, w1_ref, b1_ref, w2_ref, b2_ref, w3_ref, b3_ref,
               o_ref, a1_ref, a2_ref):
        # ---- layer 1: one MXU matmul over im2col patches, fused bias+ReLU ----
        y1 = jnp.dot(p1_ref[0], w1_ref[...], preferred_element_type=jnp.float32)
        a1_ref[...] = jnp.maximum(y1 + b1_ref[...], 0.0)     # (M1p,128) f32

        # ---- layer 2 (stride 2): one contiguous slab read per tap ----
        acc2 = jnp.broadcast_to(b2_ref[...], (t2, LANES))
        for i in range(k2):
            for j in range(k2):
                start = ((i % 2) * 2 + (j % 2)) * part + (i // 2) * wl + (j // 2)
                lhs = a1_ref[pl.ds(start, t2), :].astype(jnp.bfloat16)
                acc2 = acc2 + jnp.dot(lhs, w2_ref[i * k2 + j],
                                      preferred_element_type=jnp.float32)
        a2 = jnp.maximum(acc2, 0.0)
        if t2p > t2:
            a2 = jnp.concatenate(
                [a2, jnp.zeros((t2p - t2, LANES), jnp.float32)], axis=0)
        a2_ref[...] = a2                                       # (T2p,128) f32

        # ---- layer 3 (stride 1): one contiguous slab read per tap ----
        acc3 = jnp.broadcast_to(b3_ref[...], (t3, LANES))
        for i in range(k3):
            for j in range(k3):
                start = i * wl + j
                lhs = a2_ref[pl.ds(start, t3), :].astype(jnp.bfloat16)
                acc3 = acc3 + jnp.dot(lhs, w3_ref[i * k3 + j],
                                      preferred_element_type=jnp.float32)
        act3 = jnp.maximum(acc3, 0.0)

        # Compact extraction: valid wide rows are y*wl + [0, ow3).
        rows = [act3[y * wl:y * wl + ow3] for y in range(oh3)]
        if m3p > m3:
            rows.append(jnp.zeros((m3p - m3, LANES), jnp.float32))
        o_ref[0] = jnp.concatenate(rows, axis=0) if len(rows) > 1 else rows[0]

    return kernel


def features_forward(params, x):
    w1, b1 = params["w1"], params["b1"]
    w2, b2 = params["w2"], params["b2"]
    w3, b3 = params["w3"], params["b3"]
    n, cin, h, w = x.shape
    k1, s1 = w1.shape[2], 4
    k2, s2 = w2.shape[2], 2
    k3, s3 = w3.shape[2], 1
    oc3 = w3.shape[0]
    assert s2 == 2 and s3 == 1  # layouts below are specialized to the module

    # Layer-1 im2col on the raw input (plain-JAX glue, bf16 to halve bytes),
    # then parity-block the patch rows so layer-2 taps read contiguously.
    patches, oh1, ow1 = _im2col(x.astype(jnp.bfloat16), k1, k1, s1)
    patches, hl, wl = _parity_block(patches, oh1, ow1)

    oh2, ow2 = (oh1 - k2) // s2 + 1, (ow1 - k2) // s2 + 1
    oh3, ow3 = (oh2 - k3) // s3 + 1, (ow2 - k3) // s3 + 1

    kk1 = cin * k1 * k1
    m1 = 4 * hl * wl
    m1p, k1p = _round_up(m1, 8), _round_up(kk1, LANES)
    t2 = (oh2 - 1) * wl + ow2            # wide row count of layer-2 output
    t2p = _round_up(t2, 8)
    m3, m3p = oh3 * ow3, _round_up(oh3 * ow3, 8)

    patches = jnp.pad(patches, ((0, 0), (0, m1p - m1), (0, k1p - kk1)))
    w1p, b1p = _pack_w_matmul(w1, k1p), _pack_b(b1)
    w2p, b2p = _pack_w_taps(w2), _pack_b(b2)
    w3p, b3p = _pack_w_taps(w3), _pack_b(b3)

    kernel = _make_features_kernel(hl, wl, oh3, ow3, k2, k3, t2, t2p, m3p)

    out = pl.pallas_call(
        kernel,
        out_shape=jax.ShapeDtypeStruct((n, m3p, LANES), jnp.float32),
        grid_spec=pltpu.PrefetchScalarGridSpec(
            num_scalar_prefetch=0,
            grid=(n,),                                     # one image per step
            in_specs=[
                pl.BlockSpec((1, m1p, k1p), lambda b: (b, 0, 0)),       # patches
                pl.BlockSpec((k1p, LANES), lambda b: (0, 0)),           # W1
                pl.BlockSpec((1, LANES), lambda b: (0, 0)),             # b1
                pl.BlockSpec((k2 * k2, LANES, LANES), lambda b: (0, 0, 0)),  # W2
                pl.BlockSpec((1, LANES), lambda b: (0, 0)),             # b2
                pl.BlockSpec((k3 * k3, LANES, LANES), lambda b: (0, 0, 0)),  # W3
                pl.BlockSpec((1, LANES), lambda b: (0, 0)),             # b3
            ],
            out_specs=pl.BlockSpec((1, m3p, LANES), lambda b: (b, 0, 0)),
            scratch_shapes=[
                pltpu.VMEM((m1p, LANES), jnp.float32),   # layer-1 activation
                pltpu.VMEM((t2p, LANES), jnp.float32),   # layer-2 activation
            ],
        ),
        compiler_params=pltpu.CompilerParams(
            dimension_semantics=("parallel",)),
    )(patches, w1p, b1p, w2p, b2p, w3p, b3p)

    # Only the module boundary converts back to NCHW (PyTorch semantics).
    out = out[:, :m3, :oc3].reshape(n, oh3, ow3, oc3)
    return jnp.transpose(out, (0, 3, 1, 2))


def make_features_params(key, in_channels):
    """Deterministic synthetic parameters (shapes match nn.Conv2d in module)."""
    k = jax.random.split(key, 6)
    return {
        "w1": jax.random.normal(k[0], (32, in_channels, 8, 8), jnp.float32) * 0.05,
        "b1": jax.random.normal(k[1], (32,), jnp.float32) * 0.05,
        "w2": jax.random.normal(k[2], (64, 32, 4, 4), jnp.float32) * 0.05,
        "b2": jax.random.normal(k[3], (64,), jnp.float32) * 0.05,
        "w3": jax.random.normal(k[4], (64, 64, 3, 3), jnp.float32) * 0.05,
        "b3": jax.random.normal(k[5], (64,), jnp.float32) * 0.05,
    }


def _ref_conv_relu(x, w, b, s):
    y = jax.lax.conv_general_dilated(
        x, w, (s, s), "VALID", dimension_numbers=("NCHW", "OIHW", "NCHW"))
    return jnp.maximum(y + b[None, :, None, None], 0.0)


if __name__ == "__main__":
    key = jax.random.PRNGKey(0)
    kx, kp = jax.random.split(key)

    # Smallest "natural" input for this conv stack: (2, 4, 52, 52) -> (2, 64, 3, 3)
    N, C, H, W = 2, 4, 52, 52
    x = jax.random.normal(kx, (N, C, H, W), jnp.float32)
    params = make_features_params(kp, C)

    fwd = jax.jit(lambda xx: features_forward(params, xx))
    out = jax.block_until_ready(fwd(x))

    # Reference check against XLA conv (f32); kernel uses bf16 MXU operands.
    ref = _ref_conv_relu(x, params["w1"], params["b1"], 4)
    ref = _ref_conv_relu(ref, params["w2"], params["b2"], 2)
    ref = _ref_conv_relu(ref, params["w3"], params["b3"], 1)

    assert out.shape == (N, 64, 3, 3), out.shape
    assert np.allclose(np.asarray(out), np.asarray(ref), rtol=2e-2, atol=3e-2)
    print("KERNEL_OK")
</pallas_src>

<mosaic_0001>
module attributes {stable_mosaic.version = 11 : i64} {
  func.func @kernel(%arg0: i32, %arg1: memref<1x144x256xbf16, #tpu.memory_space<vmem>>, %arg2: memref<256x128xbf16, #tpu.memory_space<vmem>>, %arg3: memref<1x128xf32, #tpu.memory_space<vmem>>, %arg4: memref<16x128x128xbf16, #tpu.memory_space<vmem>>, %arg5: memref<1x128xf32, #tpu.memory_space<vmem>>, %arg6: memref<9x128x128xbf16, #tpu.memory_space<vmem>>, %arg7: memref<1x128xf32, #tpu.memory_space<vmem>>, %arg8: memref<1x16x128xf32, #tpu.memory_space<vmem>>, %arg9: memref<144x128xf32, #tpu.memory_space<vmem>>, %arg10: memref<32x128xf32, #tpu.memory_space<vmem>>) attributes {dimension_semantics = [#tpu.dimension_semantics<parallel>], iteration_bounds = array<i64: 2>, scalar_prefetch = 0 : i64, scratch_operands = 2 : i64, tpu.core_type = #tpu.core_type<tc>, window_params = [{transform_indices = @transform_0, window_bounds = array<i64: 1, 144, 256>}, {pipeline_mode = #tpu.pipeline_mode<synchronous>, transform_indices = @transform_1, window_bounds = array<i64: 256, 128>}, {pipeline_mode = #tpu.pipeline_mode<synchronous>, transform_indices = @transform_2, window_bounds = array<i64: 1, 128>}, {pipeline_mode = #tpu.pipeline_mode<synchronous>, transform_indices = @transform_3, window_bounds = array<i64: 16, 128, 128>}, {pipeline_mode = #tpu.pipeline_mode<synchronous>, transform_indices = @transform_4, window_bounds = array<i64: 1, 128>}, {pipeline_mode = #tpu.pipeline_mode<synchronous>, transform_indices = @transform_5, window_bounds = array<i64: 9, 128, 128>}, {pipeline_mode = #tpu.pipeline_mode<synchronous>, transform_indices = @transform_6, window_bounds = array<i64: 1, 128>}, {transform_indices = @transform_7, window_bounds = array<i64: 1, 16, 128>}]} {
    %c0 = arith.constant 0 : index
    %c0_0 = arith.constant 0 : index
    %c0_1 = arith.constant 0 : index
    %0 = vector.load %arg1[%c0, %c0_0, %c0_1] : memref<1x144x256xbf16, #tpu.memory_space<vmem>>, vector<1x144x256xbf16>
    %1 = vector.shape_cast %0 : vector<1x144x256xbf16> to vector<144x256xbf16>
    %c0_2 = arith.constant 0 : index
    %c0_3 = arith.constant 0 : index
    %2 = vector.load %arg2[%c0_2, %c0_3] : memref<256x128xbf16, #tpu.memory_space<vmem>>, vector<256x128xbf16>
    %cst = arith.constant dense<0.000000e+00> : vector<144x128xf32>
    %3 = tpu.matmul %1, %2, %cst {dimension_numbers = #tpu.dot_dimension_numbers<[1], [0], [0], [1], [0, 0, 1, 1], [], []>} : vector<144x256xbf16>, vector<256x128xbf16>, vector<144x128xf32> -> vector<144x128xf32>
    %c0_4 = arith.constant 0 : index
    %c0_5 = arith.constant 0 : index
    %4 = vector.load %arg3[%c0_4, %c0_5] : memref<1x128xf32, #tpu.memory_space<vmem>>, vector<1x128xf32>
    %5 = vector.broadcast %4 : vector<1x128xf32> to vector<144x128xf32>
    %6 = arith.addf %3, %5 : vector<144x128xf32>
    %cst_6 = arith.constant 0.000000e+00 : f32
    %7 = vector.broadcast %cst_6 : f32 to vector<144x128xf32>
    %8 = arith.maximumf %6, %7 : vector<144x128xf32>
    %c0_7 = arith.constant 0 : index
    %c0_8 = arith.constant 0 : index
    %9 = vector.load %arg9[%c0_7, %c0_8] : memref<144x128xf32, #tpu.memory_space<vmem>>, vector<144x128xf32>
    tpu.vector_store %arg9[%c0_7, %c0_8], %8 {strides = array<i32>} : memref<144x128xf32, #tpu.memory_space<vmem>>, vector<144x128xf32>,
    %c0_9 = arith.constant 0 : index
    %c0_10 = arith.constant 0 : index
    %10 = vector.load %arg5[%c0_9, %c0_10] : memref<1x128xf32, #tpu.memory_space<vmem>>, vector<1x128xf32>
    %11 = vector.shape_cast %10 : vector<1x128xf32> to vector<1x128xf32>
    %12 = vector.broadcast %11 : vector<1x128xf32> to vector<29x128xf32>
    %c0_11 = arith.constant 0 : index
    %c0_12 = arith.constant 0 : index
    %13 = vector.load %arg9[%c0_11, %c0_12] : memref<144x128xf32, #tpu.memory_space<vmem>>, vector<29x128xf32>
    %14 = arith.truncf %13 : vector<29x128xf32> to vector<29x128xbf16>
    %c0_13 = arith.constant 0 : index
    %c0_14 = arith.constant 0 : index
    %c0_15 = arith.constant 0 : index
    %15 = vector.load %arg4[%c0_13, %c0_14, %c0_15] : memref<16x128x128xbf16, #tpu.memory_space<vmem>>, vector<1x128x128xbf16>
    %16 = vector.shape_cast %15 : vector<1x128x128xbf16> to vector<128x128xbf16>
    %cst_16 = arith.constant dense<0.000000e+00> : vector<29x128xf32>
    %17 = tpu.matmul %14, %16, %cst_16 {dimension_numbers = #tpu.dot_dimension_numbers<[1], [0], [0], [1], [0, 0, 1, 1], [], []>} : vector<29x128xbf16>, vector<128x128xbf16>, vector<29x128xf32> -> vector<29x128xf32>
    %18 = arith.addf %12, %17 : vector<29x128xf32>
    %c36 = arith.constant 36 : index
    %c0_17 = arith.constant 0 : index
    %19 = vector.load %arg9[%c36, %c0_17] : memref<144x128xf32, #tpu.memory_space<vmem>>, vector<29x128xf32>
    %20 = arith.truncf %19 : vector<29x128xf32> to vector<29x128xbf16>
    %c1 = arith.constant 1 : index
    %c0_18 = arith.constant 0 : index
    %c0_19 = arith.constant 0 : index
    %21 = vector.load %arg4[%c1, %c0_18, %c0_19] : memref<16x128x128xbf16, #tpu.memory_space<vmem>>, vector<1x128x128xbf16>
    %22 = vector.shape_cast %21 : vector<1x128x128xbf16> to vector<128x128xbf16>
    %cst_20 = arith.constant dense<0.000000e+00> : vector<29x128xf32>
    %23 = tpu.matmul %20, %22, %cst_20 {dimension_numbers = #tpu.dot_dimension_numbers<[1], [0], [0], [1], [0, 0, 1, 1], [], []>} : vector<29x128xbf16>, vector<128x128xbf16>, vector<29x128xf32> -> vector<29x128xf32>
    %24 = arith.addf %18, %23 : vector<29x128xf32>
    %c1_21 = arith.constant 1 : index
    %c0_22 = arith.constant 0 : index
    %25 = vector.load %arg9[%c1_21, %c0_22] : memref<144x128xf32, #tpu.memory_space<vmem>>, vector<29x128xf32>
    %26 = arith.truncf %25 : vector<29x128xf32> to vector<29x128xbf16>
    %c2 = arith.constant 2 : index
    %c0_23 = arith.constant 0 : index
    %c0_24 = arith.constant 0 : index
    %27 = vector.load %arg4[%c2, %c0_23, %c0_24] : memref<16x128x128xbf16, #tpu.memory_space<vmem>>, vector<1x128x128xbf16>
    %28 = vector.shape_cast %27 : vector<1x128x128xbf16> to vector<128x128xbf16>
    %cst_25 = arith.constant dense<0.000000e+00> : vector<29x128xf32>
    %29 = tpu.matmul %26, %28, %cst_25 {dimension_numbers = #tpu.dot_dimension_numbers<[1], [0], [0], [1], [0, 0, 1, 1], [], []>} : vector<29x128xbf16>, vector<128x128xbf16>, vector<29x128xf32> -> vector<29x128xf32>
    %30 = arith.addf %24, %29 : vector<29x128xf32>
    %c37 = arith.constant 37 : index
    %c0_26 = arith.constant 0 : index
    %31 = vector.load %arg9[%c37, %c0_26] : memref<144x128xf32, #tpu.memory_space<vmem>>, vector<29x128xf32>
    %32 = arith.truncf %31 : vector<29x128xf32> to vector<29x128xbf16>
    %c3 = arith.constant 3 : index
    %c0_27 = arith.constant 0 : index
    %c0_28 = arith.constant 0 : index
    %33 = vector.load %arg4[%c3, %c0_27, %c0_28] : memref<16x128x128xbf16, #tpu.memory_space<vmem>>, vector<1x128x128xbf16>
    %34 = vector.shape_cast %33 : vector<1x128x128xbf16> to vector<128x128xbf16>
    %cst_29 = arith.constant dense<0.000000e+00> : vector<29x128xf32>
    %35 = tpu.matmul %32, %34, %cst_29 {dimension_numbers = #tpu.dot_dimension_numbers<[1], [0], [0], [1], [0, 0, 1, 1], [], []>} : vector<29x128xbf16>, vector<128x128xbf16>, vector<29x128xf32> -> vector<29x128xf32>
    %36 = arith.addf %30, %35 : vector<29x128xf32>
    %c72 = arith.constant 72 : index
    %c0_30 = arith.constant 0 : index
    %37 = vector.load %arg9[%c72, %c0_30] : memref<144x128xf32, #tpu.memory_space<vmem>>, vector<29x128xf32>
    %38 = arith.truncf %37 : vector<29x128xf32> to vector<29x128xbf16>
    %c4 = arith.constant 4 : index
    %c0_31 = arith.constant 0 : index
    %c0_32 = arith.constant 0 : index
    %39 = vector.load %arg4[%c4, %c0_31, %c0_32] : memref<16x128x128xbf16, #tpu.memory_space<vmem>>, vector<1x128x128xbf16>
    %40 = vector.shape_cast %39 : vector<1x128x128xbf16> to vector<128x128xbf16>
    %cst_33 = arith.constant dense<0.000000e+00> : vector<29x128xf32>
    %41 = tpu.matmul %38, %40, %cst_33 {dimension_numbers = #tpu.dot_dimension_numbers<[1], [0], [0], [1], [0, 0, 1, 1], [], []>} : vector<29x128xbf16>, vector<128x128xbf16>, vector<29x128xf32> -> vector<29x128xf32>
    %42 = arith.addf %36, %41 : vector<29x128xf32>
    %c108 = arith.constant 108 : index
    %c0_34 = arith.constant 0 : index
    %43 = vector.load %arg9[%c108, %c0_34] : memref<144x128xf32, #tpu.memory_space<vmem>>, vector<29x128xf32>
    %44 = arith.truncf %43 : vector<29x128xf32> to vector<29x128xbf16>
    %c5 = arith.constant 5 : index
    %c0_35 = arith.constant 0 : index
    %c0_36 = arith.constant 0 : index
    %45 = vector.load %arg4[%c5, %c0_35, %c0_36] : memref<16x128x128xbf16, #tpu.memory_space<vmem>>, vector<1x128x128xbf16>
    %46 = vector.shape_cast %45 : vector<1x128x128xbf16> to vector<128x128xbf16>
    %cst_37 = arith.constant dense<0.000000e+00> : vector<29x128xf32>
    %47 = tpu.matmul %44, %46, %cst_37 {dimension_numbers = #tpu.dot_dimension_numbers<[1], [0], [0], [1], [0, 0, 1, 1], [], []>} : vector<29x128xbf16>, vector<128x128xbf16>, vector<29x128xf32> -> vector<29x128xf32>
    %48 = arith.addf %42, %47 : vector<29x128xf32>
    %c73 = arith.constant 73 : index
    %c0_38 = arith.constant 0 : index
    %49 = vector.load %arg9[%c73, %c0_38] : memref<144x128xf32, #tpu.memory_space<vmem>>, vector<29x128xf32>
    %50 = arith.truncf %49 : vector<29x128xf32> to vector<29x128xbf16>
    %c6 = arith.constant 6 : index
    %c0_39 = arith.constant 0 : index
    %c0_40 = arith.constant 0 : index
    %51 = vector.load %arg4[%c6, %c0_39, %c0_40] : memref<16x128x128xbf16, #tpu.memory_space<vmem>>, vector<1x128x128xbf16>
    %52 = vector.shape_cast %51 : vector<1x128x128xbf16> to vector<128x128xbf16>
    %cst_41 = arith.constant dense<0.000000e+00> : vector<29x128xf32>
    %53 = tpu.matmul %50, %52, %cst_41 {dimension_numbers = #tpu.dot_dimension_numbers<[1], [0], [0], [1], [0, 0, 1, 1], [], []>} : vector<29x128xbf16>, vector<128x128xbf16>, vector<29x128xf32> -> vector<29x128xf32>
    %54 = arith.addf %48, %53 : vector<29x128xf32>
    %c109 = arith.constant 109 : index
    %c0_42 = arith.constant 0 : index
    %55 = vector.load %arg9[%c109, %c0_42] : memref<144x128xf32, #tpu.memory_space<vmem>>, vector<29x128xf32>
    %56 = arith.truncf %55 : vector<29x128xf32> to vector<29x128xbf16>
    %c7 = arith.constant 7 : index
    %c0_43 = arith.constant 0 : index
    %c0_44 = arith.constant 0 : index
    %57 = vector.load %arg4[%c7, %c0_43, %c0_44] : memref<16x128x128xbf16, #tpu.memory_space<vmem>>, vector<1x128x128xbf16>
    %58 = vector.shape_cast %57 : vector<1x128x128xbf16> to vector<128x128xbf16>
    %cst_45 = arith.constant dense<0.000000e+00> : vector<29x128xf32>
    %59 = tpu.matmul %56, %58, %cst_45 {dimension_numbers = #tpu.dot_dimension_numbers<[1], [0], [0], [1], [0, 0, 1, 1], [], []>} : vector<29x128xbf16>, vector<128x128xbf16>, vector<29x128xf32> -> vector<29x128xf32>
    %60 = arith.addf %54, %59 : vector<29x128xf32>
    %c6_46 = arith.constant 6 : index
    %c0_47 = arith.constant 0 : index
    %61 = vector.load %arg9[%c6_46, %c0_47] : memref<144x128xf32, #tpu.memory_space<vmem>>, vector<29x128xf32>
    %62 = arith.truncf %61 : vector<29x128xf32> to vector<29x128xbf16>
    %c8 = arith.constant 8 : index
    %c0_48 = arith.constant 0 : index
    %c0_49 = arith.constant 0 : index
    %63 = vector.load %arg4[%c8, %c0_48, %c0_49] : memref<16x128x128xbf16, #tpu.memory_space<vmem>>, vector<1x128x128xbf16>
    %64 = vector.shape_cast %63 : vector<1x128x128xbf16> to vector<128x128xbf16>
    %cst_50 = arith.constant dense<0.000000e+00> : vector<29x128xf32>
    %65 = tpu.matmul %62, %64, %cst_50 {dimension_numbers = #tpu.dot_dimension_numbers<[1], [0], [0], [1], [0, 0, 1, 1], [], []>} : vector<29x128xbf16>, vector<128x128xbf16>, vector<29x128xf32> -> vector<29x128xf32>
    %66 = arith.addf %60, %65 : vector<29x128xf32>
    %c42 = arith.constant 42 : index
    %c0_51 = arith.constant 0 : index
    %67 = vector.load %arg9[%c42, %c0_51] : memref<144x128xf32, #tpu.memory_space<vmem>>, vector<29x128xf32>
    %68 = arith.truncf %67 : vector<29x128xf32> to vector<29x128xbf16>
    %c9 = arith.constant 9 : index
    %c0_52 = arith.constant 0 : index
    %c0_53 = arith.constant 0 : index
    %69 = vector.load %arg4[%c9, %c0_52, %c0_53] : memref<16x128x128xbf16, #tpu.memory_space<vmem>>, vector<1x128x128xbf16>
    %70 = vector.shape_cast %69 : vector<1x128x128xbf16> to vector<128x128xbf16>
    %cst_54 = arith.constant dense<0.000000e+00> : vector<29x128xf32>
    %71 = tpu.matmul %68, %70, %cst_54 {dimension_numbers = #tpu.dot_dimension_numbers<[1], [0], [0], [1], [0, 0, 1, 1], [], []>} : vector<29x128xbf16>, vector<128x128xbf16>, vector<29x128xf32> -> vector<29x128xf32>
    %72 = arith.addf %66, %71 : vector<29x128xf32>
    %c7_55 = arith.constant 7 : index
    %c0_56 = arith.constant 0 : index
    %73 = vector.load %arg9[%c7_55, %c0_56] : memref<144x128xf32, #tpu.memory_space<vmem>>, vector<29x128xf32>
    %74 = arith.truncf %73 : vector<29x128xf32> to vector<29x128xbf16>
    %c10 = arith.constant 10 : index
    %c0_57 = arith.constant 0 : index
    %c0_58 = arith.constant 0 : index
    %75 = vector.load %arg4[%c10, %c0_57, %c0_58] : memref<16x128x128xbf16, #tpu.memory_space<vmem>>, vector<1x128x128xbf16>
    %76 = vector.shape_cast %75 : vector<1x128x128xbf16> to vector<128x128xbf16>
    %cst_59 = arith.constant dense<0.000000e+00> : vector<29x128xf32>
    %77 = tpu.matmul %74, %76, %cst_59 {dimension_numbers = #tpu.dot_dimension_numbers<[1], [0], [0], [1], [0, 0, 1, 1], [], []>} : vector<29x128xbf16>, vector<128x128xbf16>, vector<29x128xf32> -> vector<29x128xf32>
    %78 = arith.addf %72, %77 : vector<29x128xf32>
    %c43 = arith.constant 43 : index
    %c0_60 = arith.constant 0 : index
    %79 = vector.load %arg9[%c43, %c0_60] : memref<144x128xf32, #tpu.memory_space<vmem>>, vector<29x128xf32>
    %80 = arith.truncf %79 : vector<29x128xf32> to vector<29x128xbf16>
    %c11 = arith.constant 11 : index
    %c0_61 = arith.constant 0 : index
    %c0_62 = arith.constant 0 : index
    %81 = vector.load %arg4[%c11, %c0_61, %c0_62] : memref<16x128x128xbf16, #tpu.memory_space<vmem>>, vector<1x128x128xbf16>
    %82 = vector.shape_cast %81 : vector<1x128x128xbf16> to vector<128x128xbf16>
    %cst_63 = arith.constant dense<0.000000e+00> : vector<29x128xf32>
    %83 = tpu.matmul %80, %82, %cst_63 {dimension_numbers = #tpu.dot_dimension_numbers<[1], [0], [0], [1], [0, 0, 1, 1], [], []>} : vector<29x128xbf16>, vector<128x128xbf16>, vector<29x128xf32> -> vector<29x128xf32>
    %84 = arith.addf %78, %83 : vector<29x128xf32>
    %c78 = arith.constant 78 : index
    %c0_64 = arith.constant 0 : index
    %85 = vector.load %arg9[%c78, %c0_64] : memref<144x128xf32, #tpu.memory_space<vmem>>, vector<29x128xf32>
    %86 = arith.truncf %85 : vector<29x128xf32> to vector<29x128xbf16>
    %c12 = arith.constant 12 : index
    %c0_65 = arith.constant 0 : index
    %c0_66 = arith.constant 0 : index
    %87 = vector.load %arg4[%c12, %c0_65, %c0_66] : memref<16x128x128xbf16, #tpu.memory_space<vmem>>, vector<1x128x128xbf16>
    %88 = vector.shape_cast %87 : vector<1x128x128xbf16> to vector<128x128xbf16>
    %cst_67 = arith.constant dense<0.000000e+00> : vector<29x128xf32>
    %89 = tpu.matmul %86, %88, %cst_67 {dimension_numbers = #tpu.dot_dimension_numbers<[1], [0], [0], [1], [0, 0, 1, 1], [], []>} : vector<29x128xbf16>, vector<128x128xbf16>, vector<29x128xf32> -> vector<29x128xf32>
    %90 = arith.addf %84, %89 : vector<29x128xf32>
    %c114 = arith.constant 114 : index
    %c0_68 = arith.constant 0 : index
    %91 = vector.load %arg9[%c114, %c0_68] : memref<144x128xf32, #tpu.memory_space<vmem>>, vector<29x128xf32>
    %92 = arith.truncf %91 : vector<29x128xf32> to vector<29x128xbf16>
    %c13 = arith.constant 13 : index
    %c0_69 = arith.constant 0 : index
    %c0_70 = arith.constant 0 : index
    %93 = vector.load %arg4[%c13, %c0_69, %c0_70] : memref<16x128x128xbf16, #tpu.memory_space<vmem>>, vector<1x128x128xbf16>
    %94 = vector.shape_cast %93 : vector<1x128x128xbf16> to vector<128x128xbf16>
    %cst_71 = arith.constant dense<0.000000e+00> : vector<29x128xf32>
    %95 = tpu.matmul %92, %94, %cst_71 {dimension_numbers = #tpu.dot_dimension_numbers<[1], [0], [0], [1], [0, 0, 1, 1], [], []>} : vector<29x128xbf16>, vector<128x128xbf16>, vector<29x128xf32> -> vector<29x128xf32>
    %96 = arith.addf %90, %95 : vector<29x128xf32>
    %c79 = arith.constant 79 : index
    %c0_72 = arith.constant 0 : index
    %97 = vector.load %arg9[%c79, %c0_72] : memref<144x128xf32, #tpu.memory_space<vmem>>, vector<29x128xf32>
    %98 = arith.truncf %97 : vector<29x128xf32> to vector<29x128xbf16>
    %c14 = arith.constant 14 : index
    %c0_73 = arith.constant 0 : index
    %c0_74 = arith.constant 0 : index
    %99 = vector.load %arg4[%c14, %c0_73, %c0_74] : memref<16x128x128xbf16, #tpu.memory_space<vmem>>, vector<1x128x128xbf16>
    %100 = vector.shape_cast %99 : vector<1x128x128xbf16> to vector<128x128xbf16>
    %cst_75 = arith.constant dense<0.000000e+00> : vector<29x128xf32>
    %101 = tpu.matmul %98, %100, %cst_75 {dimension_numbers = #tpu.dot_dimension_numbers<[1], [0], [0], [1], [0, 0, 1, 1], [], []>} : vector<29x128xbf16>, vector<128x128xbf16>, vector<29x128xf32> -> vector<29x128xf32>
    %102 = arith.addf %96, %101 : vector<29x128xf32>
    %c115 = arith.constant 115 : index
    %c0_76 = arith.constant 0 : index
    %103 = vector.load %arg9[%c115, %c0_76] : memref<144x128xf32, #tpu.memory_space<vmem>>, vector<29x128xf32>
    %104 = arith.truncf %103 : vector<29x128xf32> to vector<29x128xbf16>
    %c15 = arith.constant 15 : index
    %c0_77 = arith.constant 0 : index
    %c0_78 = arith.constant 0 : index
    %105 = vector.load %arg4[%c15, %c0_77, %c0_78] : memref<16x128x128xbf16, #tpu.memory_space<vmem>>, vector<1x128x128xbf16>
    %106 = vector.shape_cast %105 : vector<1x128x128xbf16> to vector<128x128xbf16>
    %cst_79 = arith.constant dense<0.000000e+00> : vector<29x128xf32>
    %107 = tpu.matmul %104, %106, %cst_79 {dimension_numbers = #tpu.dot_dimension_numbers<[1], [0], [0], [1], [0, 0, 1, 1], [], []>} : vector<29x128xbf16>, vector<128x128xbf16>, vector<29x128xf32> -> vector<29x128xf32>
    %108 = arith.addf %102, %107 : vector<29x128xf32>
    %cst_80 = arith.constant 0.000000e+00 : f32
    %109 = vector.broadcast %cst_80 : f32 to vector<29x128xf32>
    %110 = arith.maximumf %108, %109 : vector<29x128xf32>
    %cst_81 = arith.constant 0.000000e+00 : f32
    %111 = vector.broadcast %cst_81 : f32 to vector<3x128xf32>
    %112 = tpu.concatenate %110, %111 in 0 : vector<29x128xf32>, vector<3x128xf32> -> vector<32x128xf32>
    %c0_82 = arith.constant 0 : index
    %c0_83 = arith.constant 0 : index
    %113 = vector.load %arg10[%c0_82, %c0_83] : memref<32x128xf32, #tpu.memory_space<vmem>>, vector<32x128xf32>
    tpu.vector_store %arg10[%c0_82, %c0_83], %112 {strides = array<i32>} : memref<32x128xf32, #tpu.memory_space<vmem>>, vector<32x128xf32>,
    %c0_84 = arith.constant 0 : index
    %c0_85 = arith.constant 0 : index
    %114 = vector.load %arg7[%c0_84, %c0_85] : memref<1x128xf32, #tpu.memory_space<vmem>>, vector<1x128xf32>
    %115 = vector.shape_cast %114 : vector<1x128xf32> to vector<1x128xf32>
    %116 = vector.broadcast %115 : vector<1x128xf32> to vector<15x128xf32>
    %c0_86 = arith.constant 0 : index
    %c0_87 = arith.constant 0 : index
    %117 = vector.load %arg10[%c0_86, %c0_87] : memref<32x128xf32, #tpu.memory_space<vmem>>, vector<15x128xf32>
    %118 = arith.truncf %117 : vector<15x128xf32> to vector<15x128xbf16>
    %c0_88 = arith.constant 0 : index
    %c0_89 = arith.constant 0 : index
    %c0_90 = arith.constant 0 : index
    %119 = vector.load %arg6[%c0_88, %c0_89, %c0_90] : memref<9x128x128xbf16, #tpu.memory_space<vmem>>, vector<1x128x128xbf16>
    %120 = vector.shape_cast %119 : vector<1x128x128xbf16> to vector<128x128xbf16>
    %cst_91 = arith.constant dense<0.000000e+00> : vector<15x128xf32>
    %121 = tpu.matmul %118, %120, %cst_91 {dimension_numbers = #tpu.dot_dimension_numbers<[1], [0], [0], [1], [0, 0, 1, 1], [], []>} : vector<15x128xbf16>, vector<128x128xbf16>, vector<15x128xf32> -> vector<15x128xf32>
    %122 = arith.addf %116, %121 : vector<15x128xf32>
    %c1_92 = arith.constant 1 : index
    %c0_93 = arith.constant 0 : index
    %123 = vector.load %arg10[%c1_92, %c0_93] : memref<32x128xf32, #tpu.memory_space<vmem>>, vector<15x128xf32>
    %124 = arith.truncf %123 : vector<15x128xf32> to vector<15x128xbf16>
    %c1_94 = arith.constant 1 : index
    %c0_95 = arith.constant 0 : index
    %c0_96 = arith.constant 0 : index
    %125 = vector.load %arg6[%c1_94, %c0_95, %c0_96] : memref<9x128x128xbf16, #tpu.memory_space<vmem>>, vector<1x128x128xbf16>
    %126 = vector.shape_cast %125 : vector<1x128x128xbf16> to vector<128x128xbf16>
    %cst_97 = arith.constant dense<0.000000e+00> : vector<15x128xf32>
    %127 = tpu.matmul %124, %126, %cst_97 {dimension_numbers = #tpu.dot_dimension_numbers<[1], [0], [0], [1], [0, 0, 1, 1], [], []>} : vector<15x128xbf16>, vector<128x128xbf16>, vector<15x128xf32> -> vector<15x128xf32>
    %128 = arith.addf %122, %127 : vector<15x128xf32>
    %c2_98 = arith.constant 2 : index
    %c0_99 = arith.constant 0 : index
    %129 = vector.load %arg10[%c2_98, %c0_99] : memref<32x128xf32, #tpu.memory_space<vmem>>, vector<15x128xf32>
    %130 = arith.truncf %129 : vector<15x128xf32> to vector<15x128xbf16>
    %c2_100 = arith.constant 2 : index
    %c0_101 = arith.constant 0 : index
    %c0_102 = arith.constant 0 : index
    %131 = vector.load %arg6[%c2_100, %c0_101, %c0_102] : memref<9x128x128xbf16, #tpu.memory_space<vmem>>, vector<1x128x128xbf16>
    %132 = vector.shape_cast %131 : vector<1x128x128xbf16> to vector<128x128xbf16>
    %cst_103 = arith.constant dense<0.000000e+00> : vector<15x128xf32>
    %133 = tpu.matmul %130, %132, %cst_103 {dimension_numbers = #tpu.dot_dimension_numbers<[1], [0], [0], [1], [0, 0, 1, 1], [], []>} : vector<15x128xbf16>, vector<128x128xbf16>, vector<15x128xf32> -> vector<15x128xf32>
    %134 = arith.addf %128, %133 : vector<15x128xf32>
    %c6_104 = arith.constant 6 : index
    %c0_105 = arith.constant 0 : index
    %135 = vector.load %arg10[%c6_104, %c0_105] : memref<32x128xf32, #tpu.memory_space<vmem>>, vector<15x128xf32>
    %136 = arith.truncf %135 : vector<15x128xf32> to vector<15x128xbf16>
    %c3_106 = arith.constant 3 : index
    %c0_107 = arith.constant 0 : index
    %c0_108 = arith.constant 0 : index
    %137 = vector.load %arg6[%c3_106, %c0_107, %c0_108] : memref<9x128x128xbf16, #tpu.memory_space<vmem>>, vector<1x128x128xbf16>
    %138 = vector.shape_cast %137 : vector<1x128x128xbf16> to vector<128x128xbf16>
    %cst_109 = arith.constant dense<0.000000e+00> : vector<15x128xf32>
    %139 = tpu.matmul %136, %138, %cst_109 {dimension_numbers = #tpu.dot_dimension_numbers<[1], [0], [0], [1], [0, 0, 1, 1], [], []>} : vector<15x128xbf16>, vector<128x128xbf16>, vector<15x128xf32> -> vector<15x128xf32>
    %140 = arith.addf %134, %139 : vector<15x128xf32>
    %c7_110 = arith.constant 7 : index
    %c0_111 = arith.constant 0 : index
    %141 = vector.load %arg10[%c7_110, %c0_111] : memref<32x128xf32, #tpu.memory_space<vmem>>, vector<15x128xf32>
    %142 = arith.truncf %141 : vector<15x128xf32> to vector<15x128xbf16>
    %c4_112 = arith.constant 4 : index
    %c0_113 = arith.constant 0 : index
    %c0_114 = arith.constant 0 : index
    %143 = vector.load %arg6[%c4_112, %c0_113, %c0_114] : memref<9x128x128xbf16, #tpu.memory_space<vmem>>, vector<1x128x128xbf16>
    %144 = vector.shape_cast %143 : vector<1x128x128xbf16> to vector<128x128xbf16>
    %cst_115 = arith.constant dense<0.000000e+00> : vector<15x128xf32>
    %145 = tpu.matmul %142, %144, %cst_115 {dimension_numbers = #tpu.dot_dimension_numbers<[1], [0], [0], [1], [0, 0, 1, 1], [], []>} : vector<15x128xbf16>, vector<128x128xbf16>, vector<15x128xf32> -> vector<15x128xf32>
    %146 = arith.addf %140, %145 : vector<15x128xf32>
    %c8_116 = arith.constant 8 : index
    %c0_117 = arith.constant 0 : index
    %147 = vector.load %arg10[%c8_116, %c0_117] : memref<32x128xf32, #tpu.memory_space<vmem>>, vector<15x128xf32>
    %148 = arith.truncf %147 : vector<15x128xf32> to vector<15x128xbf16>
    %c5_118 = arith.constant 5 : index
    %c0_119 = arith.constant 0 : index
    %c0_120 = arith.constant 0 : index
    %149 = vector.load %arg6[%c5_118, %c0_119, %c0_120] : memref<9x128x128xbf16, #tpu.memory_space<vmem>>, vector<1x128x128xbf16>
    %150 = vector.shape_cast %149 : vector<1x128x128xbf16> to vector<128x128xbf16>
    %cst_121 = arith.constant dense<0.000000e+00> : vector<15x128xf32>
    %151 = tpu.matmul %148, %150, %cst_121 {dimension_numbers = #tpu.dot_dimension_numbers<[1], [0], [0], [1], [0, 0, 1, 1], [], []>} : vector<15x128xbf16>, vector<128x128xbf16>, vector<15x128xf32> -> vector<15x128xf32>
    %152 = arith.addf %146, %151 : vector<15x128xf32>
    %c12_122 = arith.constant 12 : index
    %c0_123 = arith.constant 0 : index
    %153 = vector.load %arg10[%c12_122, %c0_123] : memref<32x128xf32, #tpu.memory_space<vmem>>, vector<15x128xf32>
    %154 = arith.truncf %153 : vector<15x128xf32> to vector<15x128xbf16>
    %c6_124 = arith.constant 6 : index
    %c0_125 = arith.constant 0 : index
    %c0_126 = arith.constant 0 : index
    %155 = vector.load %arg6[%c6_124, %c0_125, %c0_126] : memref<9x128x128xbf16, #tpu.memory_space<vmem>>, vector<1x128x128xbf16>
    %156 = vector.shape_cast %155 : vector<1x128x128xbf16> to vector<128x128xbf16>
    %cst_127 = arith.constant dense<0.000000e+00> : vector<15x128xf32>
    %157 = tpu.matmul %154, %156, %cst_127 {dimension_numbers = #tpu.dot_dimension_numbers<[1], [0], [0], [1], [0, 0, 1, 1], [], []>} : vector<15x128xbf16>, vector<128x128xbf16>, vector<15x128xf32> -> vector<15x128xf32>
    %158 = arith.addf %152, %157 : vector<15x128xf32>
    %c13_128 = arith.constant 13 : index
    %c0_129 = arith.constant 0 : index
    %159 = vector.load %arg10[%c13_128, %c0_129] : memref<32x128xf32, #tpu.memory_space<vmem>>, vector<15x128xf32>
    %160 = arith.truncf %159 : vector<15x128xf32> to vector<15x128xbf16>
    %c7_130 = arith.constant 7 : index
    %c0_131 = arith.constant 0 : index
    %c0_132 = arith.constant 0 : index
    %161 = vector.load %arg6[%c7_130, %c0_131, %c0_132] : memref<9x128x128xbf16, #tpu.memory_space<vmem>>, vector<1x128x128xbf16>
    %162 = vector.shape_cast %161 : vector<1x128x128xbf16> to vector<128x128xbf16>
    %cst_133 = arith.constant dense<0.000000e+00> : vector<15x128xf32>
    %163 = tpu.matmul %160, %162, %cst_133 {dimension_numbers = #tpu.dot_dimension_numbers<[1], [0], [0], [1], [0, 0, 1, 1], [], []>} : vector<15x128xbf16>, vector<128x128xbf16>, vector<15x128xf32> -> vector<15x128xf32>
    %164 = arith.addf %158, %163 : vector<15x128xf32>
    %c14_134 = arith.constant 14 : index
    %c0_135 = arith.constant 0 : index
    %165 = vector.load %arg10[%c14_134, %c0_135] : memref<32x128xf32, #tpu.memory_space<vmem>>, vector<15x128xf32>
    %166 = arith.truncf %165 : vector<15x128xf32> to vector<15x128xbf16>
    %c8_136 = arith.constant 8 : index
    %c0_137 = arith.constant 0 : index
    %c0_138 = arith.constant 0 : index
    %167 = vector.load %arg6[%c8_136, %c0_137, %c0_138] : memref<9x128x128xbf16, #tpu.memory_space<vmem>>, vector<1x128x128xbf16>
    %168 = vector.shape_cast %167 : vector<1x128x128xbf16> to vector<128x128xbf16>
    %cst_139 = arith.constant dense<0.000000e+00> : vector<15x128xf32>
    %169 = tpu.matmul %166, %168, %cst_139 {dimension_numbers = #tpu.dot_dimension_numbers<[1], [0], [0], [1], [0, 0, 1, 1], [], []>} : vector<15x128xbf16>, vector<128x128xbf16>, vector<15x128xf32> -> vector<15x128xf32>
    %170 = arith.addf %164, %169 : vector<15x128xf32>
    %cst_140 = arith.constant 0.000000e+00 : f32
    %171 = vector.broadcast %cst_140 : f32 to vector<15x128xf32>
    %172 = arith.maximumf %170, %171 : vector<15x128xf32>
    %173 = vector.extract_strided_slice %172 {offsets = [0, 0], sizes = [3, 128], strides = [1, 1]} : vector<15x128xf32> to vector<3x128xf32>
    %174 = vector.extract_strided_slice %172 {offsets = [6, 0], sizes = [3, 128], strides = [1, 1]} : vector<15x128xf32> to vector<3x128xf32>
    %175 = vector.extract_strided_slice %172 {offsets = [12, 0], sizes = [3, 128], strides = [1, 1]} : vector<15x128xf32> to vector<3x128xf32>
    %cst_141 = arith.constant 0.000000e+00 : f32
    %176 = vector.broadcast %cst_141 : f32 to vector<7x128xf32>
    %177 = tpu.concatenate %173, %174, %175, %176 in 0 : vector<3x128xf32>, vector<3x128xf32>, vector<3x128xf32>, vector<7x128xf32> -> vector<16x128xf32>
    %c0_142 = arith.constant 0 : index
    %c0_143 = arith.constant 0 : index
    %c0_144 = arith.constant 0 : index
    %178 = vector.load %arg8[%c0_142, %c0_143, %c0_144] : memref<1x16x128xf32, #tpu.memory_space<vmem>>, vector<1x16x128xf32>
    %179 = vector.shape_cast %178 : vector<1x16x128xf32> to vector<16x128xf32>
    %180 = vector.shape_cast %177 : vector<16x128xf32> to vector<1x16x128xf32>
    tpu.vector_store %arg8[%c0_142, %c0_143, %c0_144], %180 {strides = array<i32>} : memref<1x16x128xf32, #tpu.memory_space<vmem>>, vector<1x16x128xf32>,
    return
  }
  func.func @transform_0(%arg0: i32) -> (i32, i32, i32) {
    %c0_i32 = arith.constant 0 : i32
    %c0_i32_0 = arith.constant 0 : i32
    %c0_i32_1 = arith.constant 0 : i32
    return %arg0, %c0_i32, %c0_i32_0 : i32, i32, i32
  }
  func.func @transform_1(%arg0: i32) -> (i32, i32) {
    %c0_i32 = arith.constant 0 : i32
    %c0_i32_0 = arith.constant 0 : i32
    %c0_i32_1 = arith.constant 0 : i32
    return %c0_i32, %c0_i32_0 : i32, i32
  }
  func.func @transform_2(%arg0: i32) -> (i32, i32) {
    %c0_i32 = arith.constant 0 : i32
    %c0_i32_0 = arith.constant 0 : i32
    %c0_i32_1 = arith.constant 0 : i32
    return %c0_i32, %c0_i32_0 : i32, i32
  }
  func.func @transform_3(%arg0: i32) -> (i32, i32, i32) {
    %c0_i32 = arith.constant 0 : i32
    %c0_i32_0 = arith.constant 0 : i32
    %c0_i32_1 = arith.constant 0 : i32
    %c0_i32_2 = arith.constant 0 : i32
    return %c0_i32, %c0_i32_0, %c0_i32_1 : i32, i32, i32
  }
  func.func @transform_4(%arg0: i32) -> (i32, i32) {
    %c0_i32 = arith.constant 0 : i32
    %c0_i32_0 = arith.constant 0 : i32
    %c0_i32_1 = arith.constant 0 : i32
    return %c0_i32, %c0_i32_0 : i32, i32
  }
  func.func @transform_5(%arg0: i32) -> (i32, i32, i32) {
    %c0_i32 = arith.constant 0 : i32
    %c0_i32_0 = arith.constant 0 : i32
    %c0_i32_1 = arith.constant 0 : i32
    %c0_i32_2 = arith.constant 0 : i32
    return %c0_i32, %c0_i32_0, %c0_i32_1 : i32, i32, i32
  }
  func.func @transform_6(%arg0: i32) -> (i32, i32) {
    %c0_i32 = arith.constant 0 : i32
    %c0_i32_0 = arith.constant 0 : i32
    %c0_i32_1 = arith.constant 0 : i32
    return %c0_i32, %c0_i32_0 : i32, i32
  }
  func.func @transform_7(%arg0: i32) -> (i32, i32, i32) {
    %c0_i32 = arith.constant 0 : i32
    %c0_i32_0 = arith.constant 0 : i32
    %c0_i32_1 = arith.constant 0 : i32
    return %arg0, %c0_i32, %c0_i32_0 : i32, i32, i32
  }
}

</mosaic_0001>

<llo_original>
// kernel: _lambda_.1
$region0: #{_lambda_.1}
  #allocation0 [shape = 'u32[]', space=smem, size = 0x4, offset = 0x4, fixed_abs, tag = 'smem constant byte address 0x4 - core index']
  #allocation1 [shape = 'u32[144,128]{1,0:T(1,128)}', space=vmem, size = 0x12000, scoped, tag = 'internal scratch']
  #allocation2 [shape = 'f32[144,128]{1,0:T(8,128)}', space=vmem, size = 0x12000, scoped, tag = 'scratch operand']
  #allocation3 [shape = 'f32[32,128]{1,0:T(8,128)}', space=vmem, size = 0x4000, scoped, tag = 'scratch operand']
  %s0 = inlined_call_operand.vmem [shape: bf16[2,144,256], index: 0, kind: input, shape index: {}]
  %s1 = inlined_call_operand.vmem [shape: bf16[256,128], index: 1, kind: input, shape index: {}]
  %s2 = inlined_call_operand.vmem [shape: f32[1,128], index: 2, kind: input, shape index: {}]
  %s3 = inlined_call_operand.vmem [shape: bf16[16,128,128], index: 3, kind: input, shape index: {}]
  %s4 = inlined_call_operand.vmem [shape: f32[1,128], index: 4, kind: input, shape index: {}]
  %s5 = inlined_call_operand.vmem [shape: bf16[9,128,128], index: 5, kind: input, shape index: {}]
  %s6 = inlined_call_operand.vmem [shape: f32[1,128], index: 6, kind: input, shape index: {}]
  %s7 = inlined_call_operand.vmem [shape: f32[2,16,128], index: 7, kind: output, shape index: {}]
  %s8 = sld [smem:[#allocation0]]
  $region61: #{_lambda_.1} parent=0
    _
  %s10 = ssub.s32 1, %s8
  %s11 = scalar_select 0, %s10, %s8
  loop: start=0, step=1, limit=4
  $region2: #{_lambda_.1} parent=0 // loop_pre_header
    _
  $region3: #{_lambda_.1} parent=0 // loop_header
    %s13 = sphi 0, %s17
    %p14 = scmp.ge.s32.totalorder %s13, 4
    %s23 = sphi 0, %s25
    %s26 = sphi 0, %s23
    %s27 = sphi 0, %s26
    %s43 = sphi 0, %s27
    %s47 = sphi 0, %s47
    %s49 = sphi 0, %s47
    %s50 = sphi 0, %s49
    %s64 = sphi 0, %s50
    %s68 = sphi 0, %s68
    %s70 = sphi 0, %s68
    %s71 = sphi 0, %s70
    %s85 = sphi 0, %s71
    %s89 = sphi 0, %s89
    %s91 = sphi 0, %s89
    %s92 = sphi 0, %s91
    %s106 = sphi 0, %s92
    %s110 = sphi 0, %s110
    %s112 = sphi 0, %s110
    %s113 = sphi 0, %s112
    %s127 = sphi 0, %s113
    %s131 = sphi 0, %s131
    %s133 = sphi 0, %s131
    %s134 = sphi 0, %s133
    %s148 = sphi 0, %s134
    %s152 = sphi 0, %s152
    %s154 = sphi 0, %s152
    %s155 = sphi 0, %s154
    %s169 = sphi 0, %s155
    %s175 = sphi 0, %s177
    %s178 = sphi 0, %s175
    %s179 = sphi 0, %s178
    %s195 = sphi 0, %s179
  $region4: #{_lambda_.1} parent=0 // loop_header_branch
    %16 = sbr.rel (%p14) target = $region8
  $region5: #{_lambda_.1} parent=0 // loop_body
    %s18 = ssub.s32 %s13, 1
    %s19 = ssub.s32 %s13, 2
    %s20 = sadd.s32 %s13, 1
    %s21 = ssub.s32 %s13, %s20
    %p22 = scmp.eq.s32.totalorder %s21, 0
    %s24 = sadd.s32 %s23, 1
    %s25 = scalar_select %p22, %s23, %s24
    %p28 = pneg %p22
    %p29 = scmp.eq.s32.totalorder %s13, 1
    %p30 = por %p28, %p29
    %p31 = scmp.ne.s32.totalorder %s23, %s26
    %p32 = scmp.eq.s32.totalorder %s13, 0
    %p33 = por %p31, %p32
    %p34 = scmp.ne.s32.totalorder %s23, %s26
    %p35 = scmp.eq.s32.totalorder %s18, 1
    %p36 = por %p34, %p35
    %p37 = scmp.ne.s32.totalorder %s26, %s27
    %p38 = scmp.eq.s32.totalorder %s18, 0
    %p39 = por %p37, %p38
    %p40 = scmp.ne.s32.totalorder %s26, %s27
    %p41 = scmp.eq.s32.totalorder %s19, 1
    %p42 = por %p40, %p41
    %p44 = scmp.ne.s32.totalorder %s27, %s43
    %p45 = scmp.eq.s32.totalorder %s19, 0
    %p46 = por %p44, %p45
    %s48 = sadd.s32 %s47, 1
    %p51 = scmp.eq.s32.totalorder %s13, 1
    %p52 = scmp.ne.s32.totalorder %s47, %s49
    %p53 = scmp.eq.s32.totalorder %s13, 0
    %p54 = por %p52, %p53
    %p55 = scmp.ne.s32.totalorder %s47, %s49
    %p56 = scmp.eq.s32.totalorder %s18, 1
    %p57 = por %p55, %p56
    %p58 = scmp.ne.s32.totalorder %s49, %s50
    %p59 = scmp.eq.s32.totalorder %s18, 0
    %p60 = por %p58, %p59
    %p61 = scmp.ne.s32.totalorder %s49, %s50
    %p62 = scmp.eq.s32.totalorder %s19, 1
    %p63 = por %p61, %p62
    %p65 = scmp.ne.s32.totalorder %s50, %s64
    %p66 = scmp.eq.s32.totalorder %s19, 0
    %p67 = por %p65, %p66
    %s69 = sadd.s32 %s68, 1
    %p72 = scmp.eq.s32.totalorder %s13, 1
    %p73 = scmp.ne.s32.totalorder %s68, %s70
    %p74 = scmp.eq.s32.totalorder %s13, 0
    %p75 = por %p73, %p74
    %p76 = scmp.ne.s32.totalorder %s68, %s70
    %p77 = scmp.eq.s32.totalorder %s18, 1
    %p78 = por %p76, %p77
    %p79 = scmp.ne.s32.totalorder %s70, %s71
    %p80 = scmp.eq.s32.totalorder %s18, 0
    %p81 = por %p79, %p80
    %p82 = scmp.ne.s32.totalorder %s70, %s71
    %p83 = scmp.eq.s32.totalorder %s19, 1
    %p84 = por %p82, %p83
    %p86 = scmp.ne.s32.totalorder %s71, %s85
    %p87 = scmp.eq.s32.totalorder %s19, 0
    %p88 = por %p86, %p87
    %s90 = sadd.s32 %s89, 1
    %p93 = scmp.eq.s32.totalorder %s13, 1
    %p94 = scmp.ne.s32.totalorder %s89, %s91
    %p95 = scmp.eq.s32.totalorder %s13, 0
    %p96 = por %p94, %p95
    %p97 = scmp.ne.s32.totalorder %s89, %s91
    %p98 = scmp.eq.s32.totalorder %s18, 1
    %p99 = por %p97, %p98
    %p100 = scmp.ne.s32.totalorder %s91, %s92
    %p101 = scmp.eq.s32.totalorder %s18, 0
    %p102 = por %p100, %p101
    %p103 = scmp.ne.s32.totalorder %s91, %s92
    %p104 = scmp.eq.s32.totalorder %s19, 1
    %p105 = por %p103, %p104
    %p107 = scmp.ne.s32.totalorder %s92, %s106
    %p108 = scmp.eq.s32.totalorder %s19, 0
    %p109 = por %p107, %p108
    %s111 = sadd.s32 %s110, 1
    %p114 = scmp.eq.s32.totalorder %s13, 1
    %p115 = scmp.ne.s32.totalorder %s110, %s112
    %p116 = scmp.eq.s32.totalorder %s13, 0
    %p117 = por %p115, %p116
    %p118 = scmp.ne.s32.totalorder %s110, %s112
    %p119 = scmp.eq.s32.totalorder %s18, 1
    %p120 = por %p118, %p119
    %p121 = scmp.ne.s32.totalorder %s112, %s113
    %p122 = scmp.eq.s32.totalorder %s18, 0
    %p123 = por %p121, %p122
    %p124 = scmp.ne.s32.totalorder %s112, %s113
    %p125 = scmp.eq.s32.totalorder %s19, 1
    %p126 = por %p124, %p125
    %p128 = scmp.ne.s32.totalorder %s113, %s127
    %p129 = scmp.eq.s32.totalorder %s19, 0
    %p130 = por %p128, %p129
    %s132 = sadd.s32 %s131, 1
    %p135 = scmp.eq.s32.totalorder %s13, 1
    %p136 = scmp.ne.s32.totalorder %s131, %s133
    %p137 = scmp.eq.s32.totalorder %s13, 0
    %p138 = por %p136, %p137
    %p139 = scmp.ne.s32.totalorder %s131, %s133
    %p140 = scmp.eq.s32.totalorder %s18, 1
    %p141 = por %p139, %p140
    %p142 = scmp.ne.s32.totalorder %s133, %s134
    %p143 = scmp.eq.s32.totalorder %s18, 0
    %p144 = por %p142, %p143
    %p145 = scmp.ne.s32.totalorder %s133, %s134
    %p146 = scmp.eq.s32.totalorder %s19, 1
    %p147 = por %p145, %p146
    %p149 = scmp.ne.s32.totalorder %s134, %s148
    %p150 = scmp.eq.s32.totalorder %s19, 0
    %p151 = por %p149, %p150
    %s153 = sadd.s32 %s152, 1
    %p156 = scmp.eq.s32.totalorder %s13, 1
    %p157 = scmp.ne.s32.totalorder %s152, %s154
    %p158 = scmp.eq.s32.totalorder %s13, 0
    %p159 = por %p157, %p158
    %p160 = scmp.ne.s32.totalorder %s152, %s154
    %p161 = scmp.eq.s32.totalorder %s18, 1
    %p162 = por %p160, %p161
    %p163 = scmp.ne.s32.totalorder %s154, %s155
    %p164 = scmp.eq.s32.totalorder %s18, 0
    %p165 = por %p163, %p164
    %p166 = scmp.ne.s32.totalorder %s154, %s155
    %p167 = scmp.eq.s32.totalorder %s19, 1
    %p168 = por %p166, %p167
    %p170 = scmp.ne.s32.totalorder %s155, %s169
    %p171 = scmp.eq.s32.totalorder %s19, 0
    %p172 = por %p170, %p171
    %s173 = ssub.s32 %s13, %s20
    %p174 = scmp.eq.s32.totalorder %s173, 0
    %s176 = sadd.s32 %s175, 1
    %s177 = scalar_select %p174, %s175, %s176
    %p180 = pneg %p174
    %p181 = scmp.eq.s32.totalorder %s13, 1
    %p182 = por %p180, %p181
    %p183 = scmp.ne.s32.totalorder %s175, %s178
    %p184 = scmp.eq.s32.totalorder %s13, 0
    %p185 = por %p183, %p184
    %p186 = scmp.ne.s32.totalorder %s175, %s178
    %p187 = scmp.eq.s32.totalorder %s18, 1
    %p188 = por %p186, %p187
    %p189 = scmp.ne.s32.totalorder %s178, %s179
    %p190 = scmp.eq.s32.totalorder %s18, 0
    %p191 = por %p189, %p190
    %p192 = scmp.ne.s32.totalorder %s178, %s179
    %p193 = scmp.eq.s32.totalorder %s19, 1
    %p194 = por %p192, %p193
    %p196 = scmp.ne.s32.totalorder %s179, %s195
    %p197 = scmp.eq.s32.totalorder %s19, 0
    %p198 = por %p196, %p197
    %p199 = scmp.le.s32.totalorder 1, %s13
    %p200 = scmp.lt.s32.totalorder %s13, 3
    %p201 = pnand %p199, %p200
    %p202 = pneg %p201
    // Predicated region
    $region9: #{_lambda_.1} parent=5 // pred_check
      _
    $region10: #{_lambda_.1} parent=5 // pred_check_branch
      %204 = sbr.rel (%p201) target = $region12
    $region11: #{_lambda_.1} parent=5 // pred_region
      %s205 = ssub.s32 %s13, 1
      // Predicated region
      $region13: #{_lambda_.1} parent=11 // pred_check
        %p206 = pneg %p60
      $region14: #{_lambda_.1} parent=11 // pred_check_branch
        %208 = sbr.rel (%p206) target = $region16
      $region15: #{_lambda_.1} parent=11 // pred_region
        _
      $region16: #{_lambda_.1} parent=11 // pred_fallthru
        _
      // Predicated region
      $region17: #{_lambda_.1} parent=11 // pred_check
        %p209 = pneg %p81
      $region18: #{_lambda_.1} parent=11 // pred_check_branch
        %211 = sbr.rel (%p209) target = $region20
      $region19: #{_lambda_.1} parent=11 // pred_region
        _
      $region20: #{_lambda_.1} parent=11 // pred_fallthru
        _
      // Predicated region
      $region21: #{_lambda_.1} parent=11 // pred_check
        %p212 = pneg %p102
      $region22: #{_lambda_.1} parent=11 // pred_check_branch
        %214 = sbr.rel (%p212) target = $region24
      $region23: #{_lambda_.1} parent=11 // pred_region
        _
      $region24: #{_lambda_.1} parent=11 // pred_fallthru
        _
      // Predicated region
      $region25: #{_lambda_.1} parent=11 // pred_check
        %p215 = pneg %p123
      $region26: #{_lambda_.1} parent=11 // pred_check_branch
        %217 = sbr.rel (%p215) target = $region28
      $region27: #{_lambda_.1} parent=11 // pred_region
        _
      $region28: #{_lambda_.1} parent=11 // pred_fallthru
        _
      // Predicated region
      $region29: #{_lambda_.1} parent=11 // pred_check
        %p218 = pneg %p144
      $region30: #{_lambda_.1} parent=11 // pred_check_branch
        %220 = sbr.rel (%p218) target = $region32
      $region31: #{_lambda_.1} parent=11 // pred_region
        _
      $region32: #{_lambda_.1} parent=11 // pred_fallthru
        _
      // Predicated region
      $region33: #{_lambda_.1} parent=11 // pred_check
        %p221 = pneg %p165
      $region34: #{_lambda_.1} parent=11 // pred_check_branch
        %223 = sbr.rel (%p221) target = $region36
      $region35: #{_lambda_.1} parent=11 // pred_region
        _
      $region36: #{_lambda_.1} parent=11 // pred_fallthru
        _
    $region12: #{_lambda_.1} parent=5 // pred_fallthru
      _
    %p224 = scmp.lt.s32.totalorder %s13, 2
    // Predicated region
    $region37: #{_lambda_.1} parent=5 // pred_check
      %p225 = pneg %p224
    $region38: #{_lambda_.1} parent=5 // pred_check_branch
      %227 = sbr.rel (%p225) target = $region40
    $region39: #{_lambda_.1} parent=5 // pred_region
      // Predicated region
      $region41: #{_lambda_.1} parent=39 // pred_check
        %p228 = pneg %p33
      $region42: #{_lambda_.1} parent=39 // pred_check_branch
        %230 = sbr.rel (%p228) target = $region44
      $region43: #{_lambda_.1} parent=39 // pred_region
        %p231 = scmp.lt.s32.totalorder %s13, 1
        %s232 = scalar_select %p231, %s13, 1
        %s233 = smul.addr %s232, 36
        %s234 = smul.addr %s233, 4
        %s235 = scalar_lea.vmem %s0, %s234
      $region44: #{_lambda_.1} parent=39 // pred_fallthru
        _
    $region40: #{_lambda_.1} parent=5 // pred_fallthru
      _
    %p236 = scmp.le.s32.totalorder 1, %s13
    %p237 = scmp.lt.s32.totalorder %s13, 3
    %p238 = pnand %p236, %p237
    %p239 = pneg %p238
    // Predicated region
    $region45: #{_lambda_.1} parent=5 // pred_check
      _
    $region46: #{_lambda_.1} parent=5 // pred_check_branch
      %241 = sbr.rel (%p238) target = $region48
    $region47: #{_lambda_.1} parent=5 // pred_region
      %s242 = ssub.s32 %s13, 1
      %p243 = scmp.lt.s32.totalorder %s18, 1
      %s244 = scalar_select %p243, %s18, 1
      %s245 = smul.addr %s244, 36
      %s246 = smul.addr %s245, 4
      %s247 = scalar_lea.vmem %s0, %s246
      %p248 = pneg %p39
      %p249 = pneg %p36
      %p250 = pneg %p60
      %p251 = pneg %p57
      %p252 = pneg %p81
      %p253 = pneg %p78
      %p254 = pneg %p102
      %p255 = pneg %p99
      %p256 = pneg %p123
      %p257 = pneg %p120
      %p258 = pneg %p144
      %p259 = pneg %p141
      %p260 = pneg %p165
      %p261 = pneg %p162
      %p262 = pneg %p191
      %p263 = pneg %p188
      %p264 = scmp.lt.s32.totalorder %s18, 1
      %s265 = scalar_select %p264, %s18, 1
      %s266 = smul.addr %s265, 2
      %s267 = smul.addr %s266, 8
      %s268 = scalar_lea.vmem %s7, %s267
      %p269 = scmp.lt.s32.totalorder %s18, 1
      %s270 = scalar_select %p269, %s18, 1
      %s271 = smul.addr %s270, 36
      %s272 = smul.addr %s271, 4
      %s273 = scalar_lea.vmem %s0, %s272
      %p274 = scmp.lt.s32.totalorder %s18, 1
      %s275 = scalar_select %p274, %s18, 1
      %s276 = smul.addr %s275, 2
      %s277 = smul.addr %s276, 8
      %s278 = scalar_lea.vmem %s7, %s277
      %v280 = vld [vmem:[%s273] sm:$0xff]
      %v281 = vld [vmem:[%s273 + $0x8] sm:$0xff]
      %v282 = vld [vmem:[%s273 + $0x10] sm:$0xff]
      %v283 = vld [vmem:[%s273 + $0x18] sm:$0xff]
      %v284 = vld [vmem:[%s273 + $0x20] sm:$0xff]
      %v285 = vld [vmem:[%s273 + $0x28] sm:$0xff]
      %v286 = vld [vmem:[%s273 + $0x30] sm:$0xff]
      %v287 = vld [vmem:[%s273 + $0x38] sm:$0xff]
      %v288 = vld [vmem:[%s273 + $0x40] sm:$0xff]
      %v289 = vld [vmem:[%s273 + $0x48] sm:$0xff]
      %v290 = vld [vmem:[%s273 + $0x50] sm:$0xff]
      %v291 = vld [vmem:[%s273 + $0x58] sm:$0xff]
      %v292 = vld [vmem:[%s273 + $0x60] sm:$0xff]
      %v293 = vld [vmem:[%s273 + $0x68] sm:$0xff]
      %v294 = vld [vmem:[%s273 + $0x70] sm:$0xff]
      %v295 = vld [vmem:[%s273 + $0x78] sm:$0xff]
      %v296 = vld [vmem:[%s273 + $0x80] sm:$0xff]
      %v297 = vld [vmem:[%s273 + $0x88] sm:$0xff]
      %v298 = vld [vmem:[%s1] sm:$0xf]
      %v299 = vld [vmem:[%s1 + $0x4] sm:$0xf]
      %v300 = vld [vmem:[%s1 + $0x8] sm:$0xf]
      %v301 = vld [vmem:[%s1 + $0xc] sm:$0xf]
      %v302 = vld [vmem:[%s1 + $0x10] sm:$0xf]
      %v303 = vld [vmem:[%s1 + $0x14] sm:$0xf]
      %v304 = vld [vmem:[%s1 + $0x18] sm:$0xf]
      %v305 = vld [vmem:[%s1 + $0x1c] sm:$0xf]
      %v306 = vld [vmem:[%s1 + $0x20] sm:$0xf]
      %v307 = vld [vmem:[%s1 + $0x24] sm:$0xf]
      %v308 = vld [vmem:[%s1 + $0x28] sm:$0xf]
      %v309 = vld [vmem:[%s1 + $0x2c] sm:$0xf]
      %v310 = vld [vmem:[%s1 + $0x30] sm:$0xf]
      %v311 = vld [vmem:[%s1 + $0x34] sm:$0xf]
      %v312 = vld [vmem:[%s1 + $0x38] sm:$0xf]
      %v313 = vld [vmem:[%s1 + $0x3c] sm:$0xf]
      %v314 = vld [vmem:[%s1 + $0x40] sm:$0xf]
      %v315 = vld [vmem:[%s1 + $0x44] sm:$0xf]
      %v316 = vld [vmem:[%s1 + $0x48] sm:$0xf]
      %v317 = vld [vmem:[%s1 + $0x4c] sm:$0xf]
      %v318 = vld [vmem:[%s1 + $0x50] sm:$0xf]
      %v319 = vld [vmem:[%s1 + $0x54] sm:$0xf]
      %v320 = vld [vmem:[%s1 + $0x58] sm:$0xf]
      %v321 = vld [vmem:[%s1 + $0x5c] sm:$0xf]
      %v322 = vld [vmem:[%s1 + $0x60] sm:$0xf]
      %v323 = vld [vmem:[%s1 + $0x64] sm:$0xf]
      %v324 = vld [vmem:[%s1 + $0x68] sm:$0xf]
      %v325 = vld [vmem:[%s1 + $0x6c] sm:$0xf]
      %v326 = vld [vmem:[%s1 + $0x70] sm:$0xf]
      %v327 = vld [vmem:[%s1 + $0x74] sm:$0xf]
      %v328 = vld [vmem:[%s1 + $0x78] sm:$0xf]
      %v329 = vld [vmem:[%s1 + $0x7c] sm:$0xf]
      %v330 = vld [vmem:[%s2] sm:$0x1]
      %v332 = vlaneseq
      %v333 = vshrl.u32 %v332, 7
      %v334 = vsub.s32 0, %v333
      %v335 = vrot.slane %v330, %v334
      %v355 = vunpack.c.l.b16 %v280
      %v356 = vunpack.c.h.b16 %v280
      %v357 = vunpack.c.l.b16 %v281
      %v358 = vunpack.c.h.b16 %v281
      %v359 = vunpack.c.l.b16 %v282
      %v360 = vunpack.c.h.b16 %v282
      %v361 = vunpack.c.l.b16 %v283
      %v362 = vunpack.c.h.b16 %v283
      %v363 = vunpack.c.l.b16 %v284
      %v364 = vunpack.c.h.b16 %v284
      %v365 = vunpack.c.l.b16 %v285
      %v366 = vunpack.c.h.b16 %v285
      %v367 = vunpack.c.l.b16 %v286
      %v368 = vunpack.c.h.b16 %v286
      %v369 = vunpack.c.l.b16 %v287
      %v370 = vunpack.c.h.b16 %v287
      %v371 = vunpack.c.l.b16 %v288
      %v372 = vunpack.c.h.b16 %v288
      %v373 = vunpack.c.l.b16 %v289
      %v374 = vunpack.c.h.b16 %v289
      %v375 = vunpack.c.l.b16 %v290
      %v376 = vunpack.c.h.b16 %v290
      %v377 = vunpack.c.l.b16 %v291
      %v378 = vunpack.c.h.b16 %v291
      %v379 = vunpack.c.l.b16 %v292
      %v380 = vunpack.c.h.b16 %v292
      %v381 = vunpack.c.l.b16 %v293
      %v382 = vunpack.c.h.b16 %v293
      %v383 = vunpack.c.l.b16 %v294
      %v384 = vunpack.c.h.b16 %v294
      %v385 = vunpack.c.l.b16 %v295
      %v386 = vunpack.c.h.b16 %v295
      %v387 = vunpack.c.l.b16 %v296
      %v388 = vunpack.c.h.b16 %v296
      %v389 = vunpack.c.l.b16 %v297
      %v390 = vunpack.c.h.b16 %v297
      %v391 = vpack.c.b16 %v357, %v355
      %v392 = vpack.c.b16 %v358, %v356
      %v393 = vpack.c.b16 %v361, %v359
      %v394 = vpack.c.b16 %v362, %v360
      %v395 = vpack.c.b16 %v365, %v363
      %v396 = vpack.c.b16 %v366, %v364
      %v397 = vpack.c.b16 %v369, %v367
      %v398 = vpack.c.b16 %v370, %v368
      %v399 = vpack.c.b16 %v373, %v371
      %v400 = vpack.c.b16 %v374, %v372
      %v401 = vpack.c.b16 %v377, %v375
      %v402 = vpack.c.b16 %v378, %v376
      %v403 = vpack.c.b16 %v381, %v379
      %v404 = vpack.c.b16 %v382, %v380
      %v405 = vpack.c.b16 %v385, %v383
      %v406 = vpack.c.b16 %v386, %v384
      %v407 = vpack.c.b16 %v389, %v387
      %v408 = vpack.c.b16 %v390, %v388
      %v459 = vunpack.c.l.b16 %v298
      %v460 = vunpack.c.l.b16 %v299
      %v461 = vunpack.c.l.b16 %v300
      %v462 = vunpack.c.l.b16 %v301
      %v463 = vunpack.c.l.b16 %v302
      %v464 = vunpack.c.l.b16 %v303
      %v465 = vunpack.c.l.b16 %v304
      %v466 = vunpack.c.l.b16 %v305
      %v467 = vunpack.c.l.b16 %v306
      %v468 = vunpack.c.l.b16 %v307
      %v469 = vunpack.c.l.b16 %v308
      %v470 = vunpack.c.l.b16 %v309
      %v471 = vunpack.c.l.b16 %v310
      %v472 = vunpack.c.l.b16 %v311
      %v473 = vunpack.c.l.b16 %v312
      %v474 = vunpack.c.l.b16 %v313
      %v475 = vunpack.c.l.b16 %v314
      %v476 = vunpack.c.l.b16 %v315
      %v477 = vunpack.c.l.b16 %v316
      %v478 = vunpack.c.l.b16 %v317
      %v479 = vunpack.c.l.b16 %v318
      %v480 = vunpack.c.l.b16 %v319
      %v481 = vunpack.c.l.b16 %v320
      %v482 = vunpack.c.l.b16 %v321
      %v483 = vunpack.c.l.b16 %v322
      %v484 = vunpack.c.l.b16 %v323
      %v485 = vunpack.c.l.b16 %v324
      %v486 = vunpack.c.l.b16 %v325
      %v487 = vunpack.c.l.b16 %v326
      %v488 = vunpack.c.l.b16 %v327
      %v489 = vunpack.c.l.b16 %v328
      %v490 = vunpack.c.l.b16 %v329
      %v491 = vpack.c.b16 %v460, %v459
      %v492 = vpack.c.b16 %v462, %v461
      %v493 = vpack.c.b16 %v464, %v463
      %v494 = vpack.c.b16 %v466, %v465
      %v495 = vpack.c.b16 %v468, %v467
      %v496 = vpack.c.b16 %v470, %v469
      %v497 = vpack.c.b16 %v472, %v471
      %v498 = vpack.c.b16 %v474, %v473
      %v499 = vpack.c.b16 %v476, %v475
      %v500 = vpack.c.b16 %v478, %v477
      %v501 = vpack.c.b16 %v480, %v479
      %v502 = vpack.c.b16 %v482, %v481
      %v503 = vpack.c.b16 %v484, %v483
      %v504 = vpack.c.b16 %v486, %v485
      %v505 = vpack.c.b16 %v488, %v487
      %v506 = vpack.c.b16 %v490, %v489
      %523 = vmatprep.subr.bf16.mxu0 0
      %524 = vmatpush1.bf16.msra.mxu0 %v491
      %525 = vmatprep.subr.bf16.mxu0 0
      %526 = vmatpush1.bf16.msra.mxu0 %v492
      %527 = vmatprep.subr.bf16.mxu0 0
      %528 = vmatpush1.bf16.msra.mxu0 %v493
      %529 = vmatprep.subr.bf16.mxu0 0
      %530 = vmatpush1.bf16.msra.mxu0 %v494
      %531 = vmatprep.subr.bf16.mxu0 0
      %532 = vmatpush1.bf16.msra.mxu0 %v495
      %533 = vmatprep.subr.bf16.mxu0 0
      %534 = vmatpush1.bf16.msra.mxu0 %v496
      %535 = vmatprep.subr.bf16.mxu0 0
      %536 = vmatpush1.bf16.msra.mxu0 %v497
      %537 = vmatprep.subr.bf16.mxu0 0
      %538 = vmatpush1.bf16.msra.mxu0 %v498
      %539 = vmatprep.subr.bf16.mxu0 0
      %540 = vmatpush1.bf16.msra.mxu0 %v499
      %541 = vmatprep.subr.bf16.mxu0 0
      %542 = vmatpush1.bf16.msra.mxu0 %v500
      %543 = vmatprep.subr.bf16.mxu0 0
      %544 = vmatpush1.bf16.msra.mxu0 %v501
      %545 = vmatprep.subr.bf16.mxu0 0
      %546 = vmatpush1.bf16.msra.mxu0 %v502
      %547 = vmatprep.subr.bf16.mxu0 0
      %548 = vmatpush1.bf16.msra.mxu0 %v503
      %549 = vmatprep.subr.bf16.mxu0 0
      %550 = vmatpush1.bf16.msra.mxu0 %v504
      %551 = vmatprep.subr.bf16.mxu0 0
      %552 = vmatpush1.bf16.msra.mxu0 %v505
      %553 = vmatprep.subr.bf16.mxu0 0
      %554 = vmatpush1.bf16.msra.mxu0 %v506
      %555 = vmatprep.mubr.bf16.mxu0 %v392
      %556 = vmatmul.mubr.bf16.gmra.mrb[0].mxu0 %v391
      %v557 = vpop.f32.mrb[0].mxu0
      %v558 = vadd.f32 %v335, %v557
      %v559 = vpop.f32.mrb[0].mxu0
      %v560 = vpop.f32.mrb[0].mxu0
      %v561 = vadd.f32 %v335, %v560
      %v562 = vpop.f32.mrb[0].mxu0
      %563 = vmatprep.mubr.bf16.mxu0 %v394
      %564 = vmatmul.mubr.bf16.gmra.mrb[0].mxu0 %v393
      %v565 = vpop.f32.mrb[0].mxu0
      %v566 = vadd.f32 %v335, %v565
      %v567 = vpop.f32.mrb[0].mxu0
      %v568 = vpop.f32.mrb[0].mxu0
      %v569 = vadd.f32 %v335, %v568
      %v570 = vpop.f32.mrb[0].mxu0
      %571 = vmatprep.mubr.bf16.mxu0 %v396
      %572 = vmatmul.mubr.bf16.gmra.mrb[0].mxu0 %v395
      %v573 = vpop.f32.mrb[0].mxu0
      %v574 = vadd.f32 %v335, %v573
      %v575 = vpop.f32.mrb[0].mxu0
      %v576 = vpop.f32.mrb[0].mxu0
      %v577 = vadd.f32 %v335, %v576
      %v578 = vpop.f32.mrb[0].mxu0
      %579 = vmatprep.mubr.bf16.mxu0 %v398
      %580 = vmatmul.mubr.bf16.gmra.mrb[0].mxu0 %v397
      %v581 = vpop.f32.mrb[0].mxu0
      %v582 = vadd.f32 %v335, %v581
      %v583 = vpop.f32.mrb[0].mxu0
      %v584 = vpop.f32.mrb[0].mxu0
      %v585 = vadd.f32 %v335, %v584
      %v586 = vpop.f32.mrb[0].mxu0
      %587 = vmatprep.mubr.bf16.mxu0 %v400
      %588 = vmatmul.mubr.bf16.gmra.mrb[0].mxu0 %v399
      %v589 = vpop.f32.mrb[0].mxu0
      %v590 = vadd.f32 %v335, %v589
      %v591 = vpop.f32.mrb[0].mxu0
      %v592 = vpop.f32.mrb[0].mxu0
      %v593 = vadd.f32 %v335, %v592
      %v594 = vpop.f32.mrb[0].mxu0
      %595 = vmatprep.mubr.bf16.mxu0 %v402
      %596 = vmatmul.mubr.bf16.gmra.mrb[0].mxu0 %v401
      %v597 = vpop.f32.mrb[0].mxu0
      %v598 = vadd.f32 %v335, %v597
      %v599 = vpop.f32.mrb[0].mxu0
      %v600 = vpop.f32.mrb[0].mxu0
      %v601 = vadd.f32 %v335, %v600
      %v602 = vpop.f32.mrb[0].mxu0
      %603 = vmatprep.mubr.bf16.mxu0 %v404
      %604 = vmatmul.mubr.bf16.gmra.mrb[0].mxu0 %v403
      %v605 = vpop.f32.mrb[0].mxu0
      %v606 = vadd.f32 %v335, %v605
      %v607 = vpop.f32.mrb[0].mxu0
      %v608 = vpop.f32.mrb[0].mxu0
      %v609 = vadd.f32 %v335, %v608
      %v610 = vpop.f32.mrb[0].mxu0
      %611 = vmatprep.mubr.bf16.mxu0 %v406
      %612 = vmatmul.mubr.bf16.gmra.mrb[0].mxu0 %v405
      %v613 = vpop.f32.mrb[0].mxu0
      %v614 = vadd.f32 %v335, %v613
      %v615 = vpop.f32.mrb[0].mxu0
      %v616 = vpop.f32.mrb[0].mxu0
      %v617 = vadd.f32 %v335, %v616
      %v618 = vpop.f32.mrb[0].mxu0
      %619 = vmatprep.mubr.bf16.mxu0 %v408
      %620 = vmatmul.mubr.bf16.gmra.mrb[0].mxu0 %v407
      %v621 = vpop.f32.mrb[0].mxu0
      %v622 = vadd.f32 %v335, %v621
      %v623 = vpop.f32.mrb[0].mxu0
      %v624 = vpop.f32.mrb[0].mxu0
      %v625 = vadd.f32 %v335, %v624
      %v626 = vpop.f32.mrb[0].mxu0
      %627 = vdwg.mxu0
      %v628 = vmax.f32 %v558, 0.0
      %v629 = vmax.f32 %v561, 0.0
      %v630 = vmax.f32 %v566, 0.0
      %v631 = vmax.f32 %v569, 0.0
      %v632 = vmax.f32 %v574, 0.0
      %v633 = vmax.f32 %v577, 0.0
      %v634 = vmax.f32 %v582, 0.0
      %v635 = vmax.f32 %v585, 0.0
      %v636 = vmax.f32 %v590, 0.0
      %v637 = vmax.f32 %v593, 0.0
      %v638 = vmax.f32 %v598, 0.0
      %v639 = vmax.f32 %v601, 0.0
      %v640 = vmax.f32 %v606, 0.0
      %v641 = vmax.f32 %v609, 0.0
      %v642 = vmax.f32 %v614, 0.0
      %v643 = vmax.f32 %v617, 0.0
      %v644 = vmax.f32 %v622, 0.0
      %v645 = vmax.f32 %v625, 0.0
      %646 = vst [vmem:[#allocation2] sm:$0xff] %v628
      %647 = vst [vmem:[#allocation2 + $0x8] sm:$0xff] %v629
      %648 = vst [vmem:[#allocation2 + $0x10] sm:$0xff] %v630
      %649 = vst [vmem:[#allocation2 + $0x18] sm:$0xff] %v631
      %650 = vst [vmem:[#allocation2 + $0x20] sm:$0xff] %v632
      %651 = vst [vmem:[#allocation2 + $0x28] sm:$0xff] %v633
      %652 = vst [vmem:[#allocation2 + $0x30] sm:$0xff] %v634
      %653 = vst [vmem:[#allocation2 + $0x38] sm:$0xff] %v635
      %654 = vst [vmem:[#allocation2 + $0x40] sm:$0xff] %v636
      %655 = vst [vmem:[#allocation2 + $0x48] sm:$0xff] %v637
      %656 = vst [vmem:[#allocation2 + $0x50] sm:$0xff] %v638
      %657 = vst [vmem:[#allocation2 + $0x58] sm:$0xff] %v639
      %658 = vst [vmem:[#allocation2 + $0x60] sm:$0xff] %v640
      %659 = vst [vmem:[#allocation2 + $0x68] sm:$0xff] %v641
      %660 = vst [vmem:[#allocation2 + $0x70] sm:$0xff] %v642
      %661 = vst [vmem:[#allocation2 + $0x78] sm:$0xff] %v643
      %662 = vst [vmem:[#allocation2 + $0x80] sm:$0xff] %v644
      %663 = vst [vmem:[#allocation2 + $0x88] sm:$0xff] %v645
      %v664 = vld [vmem:[%s4] sm:$0x1]
      %v666 = vlaneseq
      %v667 = vshrl.u32 %v666, 7
      %v668 = vsub.s32 0, %v667
      %v669 = vrot.slane %v664, %v668
      %v671 = vld [vmem:[#allocation2] sm:$0xff]
      %v672 = vld [vmem:[#allocation2 + $0x8] sm:$0xff]
      %v673 = vld [vmem:[#allocation2 + $0x10] sm:$0xff]
      %v674 = vld [vmem:[#allocation2 + $0x18] sm:$0x1f]
      %v675 = vpack.c.bf16 %v672, %v671
      %v676 = vpack.c.bf16 %v674, %v673
      %v677 = vld [vmem:[%s3] sm:$0xf]
      %v678 = vld [vmem:[%s3 + $0x4] sm:$0xf]
      %v679 = vld [vmem:[%s3 + $0x8] sm:$0xf]
      %v680 = vld [vmem:[%s3 + $0xc] sm:$0xf]
      %v681 = vld [vmem:[%s3 + $0x10] sm:$0xf]
      %v682 = vld [vmem:[%s3 + $0x14] sm:$0xf]
      %v683 = vld [vmem:[%s3 + $0x18] sm:$0xf]
      %v684 = vld [vmem:[%s3 + $0x1c] sm:$0xf]
      %v685 = vld [vmem:[%s3 + $0x20] sm:$0xf]
      %v686 = vld [vmem:[%s3 + $0x24] sm:$0xf]
      %v687 = vld [vmem:[%s3 + $0x28] sm:$0xf]
      %v688 = vld [vmem:[%s3 + $0x2c] sm:$0xf]
      %v689 = vld [vmem:[%s3 + $0x30] sm:$0xf]
      %v690 = vld [vmem:[%s3 + $0x34] sm:$0xf]
      %v691 = vld [vmem:[%s3 + $0x38] sm:$0xf]
      %v692 = vld [vmem:[%s3 + $0x3c] sm:$0xf]
      %v709 = vunpack.c.l.b16 %v677
      %v710 = vunpack.c.l.b16 %v678
      %v711 = vunpack.c.l.b16 %v679
      %v712 = vunpack.c.l.b16 %v680
      %v713 = vunpack.c.l.b16 %v681
      %v714 = vunpack.c.l.b16 %v682
      %v715 = vunpack.c.l.b16 %v683
      %v716 = vunpack.c.l.b16 %v684
      %v717 = vunpack.c.l.b16 %v685
      %v718 = vunpack.c.l.b16 %v686
      %v719 = vunpack.c.l.b16 %v687
      %v720 = vunpack.c.l.b16 %v688
      %v721 = vunpack.c.l.b16 %v689
      %v722 = vunpack.c.l.b16 %v690
      %v723 = vunpack.c.l.b16 %v691
      %v724 = vunpack.c.l.b16 %v692
      %v725 = vpack.c.b16 %v710, %v709
      %v726 = vpack.c.b16 %v712, %v711
      %v727 = vpack.c.b16 %v714, %v713
      %v728 = vpack.c.b16 %v716, %v715
      %v729 = vpack.c.b16 %v718, %v717
      %v730 = vpack.c.b16 %v720, %v719
      %v731 = vpack.c.b16 %v722, %v721
      %v732 = vpack.c.b16 %v724, %v723
      %741 = vmatprep.subr.bf16.mxu0 0
      %742 = vmatpush1.bf16.msra.mxu0 %v725
      %743 = vmatprep.subr.bf16.mxu0 0
      %744 = vmatpush1.bf16.msra.mxu0 %v726
      %745 = vmatprep.subr.bf16.mxu0 0
      %746 = vmatpush1.bf16.msra.mxu0 %v727
      %747 = vmatprep.subr.bf16.mxu0 0
      %748 = vmatpush1.bf16.msra.mxu0 %v728
      %749 = vmatprep.subr.bf16.mxu0 0
      %750 = vmatpush1.bf16.msra.mxu0 %v729
      %751 = vmatprep.subr.bf16.mxu0 0
      %752 = vmatpush1.bf16.msra.mxu0 %v730
      %753 = vmatprep.subr.bf16.mxu0 0
      %754 = vmatpush1.bf16.msra.mxu0 %v731
      %755 = vmatprep.subr.bf16.mxu0 0
      %756 = vmatpush1.bf16.msra.mxu0 %v732
      %757 = vmatprep.subr.bf16.mxu0 0
      %758 = vmatpush1.bf16.msra.mxu0 0
      %759 = vmatprep.subr.bf16.mxu0 0
      %760 = vmatpush1.bf16.msra.mxu0 0
      %761 = vmatprep.subr.bf16.mxu0 0
      %762 = vmatpush1.bf16.msra.mxu0 0
      %763 = vmatprep.subr.bf16.mxu0 0
      %764 = vmatpush1.bf16.msra.mxu0 0
      %765 = vmatprep.subr.bf16.mxu0 0
      %766 = vmatpush1.bf16.msra.mxu0 0
      %767 = vmatprep.subr.bf16.mxu0 0
      %768 = vmatpush1.bf16.msra.mxu0 0
      %769 = vmatprep.subr.bf16.mxu0 0
      %770 = vmatpush1.bf16.msra.mxu0 0
      %771 = vmatprep.subr.bf16.mxu0 0
      %772 = vmatpush1.bf16.msra.mxu0 0
      %773 = vmatprep.mubr.bf16.mxu0 0
      %774 = vmatmul.mubr.bf16.gmra.mrb[0].mxu0 %v675
      %v775 = vpop.f32.mrb[0].mxu0
      %v776 = vadd.f32 0.0, %v775
      %v777 = vpop.f32.mrb[0].mxu0
      %v778 = vpop.f32.mrb[0].mxu0
      %v779 = vadd.f32 0.0, %v778
      %v780 = vpop.f32.mrb[0].mxu0
      %781 = vmatprep.mubr.bf16.mxu0 0
      %782 = vmatmul.mubr.bf16.gmra.mrb[0].mxu0 %v676
      %v783 = vpop.f32.mrb[0].mxu0
      %v784 = vadd.f32 0.0, %v783
      %v785 = vpop.f32.mrb[0].mxu0
      %v786 = vpop.f32.mrb[0].mxu0
      %v787 = vadd.f32 0.0, %v786
      %v788 = vpop.f32.mrb[0].mxu0
      %789 = vdwg.mxu0
      %v790 = vadd.f32 %v669, %v776
      %v791 = vadd.f32 %v669, %v779
      %v792 = vadd.f32 %v669, %v784
      %v793 = vadd.f32 %v669, %v787
      %v794 = vld [vmem:[#allocation2 + $0x24] sm:$0xff]
      %v795 = vld [vmem:[#allocation2 + $0x2c] sm:$0xff]
      %v796 = vld [vmem:[#allocation2 + $0x34] sm:$0xff]
      %v797 = vld [vmem:[#allocation2 + $0x3c] sm:$0x1f]
      %v798 = vpack.c.bf16 %v795, %v794
      %v799 = vpack.c.bf16 %v797, %v796
      %s800 = scalar_lea.vmem %s3, 64
      %v801 = vld [vmem:[%s800] sm:$0xf]
      %v802 = vld [vmem:[%s800 + $0x4] sm:$0xf]
      %v803 = vld [vmem:[%s800 + $0x8] sm:$0xf]
      %v804 = vld [vmem:[%s800 + $0xc] sm:$0xf]
      %v805 = vld [vmem:[%s800 + $0x10] sm:$0xf]
      %v806 = vld [vmem:[%s800 + $0x14] sm:$0xf]
      %v807 = vld [vmem:[%s800 + $0x18] sm:$0xf]
      %v808 = vld [vmem:[%s800 + $0x1c] sm:$0xf]
      %v809 = vld [vmem:[%s800 + $0x20] sm:$0xf]
      %v810 = vld [vmem:[%s800 + $0x24] sm:$0xf]
      %v811 = vld [vmem:[%s800 + $0x28] sm:$0xf]
      %v812 = vld [vmem:[%s800 + $0x2c] sm:$0xf]
      %v813 = vld [vmem:[%s800 + $0x30] sm:$0xf]
      %v814 = vld [vmem:[%s800 + $0x34] sm:$0xf]
      %v815 = vld [vmem:[%s800 + $0x38] sm:$0xf]
      %v816 = vld [vmem:[%s800 + $0x3c] sm:$0xf]
      %v833 = vunpack.c.l.b16 %v801
      %v834 = vunpack.c.l.b16 %v802
      %v835 = vunpack.c.l.b16 %v803
      %v836 = vunpack.c.l.b16 %v804
      %v837 = vunpack.c.l.b16 %v805
      %v838 = vunpack.c.l.b16 %v806
      %v839 = vunpack.c.l.b16 %v807
      %v840 = vunpack.c.l.b16 %v808
      %v841 = vunpack.c.l.b16 %v809
      %v842 = vunpack.c.l.b16 %v810
      %v843 = vunpack.c.l.b16 %v811
      %v844 = vunpack.c.l.b16 %v812
      %v845 = vunpack.c.l.b16 %v813
      %v846 = vunpack.c.l.b16 %v814
      %v847 = vunpack.c.l.b16 %v815
      %v848 = vunpack.c.l.b16 %v816
      %v849 = vpack.c.b16 %v834, %v833
      %v850 = vpack.c.b16 %v836, %v835
      %v851 = vpack.c.b16 %v838, %v837
      %v852 = vpack.c.b16 %v840, %v839
      %v853 = vpack.c.b16 %v842, %v841
      %v854 = vpack.c.b16 %v844, %v843
      %v855 = vpack.c.b16 %v846, %v845
      %v856 = vpack.c.b16 %v848, %v847
      %865 = vmatprep.subr.bf16.mxu0 0
      %866 = vmatpush1.bf16.msra.mxu0 %v849
      %867 = vmatprep.subr.bf16.mxu0 0
      %868 = vmatpush1.bf16.msra.mxu0 %v850
      %869 = vmatprep.subr.bf16.mxu0 0
      %870 = vmatpush1.bf16.msra.mxu0 %v851
      %871 = vmatprep.subr.bf16.mxu0 0
      %872 = vmatpush1.bf16.msra.mxu0 %v852
      %873 = vmatprep.subr.bf16.mxu0 0
      %874 = vmatpush1.bf16.msra.mxu0 %v853
      %875 = vmatprep.subr.bf16.mxu0 0
      %876 = vmatpush1.bf16.msra.mxu0 %v854
      %877 = vmatprep.subr.bf16.mxu0 0
      %878 = vmatpush1.bf16.msra.mxu0 %v855
      %879 = vmatprep.subr.bf16.mxu0 0
      %880 = vmatpush1.bf16.msra.mxu0 %v856
      %881 = vmatprep.subr.bf16.mxu0 0
      %882 = vmatpush1.bf16.msra.mxu0 0
      %883 = vmatprep.subr.bf16.mxu0 0
      %884 = vmatpush1.bf16.msra.mxu0 0
      %885 = vmatprep.subr.bf16.mxu0 0
      %886 = vmatpush1.bf16.msra.mxu0 0
      %887 = vmatprep.subr.bf16.mxu0 0
      %888 = vmatpush1.bf16.msra.mxu0 0
      %889 = vmatprep.subr.bf16.mxu0 0
      %890 = vmatpush1.bf16.msra.mxu0 0
      %891 = vmatprep.subr.bf16.mxu0 0
      %892 = vmatpush1.bf16.msra.mxu0 0
      %893 = vmatprep.subr.bf16.mxu0 0
      %894 = vmatpush1.bf16.msra.mxu0 0
      %895 = vmatprep.subr.bf16.mxu0 0
      %896 = vmatpush1.bf16.msra.mxu0 0
      %897 = vmatprep.mubr.bf16.mxu0 0
      %898 = vmatmul.mubr.bf16.gmra.mrb[0].mxu0 %v798
      %v899 = vpop.f32.mrb[0].mxu0
      %v900 = vadd.f32 0.0, %v899
      %v901 = vpop.f32.mrb[0].mxu0
      %v902 = vpop.f32.mrb[0].mxu0
      %v903 = vadd.f32 0.0, %v902
      %v904 = vpop.f32.mrb[0].mxu0
      %905 = vmatprep.mubr.bf16.mxu0 0
      %906 = vmatmul.mubr.bf16.gmra.mrb[0].mxu0 %v799
      %v907 = vpop.f32.mrb[0].mxu0
      %v908 = vadd.f32 0.0, %v907
      %v909 = vpop.f32.mrb[0].mxu0
      %v910 = vpop.f32.mrb[0].mxu0
      %v911 = vadd.f32 0.0, %v910
      %v912 = vpop.f32.mrb[0].mxu0
      %913 = vdwg.mxu0
      %v914 = vadd.f32 %v790, %v900
      %v915 = vadd.f32 %v791, %v903
      %v916 = vadd.f32 %v792, %v908
      %v917 = vadd.f32 %v793, %v911
      %v918 = vld [vmem:[#allocation2 + $0x1] sm:$0xff]
      %v919 = vld [vmem:[#allocation2 + $0x9] sm:$0xff]
      %v920 = vld [vmem:[#allocation2 + $0x11] sm:$0xff]
      %v921 = vld [vmem:[#allocation2 + $0x19] sm:$0x1f]
      %v922 = vpack.c.bf16 %v919, %v918
      %v923 = vpack.c.bf16 %v921, %v920
      %s924 = scalar_lea.vmem %s3, 128
      %v925 = vld [vmem:[%s924] sm:$0xf]
      %v926 = vld [vmem:[%s924 + $0x4] sm:$0xf]
      %v927 = vld [vmem:[%s924 + $0x8] sm:$0xf]
      %v928 = vld [vmem:[%s924 + $0xc] sm:$0xf]
      %v929 = vld [vmem:[%s924 + $0x10] sm:$0xf]
      %v930 = vld [vmem:[%s924 + $0x14] sm:$0xf]
      %v931 = vld [vmem:[%s924 + $0x18] sm:$0xf]
      %v932 = vld [vmem:[%s924 + $0x1c] sm:$0xf]
      %v933 = vld [vmem:[%s924 + $0x20] sm:$0xf]
      %v934 = vld [vmem:[%s924 + $0x24] sm:$0xf]
      %v935 = vld [vmem:[%s924 + $0x28] sm:$0xf]
      %v936 = vld [vmem:[%s924 + $0x2c] sm:$0xf]
      %v937 = vld [vmem:[%s924 + $0x30] sm:$0xf]
      %v938 = vld [vmem:[%s924 + $0x34] sm:$0xf]
      %v939 = vld [vmem:[%s924 + $0x38] sm:$0xf]
      %v940 = vld [vmem:[%s924 + $0x3c] sm:$0xf]
      %v957 = vunpack.c.l.b16 %v925
      %v958 = vunpack.c.l.b16 %v926
      %v959 = vunpack.c.l.b16 %v927
      %v960 = vunpack.c.l.b16 %v928
      %v961 = vunpack.c.l.b16 %v929
      %v962 = vunpack.c.l.b16 %v930
      %v963 = vunpack.c.l.b16 %v931
      %v964 = vunpack.c.l.b16 %v932
      %v965 = vunpack.c.l.b16 %v933
      %v966 = vunpack.c.l.b16 %v934
      %v967 = vunpack.c.l.b16 %v935
      %v968 = vunpack.c.l.b16 %v936
      %v969 = vunpack.c.l.b16 %v937
      %v970 = vunpack.c.l.b16 %v938
      %v971 = vunpack.c.l.b16 %v939
      %v972 = vunpack.c.l.b16 %v940
      %v973 = vpack.c.b16 %v958, %v957
      %v974 = vpack.c.b16 %v960, %v959
      %v975 = vpack.c.b16 %v962, %v961
      %v976 = vpack.c.b16 %v964, %v963
      %v977 = vpack.c.b16 %v966, %v965
      %v978 = vpack.c.b16 %v968, %v967
      %v979 = vpack.c.b16 %v970, %v969
      %v980 = vpack.c.b16 %v972, %v971
      %989 = vmatprep.subr.bf16.mxu0 0
      %990 = vmatpush1.bf16.msra.mxu0 %v973
      %991 = vmatprep.subr.bf16.mxu0 0
      %992 = vmatpush1.bf16.msra.mxu0 %v974
      %993 = vmatprep.subr.bf16.mxu0 0
      %994 = vmatpush1.bf16.msra.mxu0 %v975
      %995 = vmatprep.subr.bf16.mxu0 0
      %996 = vmatpush1.bf16.msra.mxu0 %v976
      %997 = vmatprep.subr.bf16.mxu0 0
      %998 = vmatpush1.bf16.msra.mxu0 %v977
      %999 = vmatprep.subr.bf16.mxu0 0
      %1000 = vmatpush1.bf16.msra.mxu0 %v978
      %1001 = vmatprep.subr.bf16.mxu0 0
      %1002 = vmatpush1.bf16.msra.mxu0 %v979
      %1003 = vmatprep.subr.bf16.mxu0 0
      %1004 = vmatpush1.bf16.msra.mxu0 %v980
      %1005 = vmatprep.subr.bf16.mxu0 0
      %1006 = vmatpush1.bf16.msra.mxu0 0
      %1007 = vmatprep.subr.bf16.mxu0 0
      %1008 = vmatpush1.bf16.msra.mxu0 0
      %1009 = vmatprep.subr.bf16.mxu0 0
      %1010 = vmatpush1.bf16.msra.mxu0 0
      %1011 = vmatprep.subr.bf16.mxu0 0
      %1012 = vmatpush1.bf16.msra.mxu0 0
      %1013 = vmatprep.subr.bf16.mxu0 0
      %1014 = vmatpush1.bf16.msra.mxu0 0
      %1015 = vmatprep.subr.bf16.mxu0 0
      %1016 = vmatpush1.bf16.msra.mxu0 0
      %1017 = vmatprep.subr.bf16.mxu0 0
      %1018 = vmatpush1.bf16.msra.mxu0 0
      %1019 = vmatprep.subr.bf16.mxu0 0
      %1020 = vmatpush1.bf16.msra.mxu0 0
      %1021 = vmatprep.mubr.bf16.mxu0 0
      %1022 = vmatmul.mubr.bf16.gmra.mrb[0].mxu0 %v922
      %v1023 = vpop.f32.mrb[0].mxu0
      %v1024 = vadd.f32 0.0, %v1023
      %v1025 = vpop.f32.mrb[0].mxu0
      %v1026 = vpop.f32.mrb[0].mxu0
      %v1027 = vadd.f32 0.0, %v1026
      %v1028 = vpop.f32.mrb[0].mxu0
      %1029 = vmatprep.mubr.bf16.mxu0 0
      %1030 = vmatmul.mubr.bf16.gmra.mrb[0].mxu0 %v923
      %v1031 = vpop.f32.mrb[0].mxu0
      %v1032 = vadd.f32 0.0, %v1031
      %v1033 = vpop.f32.mrb[0].mxu0
      %v1034 = vpop.f32.mrb[0].mxu0
      %v1035 = vadd.f32 0.0, %v1034
      %v1036 = vpop.f32.mrb[0].mxu0
      %1037 = vdwg.mxu0
      %v1038 = vadd.f32 %v914, %v1024
      %v1039 = vadd.f32 %v915, %v1027
      %v1040 = vadd.f32 %v916, %v1032
      %v1041 = vadd.f32 %v917, %v1035
      %v1042 = vld [vmem:[#allocation2 + $0x25] sm:$0xff]
      %v1043 = vld [vmem:[#allocation2 + $0x2d] sm:$0xff]
      %v1044 = vld [vmem:[#allocation2 + $0x35] sm:$0xff]
      %v1045 = vld [vmem:[#allocation2 + $0x3d] sm:$0x1f]
      %v1046 = vpack.c.bf16 %v1043, %v1042
      %v1047 = vpack.c.bf16 %v1045, %v1044
      %s1048 = scalar_lea.vmem %s3, 192
      %v1049 = vld [vmem:[%s1048] sm:$0xf]
      %v1050 = vld [vmem:[%s1048 + $0x4] sm:$0xf]
      %v1051 = vld [vmem:[%s1048 + $0x8] sm:$0xf]
      %v1052 = vld [vmem:[%s1048 + $0xc] sm:$0xf]
      %v1053 = vld [vmem:[%s1048 + $0x10] sm:$0xf]
      %v1054 = vld [vmem:[%s1048 + $0x14] sm:$0xf]
      %v1055 = vld [vmem:[%s1048 + $0x18] sm:$0xf]
      %v1056 = vld [vmem:[%s1048 + $0x1c] sm:$0xf]
      %v1057 = vld [vmem:[%s1048 + $0x20] sm:$0xf]
      %v1058 = vld [vmem:[%s1048 + $0x24] sm:$0xf]
      %v1059 = vld [vmem:[%s1048 + $0x28] sm:$0xf]
      %v1060 = vld [vmem:[%s1048 + $0x2c] sm:$0xf]
      %v1061 = vld [vmem:[%s1048 + $0x30] sm:$0xf]
      %v1062 = vld [vmem:[%s1048 + $0x34] sm:$0xf]
      %v1063 = vld [vmem:[%s1048 + $0x38] sm:$0xf]
      %v1064 = vld [vmem:[%s1048 + $0x3c] sm:$0xf]
      %v1081 = vunpack.c.l.b16 %v1049
      %v1082 = vunpack.c.l.b16 %v1050
      %v1083 = vunpack.c.l.b16 %v1051
      %v1084 = vunpack.c.l.b16 %v1052
      %v1085 = vunpack.c.l.b16 %v1053
      %v1086 = vunpack.c.l.b16 %v1054
      %v1087 = vunpack.c.l.b16 %v1055
      %v1088 = vunpack.c.l.b16 %v1056
      %v1089 = vunpack.c.l.b16 %v1057
      %v1090 = vunpack.c.l.b16 %v1058
      %v1091 = vunpack.c.l.b16 %v1059
      %v1092 = vunpack.c.l.b16 %v1060
      %v1093 = vunpack.c.l.b16 %v1061
      %v1094 = vunpack.c.l.b16 %v1062
      %v1095 = vunpack.c.l.b16 %v1063
      %v1096 = vunpack.c.l.b16 %v1064
      %v1097 = vpack.c.b16 %v1082, %v1081
      %v1098 = vpack.c.b16 %v1084, %v1083
      %v1099 = vpack.c.b16 %v1086, %v1085
      %v1100 = vpack.c.b16 %v1088, %v1087
      %v1101 = vpack.c.b16 %v1090, %v1089
      %v1102 = vpack.c.b16 %v1092, %v1091
      %v1103 = vpack.c.b16 %v1094, %v1093
      %v1104 = vpack.c.b16 %v1096, %v1095
      %1113 = vmatprep.subr.bf16.mxu0 0
      %1114 = vmatpush1.bf16.msra.mxu0 %v1097
      %1115 = vmatprep.subr.bf16.mxu0 0
      %1116 = vmatpush1.bf16.msra.mxu0 %v1098
      %1117 = vmatprep.subr.bf16.mxu0 0
      %1118 = vmatpush1.bf16.msra.mxu0 %v1099
      %1119 = vmatprep.subr.bf16.mxu0 0
      %1120 = vmatpush1.bf16.msra.mxu0 %v1100
      %1121 = vmatprep.subr.bf16.mxu0 0
      %1122 = vmatpush1.bf16.msra.mxu0 %v1101
      %1123 = vmatprep.subr.bf16.mxu0 0
      %1124 = vmatpush1.bf16.msra.mxu0 %v1102
      %1125 = vmatprep.subr.bf16.mxu0 0
      %1126 = vmatpush1.bf16.msra.mxu0 %v1103
      %1127 = vmatprep.subr.bf16.mxu0 0
      %1128 = vmatpush1.bf16.msra.mxu0 %v1104
      %1129 = vmatprep.subr.bf16.mxu0 0
      %1130 = vmatpush1.bf16.msra.mxu0 0
      %1131 = vmatprep.subr.bf16.mxu0 0
      %1132 = vmatpush1.bf16.msra.mxu0 0
      %1133 = vmatprep.subr.bf16.mxu0 0
      %1134 = vmatpush1.bf16.msra.mxu0 0
      %1135 = vmatprep.subr.bf16.mxu0 0
      %1136 = vmatpush1.bf16.msra.mxu0 0
      %1137 = vmatprep.subr.bf16.mxu0 0
      %1138 = vmatpush1.bf16.msra.mxu0 0
      %1139 = vmatprep.subr.bf16.mxu0 0
      %1140 = vmatpush1.bf16.msra.mxu0 0
      %1141 = vmatprep.subr.bf16.mxu0 0
      %1142 = vmatpush1.bf16.msra.mxu0 0
      %1143 = vmatprep.subr.bf16.mxu0 0
      %1144 = vmatpush1.bf16.msra.mxu0 0
      %1145 = vmatprep.mubr.bf16.mxu0 0
      %1146 = vmatmul.mubr.bf16.gmra.mrb[0].mxu0 %v1046
      %v1147 = vpop.f32.mrb[0].mxu0
      %v1148 = vadd.f32 0.0, %v1147
      %v1149 = vpop.f32.mrb[0].mxu0
      %v1150 = vpop.f32.mrb[0].mxu0
      %v1151 = vadd.f32 0.0, %v1150
      %v1152 = vpop.f32.mrb[0].mxu0
      %1153 = vmatprep.mubr.bf16.mxu0 0
      %1154 = vmatmul.mubr.bf16.gmra.mrb[0].mxu0 %v1047
      %v1155 = vpop.f32.mrb[0].mxu0
      %v1156 = vadd.f32 0.0, %v1155
      %v1157 = vpop.f32.mrb[0].mxu0
      %v1158 = vpop.f32.mrb[0].mxu0
      %v1159 = vadd.f32 0.0, %v1158
      %v1160 = vpop.f32.mrb[0].mxu0
      %1161 = vdwg.mxu0
      %v1162 = vadd.f32 %v1038, %v1148
      %v1163 = vadd.f32 %v1039, %v1151
      %v1164 = vadd.f32 %v1040, %v1156
      %v1165 = vadd.f32 %v1041, %v1159
      %v1166 = vld [vmem:[#allocation2 + $0x48] sm:$0xff]
      %v1167 = vld [vmem:[#allocation2 + $0x50] sm:$0xff]
      %v1168 = vld [vmem:[#allocation2 + $0x58] sm:$0xff]
      %v1169 = vld [vmem:[#allocation2 + $0x60] sm:$0x1f]
      %v1170 = vpack.c.bf16 %v1167, %v1166
      %v1171 = vpack.c.bf16 %v1169, %v1168
      %s1172 = scalar_lea.vmem %s3, 256
      %v1173 = vld [vmem:[%s1172] sm:$0xf]
      %v1174 = vld [vmem:[%s1172 + $0x4] sm:$0xf]
      %v1175 = vld [vmem:[%s1172 + $0x8] sm:$0xf]
      %v1176 = vld [vmem:[%s1172 + $0xc] sm:$0xf]
      %v1177 = vld [vmem:[%s1172 + $0x10] sm:$0xf]
      %v1178 = vld [vmem:[%s1172 + $0x14] sm:$0xf]
      %v1179 = vld [vmem:[%s1172 + $0x18] sm:$0xf]
      %v1180 = vld [vmem:[%s1172 + $0x1c] sm:$0xf]
      %v1181 = vld [vmem:[%s1172 + $0x20] sm:$0xf]
      %v1182 = vld [vmem:[%s1172 + $0x24] sm:$0xf]
      %v1183 = vld [vmem:[%s1172 + $0x28] sm:$0xf]
      %v1184 = vld [vmem:[%s1172 + $0x2c] sm:$0xf]
      %v1185 = vld [vmem:[%s1172 + $0x30] sm:$0xf]
      %v1186 = vld [vmem:[%s1172 + $0x34] sm:$0xf]
      %v1187 = vld [vmem:[%s1172 + $0x38] sm:$0xf]
      %v1188 = vld [vmem:[%s1172 + $0x3c] sm:$0xf]
      %v1205 = vunpack.c.l.b16 %v1173
      %v1206 = vunpack.c.l.b16 %v1174
      %v1207 = vunpack.c.l.b16 %v1175
      %v1208 = vunpack.c.l.b16 %v1176
      %v1209 = vunpack.c.l.b16 %v1177
      %v1210 = vunpack.c.l.b16 %v1178
      %v1211 = vunpack.c.l.b16 %v1179
      %v1212 = vunpack.c.l.b16 %v1180
      %v1213 = vunpack.c.l.b16 %v1181
      %v1214 = vunpack.c.l.b16 %v1182
      %v1215 = vunpack.c.l.b16 %v1183
      %v1216 = vunpack.c.l.b16 %v1184
      %v1217 = vunpack.c.l.b16 %v1185
      %v1218 = vunpack.c.l.b16 %v1186
      %v1219 = vunpack.c.l.b16 %v1187
      %v1220 = vunpack.c.l.b16 %v1188
      %v1221 = vpack.c.b16 %v1206, %v1205
      %v1222 = vpack.c.b16 %v1208, %v1207
      %v1223 = vpack.c.b16 %v1210, %v1209
      %v1224 = vpack.c.b16 %v1212, %v1211
      %v1225 = vpack.c.b16 %v1214, %v1213
      %v1226 = vpack.c.b16 %v1216, %v1215
      %v1227 = vpack.c.b16 %v1218, %v1217
      %v1228 = vpack.c.b16 %v1220, %v1219
      %1237 = vmatprep.subr.bf16.mxu0 0
      %1238 = vmatpush1.bf16.msra.mxu0 %v1221
      %1239 = vmatprep.subr.bf16.mxu0 0
      %1240 = vmatpush1.bf16.msra.mxu0 %v1222
      %1241 = vmatprep.subr.bf16.mxu0 0
      %1242 = vmatpush1.bf16.msra.mxu0 %v1223
      %1243 = vmatprep.subr.bf16.mxu0 0
      %1244 = vmatpush1.bf16.msra.mxu0 %v1224
      %1245 = vmatprep.subr.bf16.mxu0 0
      %1246 = vmatpush1.bf16.msra.mxu0 %v1225
      %1247 = vmatprep.subr.bf16.mxu0 0
      %1248 = vmatpush1.bf16.msra.mxu0 %v1226
      %1249 = vmatprep.subr.bf16.mxu0 0
      %1250 = vmatpush1.bf16.msra.mxu0 %v1227
      %1251 = vmatprep.subr.bf16.mxu0 0
      %1252 = vmatpush1.bf16.msra.mxu0 %v1228
      %1253 = vmatprep.subr.bf16.mxu0 0
      %1254 = vmatpush1.bf16.msra.mxu0 0
      %1255 = vmatprep.subr.bf16.mxu0 0
      %1256 = vmatpush1.bf16.msra.mxu0 0
      %1257 = vmatprep.subr.bf16.mxu0 0
      %1258 = vmatpush1.bf16.msra.mxu0 0
      %1259 = vmatprep.subr.bf16.mxu0 0
      %1260 = vmatpush1.bf16.msra.mxu0 0
      %1261 = vmatprep.subr.bf16.mxu0 0
      %1262 = vmatpush1.bf16.msra.mxu0 0
      %1263 = vmatprep.subr.bf16.mxu0 0
      %1264 = vmatpush1.bf16.msra.mxu0 0
      %1265 = vmatprep.subr.bf16.mxu0 0
      %1266 = vmatpush1.bf16.msra.mxu0 0
      %1267 = vmatprep.subr.bf16.mxu0 0
      %1268 = vmatpush1.bf16.msra.mxu0 0
      %1269 = vmatprep.mubr.bf16.mxu0 0
      %1270 = vmatmul.mubr.bf16.gmra.mrb[0].mxu0 %v1170
      %v1271 = vpop.f32.mrb[0].mxu0
      %v1272 = vadd.f32 0.0, %v1271
      %v1273 = vpop.f32.mrb[0].mxu0
      %v1274 = vpop.f32.mrb[0].mxu0
      %v1275 = vadd.f32 0.0, %v1274
      %v1276 = vpop.f32.mrb[0].mxu0
      %1277 = vmatprep.mubr.bf16.mxu0 0
      %1278 = vmatmul.mubr.bf16.gmra.mrb[0].mxu0 %v1171
      %v1279 = vpop.f32.mrb[0].mxu0
      %v1280 = vadd.f32 0.0, %v1279
      %v1281 = vpop.f32.mrb[0].mxu0
      %v1282 = vpop.f32.mrb[0].mxu0
      %v1283 = vadd.f32 0.0, %v1282
      %v1284 = vpop.f32.mrb[0].mxu0
      %1285 = vdwg.mxu0
      %v1286 = vadd.f32 %v1162, %v1272
      %v1287 = vadd.f32 %v1163, %v1275
      %v1288 = vadd.f32 %v1164, %v1280
      %v1289 = vadd.f32 %v1165, %v1283
      %v1290 = vld [vmem:[#allocation2 + $0x6c] sm:$0xff]
      %v1291 = vld [vmem:[#allocation2 + $0x74] sm:$0xff]
      %v1292 = vld [vmem:[#allocation2 + $0x7c] sm:$0xff]
      %v1293 = vld [vmem:[#allocation2 + $0x84] sm:$0x1f]
      %v1294 = vpack.c.bf16 %v1291, %v1290
      %v1295 = vpack.c.bf16 %v1293, %v1292
      %s1296 = scalar_lea.vmem %s3, 320
      %v1297 = vld [vmem:[%s1296] sm:$0xf]
      %v1298 = vld [vmem:[%s1296 + $0x4] sm:$0xf]
      %v1299 = vld [vmem:[%s1296 + $0x8] sm:$0xf]
      %v1300 = vld [vmem:[%s1296 + $0xc] sm:$0xf]
      %v1301 = vld [vmem:[%s1296 + $0x10] sm:$0xf]
      %v1302 = vld [vmem:[%s1296 + $0x14] sm:$0xf]
      %v1303 = vld [vmem:[%s1296 + $0x18] sm:$0xf]
      %v1304 = vld [vmem:[%s1296 + $0x1c] sm:$0xf]
      %v1305 = vld [vmem:[%s1296 + $0x20] sm:$0xf]
      %v1306 = vld [vmem:[%s1296 + $0x24] sm:$0xf]
      %v1307 = vld [vmem:[%s1296 + $0x28] sm:$0xf]
      %v1308 = vld [vmem:[%s1296 + $0x2c] sm:$0xf]
      %v1309 = vld [vmem:[%s1296 + $0x30] sm:$0xf]
      %v1310 = vld [vmem:[%s1296 + $0x34] sm:$0xf]
      %v1311 = vld [vmem:[%s1296 + $0x38] sm:$0xf]
      %v1312 = vld [vmem:[%s1296 + $0x3c] sm:$0xf]
      %v1329 = vunpack.c.l.b16 %v1297
      %v1330 = vunpack.c.l.b16 %v1298
      %v1331 = vunpack.c.l.b16 %v1299
      %v1332 = vunpack.c.l.b16 %v1300
      %v1333 = vunpack.c.l.b16 %v1301
      %v1334 = vunpack.c.l.b16 %v1302
      %v1335 = vunpack.c.l.b16 %v1303
      %v1336 = vunpack.c.l.b16 %v1304
      %v1337 = vunpack.c.l.b16 %v1305
      %v1338 = vunpack.c.l.b16 %v1306
      %v1339 = vunpack.c.l.b16 %v1307
      %v1340 = vunpack.c.l.b16 %v1308
      %v1341 = vunpack.c.l.b16 %v1309
      %v1342 = vunpack.c.l.b16 %v1310
      %v1343 = vunpack.c.l.b16 %v1311
      %v1344 = vunpack.c.l.b16 %v1312
      %v1345 = vpack.c.b16 %v1330, %v1329
      %v1346 = vpack.c.b16 %v1332, %v1331
      %v1347 = vpack.c.b16 %v1334, %v1333
      %v1348 = vpack.c.b16 %v1336, %v1335
      %v1349 = vpack.c.b16 %v1338, %v1337
      %v1350 = vpack.c.b16 %v1340, %v1339
      %v1351 = vpack.c.b16 %v1342, %v1341
      %v1352 = vpack.c.b16 %v1344, %v1343
      %1361 = vmatprep.subr.bf16.mxu0 0
      %1362 = vmatpush1.bf16.msra.mxu0 %v1345
      %1363 = vmatprep.subr.bf16.mxu0 0
      %1364 = vmatpush1.bf16.msra.mxu0 %v1346
      %1365 = vmatprep.subr.bf16.mxu0 0
      %1366 = vmatpush1.bf16.msra.mxu0 %v1347
      %1367 = vmatprep.subr.bf16.mxu0 0
      %1368 = vmatpush1.bf16.msra.mxu0 %v1348
      %1369 = vmatprep.subr.bf16.mxu0 0
      %1370 = vmatpush1.bf16.msra.mxu0 %v1349
      %1371 = vmatprep.subr.bf16.mxu0 0
      %1372 = vmatpush1.bf16.msra.mxu0 %v1350
      %1373 = vmatprep.subr.bf16.mxu0 0
      %1374 = vmatpush1.bf16.msra.mxu0 %v1351
      %1375 = vmatprep.subr.bf16.mxu0 0
      %1376 = vmatpush1.bf16.msra.mxu0 %v1352
      %1377 = vmatprep.subr.bf16.mxu0 0
      %1378 = vmatpush1.bf16.msra.mxu0 0
      %1379 = vmatprep.subr.bf16.mxu0 0
      %1380 = vmatpush1.bf16.msra.mxu0 0
      %1381 = vmatprep.subr.bf16.mxu0 0
      %1382 = vmatpush1.bf16.msra.mxu0 0
      %1383 = vmatprep.subr.bf16.mxu0 0
      %1384 = vmatpush1.bf16.msra.mxu0 0
      %1385 = vmatprep.subr.bf16.mxu0 0
      %1386 = vmatpush1.bf16.msra.mxu0 0
      %1387 = vmatprep.subr.bf16.mxu0 0
      %1388 = vmatpush1.bf16.msra.mxu0 0
      %1389 = vmatprep.subr.bf16.mxu0 0
      %1390 = vmatpush1.bf16.msra.mxu0 0
      %1391 = vmatprep.subr.bf16.mxu0 0
      %1392 = vmatpush1.bf16.msra.mxu0 0
      %1393 = vmatprep.mubr.bf16.mxu0 0
      %1394 = vmatmul.mubr.bf16.gmra.mrb[0].mxu0 %v1294
      %v1395 = vpop.f32.mrb[0].mxu0
      %v1396 = vadd.f32 0.0, %v1395
      %v1397 = vpop.f32.mrb[0].mxu0
      %v1398 = vpop.f32.mrb[0].mxu0
      %v1399 = vadd.f32 0.0, %v1398
      %v1400 = vpop.f32.mrb[0].mxu0
      %1401 = vmatprep.mubr.bf16.mxu0 0
      %1402 = vmatmul.mubr.bf16.gmra.mrb[0].mxu0 %v1295
      %v1403 = vpop.f32.mrb[0].mxu0
      %v1404 = vadd.f32 0.0, %v1403
      %v1405 = vpop.f32.mrb[0].mxu0
      %v1406 = vpop.f32.mrb[0].mxu0
      %v1407 = vadd.f32 0.0, %v1406
      %v1408 = vpop.f32.mrb[0].mxu0
      %1409 = vdwg.mxu0
      %v1410 = vadd.f32 %v1286, %v1396
      %v1411 = vadd.f32 %v1287, %v1399
      %v1412 = vadd.f32 %v1288, %v1404
      %v1413 = vadd.f32 %v1289, %v1407
      %v1414 = vld [vmem:[#allocation2 + $0x49] sm:$0xff]
      %v1415 = vld [vmem:[#allocation2 + $0x51] sm:$0xff]
      %v1416 = vld [vmem:[#allocation2 + $0x59] sm:$0xff]
      %v1417 = vld [vmem:[#allocation2 + $0x61] sm:$0x1f]
      %v1418 = vpack.c.bf16 %v1415, %v1414
      %v1419 = vpack.c.bf16 %v1417, %v1416
      %s1420 = scalar_lea.vmem %s3, 384
      %v1421 = vld [vmem:[%s1420] sm:$0xf]
      %v1422 = vld [vmem:[%s1420 + $0x4] sm:$0xf]
      %v1423 = vld [vmem:[%s1420 + $0x8] sm:$0xf]
      %v1424 = vld [vmem:[%s1420 + $0xc] sm:$0xf]
      %v1425 = vld [vmem:[%s1420 + $0x10] sm:$0xf]
      %v1426 = vld [vmem:[%s1420 + $0x14] sm:$0xf]
      %v1427 = vld [vmem:[%s1420 + $0x18] sm:$0xf]
      %v1428 = vld [vmem:[%s1420 + $0x1c] sm:$0xf]
      %v1429 = vld [vmem:[%s1420 + $0x20] sm:$0xf]
      %v1430 = vld [vmem:[%s1420 + $0x24] sm:$0xf]
      %v1431 = vld [vmem:[%s1420 + $0x28] sm:$0xf]
      %v1432 = vld [vmem:[%s1420 + $0x2c] sm:$0xf]
      %v1433 = vld [vmem:[%s1420 + $0x30] sm:$0xf]
      %v1434 = vld [vmem:[%s1420 + $0x34] sm:$0xf]
      %v1435 = vld [vmem:[%s1420 + $0x38] sm:$0xf]
      %v1436 = vld [vmem:[%s1420 + $0x3c] sm:$0xf]
      %v1453 = vunpack.c.l.b16 %v1421
      %v1454 = vunpack.c.l.b16 %v1422
      %v1455 = vunpack.c.l.b16 %v1423
      %v1456 = vunpack.c.l.b16 %v1424
      %v1457 = vunpack.c.l.b16 %v1425
      %v1458 = vunpack.c.l.b16 %v1426
      %v1459 = vunpack.c.l.b16 %v1427
      %v1460 = vunpack.c.l.b16 %v1428
      %v1461 = vunpack.c.l.b16 %v1429
      %v1462 = vunpack.c.l.b16 %v1430
      %v1463 = vunpack.c.l.b16 %v1431
      %v1464 = vunpack.c.l.b16 %v1432
      %v1465 = vunpack.c.l.b16 %v1433
      %v1466 = vunpack.c.l.b16 %v1434
      %v1467 = vunpack.c.l.b16 %v1435
      %v1468 = vunpack.c.l.b16 %v1436
      %v1469 = vpack.c.b16 %v1454, %v1453
      %v1470 = vpack.c.b16 %v1456, %v1455
      %v1471 = vpack.c.b16 %v1458, %v1457
      %v1472 = vpack.c.b16 %v1460, %v1459
      %v1473 = vpack.c.b16 %v1462, %v1461
      %v1474 = vpack.c.b16 %v1464, %v1463
      %v1475 = vpack.c.b16 %v1466, %v1465
      %v1476 = vpack.c.b16 %v1468, %v1467
      %1485 = vmatprep.subr.bf16.mxu0 0
      %1486 = vmatpush1.bf16.msra.mxu0 %v1469
      %1487 = vmatprep.subr.bf16.mxu0 0
      %1488 = vmatpush1.bf16.msra.mxu0 %v1470
      %1489 = vmatprep.subr.bf16.mxu0 0
      %1490 = vmatpush1.bf16.msra.mxu0 %v1471
      %1491 = vmatprep.subr.bf16.mxu0 0
      %1492 = vmatpush1.bf16.msra.mxu0 %v1472
      %1493 = vmatprep.subr.bf16.mxu0 0
      %1494 = vmatpush1.bf16.msra.mxu0 %v1473
      %1495 = vmatprep.subr.bf16.mxu0 0
      %1496 = vmatpush1.bf16.msra.mxu0 %v1474
      %1497 = vmatprep.subr.bf16.mxu0 0
      %1498 = vmatpush1.bf16.msra.mxu0 %v1475
      %1499 = vmatprep.subr.bf16.mxu0 0
      %1500 = vmatpush1.bf16.msra.mxu0 %v1476
      %1501 = vmatprep.subr.bf16.mxu0 0
      %1502 = vmatpush1.bf16.msra.mxu0 0
      %1503 = vmatprep.subr.bf16.mxu0 0
      %1504 = vmatpush1.bf16.msra.mxu0 0
      %1505 = vmatprep.subr.bf16.mxu0 0
      %1506 = vmatpush1.bf16.msra.mxu0 0
      %1507 = vmatprep.subr.bf16.mxu0 0
      %1508 = vmatpush1.bf16.msra.mxu0 0
      %1509 = vmatprep.subr.bf16.mxu0 0
      %1510 = vmatpush1.bf16.msra.mxu0 0
      %1511 = vmatprep.subr.bf16.mxu0 0
      %1512 = vmatpush1.bf16.msra.mxu0 0
      %1513 = vmatprep.subr.bf16.mxu0 0
      %1514 = vmatpush1.bf16.msra.mxu0 0
      %1515 = vmatprep.subr.bf16.mxu0 0
      %1516 = vmatpush1.bf16.msra.mxu0 0
      %1517 = vmatprep.mubr.bf16.mxu0 0
      %1518 = vmatmul.mubr.bf16.gmra.mrb[0].mxu0 %v1418
      %v1519 = vpop.f32.mrb[0].mxu0
      %v1520 = vadd.f32 0.0, %v1519
      %v1521 = vpop.f32.mrb[0].mxu0
      %v1522 = vpop.f32.mrb[0].mxu0
      %v1523 = vadd.f32 0.0, %v1522
      %v1524 = vpop.f32.mrb[0].mxu0
      %1525 = vmatprep.mubr.bf16.mxu0 0
      %1526 = vmatmul.mubr.bf16.gmra.mrb[0].mxu0 %v1419
      %v1527 = vpop.f32.mrb[0].mxu0
      %v1528 = vadd.f32 0.0, %v1527
      %v1529 = vpop.f32.mrb[0].mxu0
      %v1530 = vpop.f32.mrb[0].mxu0
      %v1531 = vadd.f32 0.0, %v1530
      %v1532 = vpop.f32.mrb[0].mxu0
      %1533 = vdwg.mxu0
      %v1534 = vadd.f32 %v1410, %v1520
      %v1535 = vadd.f32 %v1411, %v1523
      %v1536 = vadd.f32 %v1412, %v1528
      %v1537 = vadd.f32 %v1413, %v1531
      %v1538 = vld [vmem:[#allocation2 + $0x6d] sm:$0xff]
      %v1539 = vld [vmem:[#allocation2 + $0x75] sm:$0xff]
      %v1540 = vld [vmem:[#allocation2 + $0x7d] sm:$0xff]
      %v1541 = vld [vmem:[#allocation2 + $0x85] sm:$0x1f]
      %v1542 = vpack.c.bf16 %v1539, %v1538
      %v1543 = vpack.c.bf16 %v1541, %v1540
      %s1544 = scalar_lea.vmem %s3, 448
      %v1545 = vld [vmem:[%s1544] sm:$0xf]
      %v1546 = vld [vmem:[%s1544 + $0x4] sm:$0xf]
      %v1547 = vld [vmem:[%s1544 + $0x8] sm:$0xf]
      %v1548 = vld [vmem:[%s1544 + $0xc] sm:$0xf]
      %v1549 = vld [vmem:[%s1544 + $0x10] sm:$0xf]
      %v1550 = vld [vmem:[%s1544 + $0x14] sm:$0xf]
      %v1551 = vld [vmem:[%s1544 + $0x18] sm:$0xf]
      %v1552 = vld [vmem:[%s1544 + $0x1c] sm:$0xf]
      %v1553 = vld [vmem:[%s1544 + $0x20] sm:$0xf]
      %v1554 = vld [vmem:[%s1544 + $0x24] sm:$0xf]
      %v1555 = vld [vmem:[%s1544 + $0x28] sm:$0xf]
      %v1556 = vld [vmem:[%s1544 + $0x2c] sm:$0xf]
      %v1557 = vld [vmem:[%s1544 + $0x30] sm:$0xf]
      %v1558 = vld [vmem:[%s1544 + $0x34] sm:$0xf]
      %v1559 = vld [vmem:[%s1544 + $0x38] sm:$0xf]
      %v1560 = vld [vmem:[%s1544 + $0x3c] sm:$0xf]
      %v1577 = vunpack.c.l.b16 %v1545
      %v1578 = vunpack.c.l.b16 %v1546
      %v1579 = vunpack.c.l.b16 %v1547
      %v1580 = vunpack.c.l.b16 %v1548
      %v1581 = vunpack.c.l.b16 %v1549
      %v1582 = vunpack.c.l.b16 %v1550
      %v1583 = vunpack.c.l.b16 %v1551
      %v1584 = vunpack.c.l.b16 %v1552
      %v1585 = vunpack.c.l.b16 %v1553
      %v1586 = vunpack.c.l.b16 %v1554
      %v1587 = vunpack.c.l.b16 %v1555
      %v1588 = vunpack.c.l.b16 %v1556
      %v1589 = vunpack.c.l.b16 %v1557
      %v1590 = vunpack.c.l.b16 %v1558
      %v1591 = vunpack.c.l.b16 %v1559
      %v1592 = vunpack.c.l.b16 %v1560
      %v1593 = vpack.c.b16 %v1578, %v1577
      %v1594 = vpack.c.b16 %v1580, %v1579
      %v1595 = vpack.c.b16 %v1582, %v1581
      %v1596 = vpack.c.b16 %v1584, %v1583
      %v1597 = vpack.c.b16 %v1586, %v1585
      %v1598 = vpack.c.b16 %v1588, %v1587
      %v1599 = vpack.c.b16 %v1590, %v1589
      %v1600 = vpack.c.b16 %v1592, %v1591
      %1609 = vmatprep.subr.bf16.mxu0 0
      %1610 = vmatpush1.bf16.msra.mxu0 %v1593
      %1611 = vmatprep.subr.bf16.mxu0 0
      %1612 = vmatpush1.bf16.msra.mxu0 %v1594
      %1613 = vmatprep.subr.bf16.mxu0 0
      %1614 = vmatpush1.bf16.msra.mxu0 %v1595
      %1615 = vmatprep.subr.bf16.mxu0 0
      %1616 = vmatpush1.bf16.msra.mxu0 %v1596
      %1617 = vmatprep.subr.bf16.mxu0 0
      %1618 = vmatpush1.bf16.msra.mxu0 %v1597
      %1619 = vmatprep.subr.bf16.mxu0 0
      %1620 = vmatpush1.bf16.msra.mxu0 %v1598
      %1621 = vmatprep.subr.bf16.mxu0 0
      %1622 = vmatpush1.bf16.msra.mxu0 %v1599
      %1623 = vmatprep.subr.bf16.mxu0 0
      %1624 = vmatpush1.bf16.msra.mxu0 %v1600
      %1625 = vmatprep.subr.bf16.mxu0 0
      %1626 = vmatpush1.bf16.msra.mxu0 0
      %1627 = vmatprep.subr.bf16.mxu0 0
      %1628 = vmatpush1.bf16.msra.mxu0 0
      %1629 = vmatprep.subr.bf16.mxu0 0
      %1630 = vmatpush1.bf16.msra.mxu0 0
      %1631 = vmatprep.subr.bf16.mxu0 0
      %1632 = vmatpush1.bf16.msra.mxu0 0
      %1633 = vmatprep.subr.bf16.mxu0 0
      %1634 = vmatpush1.bf16.msra.mxu0 0
      %1635 = vmatprep.subr.bf16.mxu0 0
      %1636 = vmatpush1.bf16.msra.mxu0 0
      %1637 = vmatprep.subr.bf16.mxu0 0
      %1638 = vmatpush1.bf16.msra.mxu0 0
      %1639 = vmatprep.subr.bf16.mxu0 0
      %1640 = vmatpush1.bf16.msra.mxu0 0
      %1641 = vmatprep.mubr.bf16.mxu0 0
      %1642 = vmatmul.mubr.bf16.gmra.mrb[0].mxu0 %v1542
      %v1643 = vpop.f32.mrb[0].mxu0
      %v1644 = vadd.f32 0.0, %v1643
      %v1645 = vpop.f32.mrb[0].mxu0
      %v1646 = vpop.f32.mrb[0].mxu0
      %v1647 = vadd.f32 0.0, %v1646
      %v1648 = vpop.f32.mrb[0].mxu0
      %1649 = vmatprep.mubr.bf16.mxu0 0
      %1650 = vmatmul.mubr.bf16.gmra.mrb[0].mxu0 %v1543
      %v1651 = vpop.f32.mrb[0].mxu0
      %v1652 = vadd.f32 0.0, %v1651
      %v1653 = vpop.f32.mrb[0].mxu0
      %v1654 = vpop.f32.mrb[0].mxu0
      %v1655 = vadd.f32 0.0, %v1654
      %v1656 = vpop.f32.mrb[0].mxu0
      %1657 = vdwg.mxu0
      %v1658 = vadd.f32 %v1534, %v1644
      %v1659 = vadd.f32 %v1535, %v1647
      %v1660 = vadd.f32 %v1536, %v1652
      %v1661 = vadd.f32 %v1537, %v1655
      %v1662 = vld [vmem:[#allocation2 + $0x6] sm:$0xff]
      %v1663 = vld [vmem:[#allocation2 + $0xe] sm:$0xff]
      %v1664 = vld [vmem:[#allocation2 + $0x16] sm:$0xff]
      %v1665 = vld [vmem:[#allocation2 + $0x1e] sm:$0x1f]
      %v1666 = vpack.c.bf16 %v1663, %v1662
      %v1667 = vpack.c.bf16 %v1665, %v1664
      %s1668 = scalar_lea.vmem %s3, 512
      %v1669 = vld [vmem:[%s1668] sm:$0xf]
      %v1670 = vld [vmem:[%s1668 + $0x4] sm:$0xf]
      %v1671 = vld [vmem:[%s1668 + $0x8] sm:$0xf]
      %v1672 = vld [vmem:[%s1668 + $0xc] sm:$0xf]
      %v1673 = vld [vmem:[%s1668 + $0x10] sm:$0xf]
      %v1674 = vld [vmem:[%s1668 + $0x14] sm:$0xf]
      %v1675 = vld [vmem:[%s1668 + $0x18] sm:$0xf]
      %v1676 = vld [vmem:[%s1668 + $0x1c] sm:$0xf]
      %v1677 = vld [vmem:[%s1668 + $0x20] sm:$0xf]
      %v1678 = vld [vmem:[%s1668 + $0x24] sm:$0xf]
      %v1679 = vld [vmem:[%s1668 + $0x28] sm:$0xf]
      %v1680 = vld [vmem:[%s1668 + $0x2c] sm:$0xf]
      %v1681 = vld [vmem:[%s1668 + $0x30] sm:$0xf]
      %v1682 = vld [vmem:[%s1668 + $0x34] sm:$0xf]
      %v1683 = vld [vmem:[%s1668 + $0x38] sm:$0xf]
      %v1684 = vld [vmem:[%s1668 + $0x3c] sm:$0xf]
      %v1701 = vunpack.c.l.b16 %v1669
      %v1702 = vunpack.c.l.b16 %v1670
      %v1703 = vunpack.c.l.b16 %v1671
      %v1704 = vunpack.c.l.b16 %v1672
      %v1705 = vunpack.c.l.b16 %v1673
      %v1706 = vunpack.c.l.b16 %v1674
      %v1707 = vunpack.c.l.b16 %v1675
      %v1708 = vunpack.c.l.b16 %v1676
      %v1709 = vunpack.c.l.b16 %v1677
      %v1710 = vunpack.c.l.b16 %v1678
      %v1711 = vunpack.c.l.b16 %v1679
      %v1712 = vunpack.c.l.b16 %v1680
      %v1713 = vunpack.c.l.b16 %v1681
      %v1714 = vunpack.c.l.b16 %v1682
      %v1715 = vunpack.c.l.b16 %v1683
      %v1716 = vunpack.c.l.b16 %v1684
      %v1717 = vpack.c.b16 %v1702, %v1701
      %v1718 = vpack.c.b16 %v1704, %v1703
      %v1719 = vpack.c.b16 %v1706, %v1705
      %v1720 = vpack.c.b16 %v1708, %v1707
      %v1721 = vpack.c.b16 %v1710, %v1709
      %v1722 = vpack.c.b16 %v1712, %v1711
      %v1723 = vpack.c.b16 %v1714, %v1713
      %v1724 = vpack.c.b16 %v1716, %v1715
      %1733 = vmatprep.subr.bf16.mxu0 0
      %1734 = vmatpush1.bf16.msra.mxu0 %v1717
      %1735 = vmatprep.subr.bf16.mxu0 0
      %1736 = vmatpush1.bf16.msra.mxu0 %v1718
      %1737 = vmatprep.subr.bf16.mxu0 0
      %1738 = vmatpush1.bf16.msra.mxu0 %v1719
      %1739 = vmatprep.subr.bf16.mxu0 0
      %1740 = vmatpush1.bf16.msra.mxu0 %v1720
      %1741 = vmatprep.subr.bf16.mxu0 0
      %1742 = vmatpush1.bf16.msra.mxu0 %v1721
      %1743 = vmatprep.subr.bf16.mxu0 0
      %1744 = vmatpush1.bf16.msra.mxu0 %v1722
      %1745 = vmatprep.subr.bf16.mxu0 0
      %1746 = vmatpush1.bf16.msra.mxu0 %v1723
      %1747 = vmatprep.subr.bf16.mxu0 0
      %1748 = vmatpush1.bf16.msra.mxu0 %v1724
      %1749 = vmatprep.subr.bf16.mxu0 0
      %1750 = vmatpush1.bf16.msra.mxu0 0
      %1751 = vmatprep.subr.bf16.mxu0 0
      %1752 = vmatpush1.bf16.msra.mxu0 0
      %1753 = vmatprep.subr.bf16.mxu0 0
      %1754 = vmatpush1.bf16.msra.mxu0 0
      %1755 = vmatprep.subr.bf16.mxu0 0
      %1756 = vmatpush1.bf16.msra.mxu0 0
      %1757 = vmatprep.subr.bf16.mxu0 0
      %1758 = vmatpush1.bf16.msra.mxu0 0
      %1759 = vmatprep.subr.bf16.mxu0 0
      %1760 = vmatpush1.bf16.msra.mxu0 0
      %1761 = vmatprep.subr.bf16.mxu0 0
      %1762 = vmatpush1.bf16.msra.mxu0 0
      %1763 = vmatprep.subr.bf16.mxu0 0
      %1764 = vmatpush1.bf16.msra.mxu0 0
      %1765 = vmatprep.mubr.bf16.mxu0 0
      %1766 = vmatmul.mubr.bf16.gmra.mrb[0].mxu0 %v1666
      %v1767 = vpop.f32.mrb[0].mxu0
      %v1768 = vadd.f32 0.0, %v1767
      %v1769 = vpop.f32.mrb[0].mxu0
      %v1770 = vpop.f32.mrb[0].mxu0
      %v1771 = vadd.f32 0.0, %v1770
      %v1772 = vpop.f32.mrb[0].mxu0
      %1773 = vmatprep.mubr.bf16.mxu0 0
      %1774 = vmatmul.mubr.bf16.gmra.mrb[0].mxu0 %v1667
      %v1775 = vpop.f32.mrb[0].mxu0
      %v1776 = vadd.f32 0.0, %v1775
      %v1777 = vpop.f32.mrb[0].mxu0
      %v1778 = vpop.f32.mrb[0].mxu0
      %v1779 = vadd.f32 0.0, %v1778
      %v1780 = vpop.f32.mrb[0].mxu0
      %1781 = vdwg.mxu0
      %v1782 = vadd.f32 %v1658, %v1768
      %v1783 = vadd.f32 %v1659, %v1771
      %v1784 = vadd.f32 %v1660, %v1776
      %v1785 = vadd.f32 %v1661, %v1779
      %v1786 = vld [vmem:[#allocation2 + $0x2a] sm:$0xff]
      %v1787 = vld [vmem:[#allocation2 + $0x32] sm:$0xff]
      %v1788 = vld [vmem:[#allocation2 + $0x3a] sm:$0xff]
      %v1789 = vld [vmem:[#allocation2 + $0x42] sm:$0x1f]
      %v1790 = vpack.c.bf16 %v1787, %v1786
      %v1791 = vpack.c.bf16 %v1789, %v1788
      %s1792 = scalar_lea.vmem %s3, 576
      %v1793 = vld [vmem:[%s1792] sm:$0xf]
      %v1794 = vld [vmem:[%s1792 + $0x4] sm:$0xf]
      %v1795 = vld [vmem:[%s1792 + $0x8] sm:$0xf]
      %v1796 = vld [vmem:[%s1792 + $0xc] sm:$0xf]
      %v1797 = vld [vmem:[%s1792 + $0x10] sm:$0xf]
      %v1798 = vld [vmem:[%s1792 + $0x14] sm:$0xf]
      %v1799 = vld [vmem:[%s1792 + $0x18] sm:$0xf]
      %v1800 = vld [vmem:[%s1792 + $0x1c] sm:$0xf]
      %v1801 = vld [vmem:[%s1792 + $0x20] sm:$0xf]
      %v1802 = vld [vmem:[%s1792 + $0x24] sm:$0xf]
      %v1803 = vld [vmem:[%s1792 + $0x28] sm:$0xf]
      %v1804 = vld [vmem:[%s1792 + $0x2c] sm:$0xf]
      %v1805 = vld [vmem:[%s1792 + $0x30] sm:$0xf]
      %v1806 = vld [vmem:[%s1792 + $0x34] sm:$0xf]
      %v1807 = vld [vmem:[%s1792 + $0x38] sm:$0xf]
      %v1808 = vld [vmem:[%s1792 + $0x3c] sm:$0xf]
      %v1825 = vunpack.c.l.b16 %v1793
      %v1826 = vunpack.c.l.b16 %v1794
      %v1827 = vunpack.c.l.b16 %v1795
      %v1828 = vunpack.c.l.b16 %v1796
      %v1829 = vunpack.c.l.b16 %v1797
      %v1830 = vunpack.c.l.b16 %v1798
      %v1831 = vunpack.c.l.b16 %v1799
      %v1832 = vunpack.c.l.b16 %v1800
      %v1833 = vunpack.c.l.b16 %v1801
      %v1834 = vunpack.c.l.b16 %v1802
      %v1835 = vunpack.c.l.b16 %v1803
      %v1836 = vunpack.c.l.b16 %v1804
      %v1837 = vunpack.c.l.b16 %v1805
      %v1838 = vunpack.c.l.b16 %v1806
      %v1839 = vunpack.c.l.b16 %v1807
      %v1840 = vunpack.c.l.b16 %v1808
      %v1841 = vpack.c.b16 %v1826, %v1825
      %v1842 = vpack.c.b16 %v1828, %v1827
      %v1843 = vpack.c.b16 %v1830, %v1829
      %v1844 = vpack.c.b16 %v1832, %v1831
      %v1845 = vpack.c.b16 %v1834, %v1833
      %v1846 = vpack.c.b16 %v1836, %v1835
      %v1847 = vpack.c.b16 %v1838, %v1837
      %v1848 = vpack.c.b16 %v1840, %v1839
      %1857 = vmatprep.subr.bf16.mxu0 0
      %1858 = vmatpush1.bf16.msra.mxu0 %v1841
      %1859 = vmatprep.subr.bf16.mxu0 0
      %1860 = vmatpush1.bf16.msra.mxu0 %v1842
      %1861 = vmatprep.subr.bf16.mxu0 0
      %1862 = vmatpush1.bf16.msra.mxu0 %v1843
      %1863 = vmatprep.subr.bf16.mxu0 0
      %1864 = vmatpush1.bf16.msra.mxu0 %v1844
      %1865 = vmatprep.subr.bf16.mxu0 0
      %1866 = vmatpush1.bf16.msra.mxu0 %v1845
      %1867 = vmatprep.subr.bf16.mxu0 0
      %1868 = vmatpush1.bf16.msra.mxu0 %v1846
      %1869 = vmatprep.subr.bf16.mxu0 0
      %1870 = vmatpush1.bf16.msra.mxu0 %v1847
      %1871 = vmatprep.subr.bf16.mxu0 0
      %1872 = vmatpush1.bf16.msra.mxu0 %v1848
      %1873 = vmatprep.subr.bf16.mxu0 0
      %1874 = vmatpush1.bf16.msra.mxu0 0
      %1875 = vmatprep.subr.bf16.mxu0 0
      %1876 = vmatpush1.bf16.msra.mxu0 0
      %1877 = vmatprep.subr.bf16.mxu0 0
      %1878 = vmatpush1.bf16.msra.mxu0 0
      %1879 = vmatprep.subr.bf16.mxu0 0
      %1880 = vmatpush1.bf16.msra.mxu0 0
      %1881 = vmatprep.subr.bf16.mxu0 0
      %1882 = vmatpush1.bf16.msra.mxu0 0
      %1883 = vmatprep.subr.bf16.mxu0 0
      %1884 = vmatpush1.bf16.msra.mxu0 0
      %1885 = vmatprep.subr.bf16.mxu0 0
      %1886 = vmatpush1.bf16.msra.mxu0 0
      %1887 = vmatprep.subr.bf16.mxu0 0
      %1888 = vmatpush1.bf16.msra.mxu0 0
      %1889 = vmatprep.mubr.bf16.mxu0 0
      %1890 = vmatmul.mubr.bf16.gmra.mrb[0].mxu0 %v1790
      %v1891 = vpop.f32.mrb[0].mxu0
      %v1892 = vadd.f32 0.0, %v1891
      %v1893 = vpop.f32.mrb[0].mxu0
      %v1894 = vpop.f32.mrb[0].mxu0
      %v1895 = vadd.f32 0.0, %v1894
      %v1896 = vpop.f32.mrb[0].mxu0
      %1897 = vmatprep.mubr.bf16.mxu0 0
      %1898 = vmatmul.mubr.bf16.gmra.mrb[0].mxu0 %v1791
      %v1899 = vpop.f32.mrb[0].mxu0
      %v1900 = vadd.f32 0.0, %v1899
      %v1901 = vpop.f32.mrb[0].mxu0
      %v1902 = vpop.f32.mrb[0].mxu0
      %v1903 = vadd.f32 0.0, %v1902
      %v1904 = vpop.f32.mrb[0].mxu0
      %1905 = vdwg.mxu0
      %v1906 = vadd.f32 %v1782, %v1892
      %v1907 = vadd.f32 %v1783, %v1895
      %v1908 = vadd.f32 %v1784, %v1900
      %v1909 = vadd.f32 %v1785, %v1903
      %v1910 = vld [vmem:[#allocation2 + $0x7] sm:$0xff]
      %v1911 = vld [vmem:[#allocation2 + $0xf] sm:$0xff]
      %v1912 = vld [vmem:[#allocation2 + $0x17] sm:$0xff]
      %v1913 = vld [vmem:[#allocation2 + $0x1f] sm:$0x1f]
      %v1914 = vpack.c.bf16 %v1911, %v1910
      %v1915 = vpack.c.bf16 %v1913, %v1912
      %s1916 = scalar_lea.vmem %s3, 640
      %v1917 = vld [vmem:[%s1916] sm:$0xf]
      %v1918 = vld [vmem:[%s1916 + $0x4] sm:$0xf]
      %v1919 = vld [vmem:[%s1916 + $0x8] sm:$0xf]
      %v1920 = vld [vmem:[%s1916 + $0xc] sm:$0xf]
      %v1921 = vld [vmem:[%s1916 + $0x10] sm:$0xf]
      %v1922 = vld [vmem:[%s1916 + $0x14] sm:$0xf]
      %v1923 = vld [vmem:[%s1916 + $0x18] sm:$0xf]
      %v1924 = vld [vmem:[%s1916 + $0x1c] sm:$0xf]
      %v1925 = vld [vmem:[%s1916 + $0x20] sm:$0xf]
      %v1926 = vld [vmem:[%s1916 + $0x24] sm:$0xf]
      %v1927 = vld [vmem:[%s1916 + $0x28] sm:$0xf]
      %v1928 = vld [vmem:[%s1916 + $0x2c] sm:$0xf]
      %v1929 = vld [vmem:[%s1916 + $0x30] sm:$0xf]
      %v1930 = vld [vmem:[%s1916 + $0x34] sm:$0xf]
      %v1931 = vld [vmem:[%s1916 + $0x38] sm:$0xf]
      %v1932 = vld [vmem:[%s1916 + $0x3c] sm:$0xf]
      %v1949 = vunpack.c.l.b16 %v1917
      %v1950 = vunpack.c.l.b16 %v1918
      %v1951 = vunpack.c.l.b16 %v1919
      %v1952 = vunpack.c.l.b16 %v1920
      %v1953 = vunpack.c.l.b16 %v1921
      %v1954 = vunpack.c.l.b16 %v1922
      %v1955 = vunpack.c.l.b16 %v1923
      %v1956 = vunpack.c.l.b16 %v1924
      %v1957 = vunpack.c.l.b16 %v1925
      %v1958 = vunpack.c.l.b16 %v1926
      %v1959 = vunpack.c.l.b16 %v1927
      %v1960 = vunpack.c.l.b16 %v1928
      %v1961 = vunpack.c.l.b16 %v1929
      %v1962 = vunpack.c.l.b16 %v1930
      %v1963 = vunpack.c.l.b16 %v1931
      %v1964 = vunpack.c.l.b16 %v1932
      %v1965 = vpack.c.b16 %v1950, %v1949
      %v1966 = vpack.c.b16 %v1952, %v1951
      %v1967 = vpack.c.b16 %v1954, %v1953
      %v1968 = vpack.c.b16 %v1956, %v1955
      %v1969 = vpack.c.b16 %v1958, %v1957
      %v1970 = vpack.c.b16 %v1960, %v1959
      %v1971 = vpack.c.b16 %v1962, %v1961
      %v1972 = vpack.c.b16 %v1964, %v1963
      %1981 = vmatprep.subr.bf16.mxu0 0
      %1982 = vmatpush1.bf16.msra.mxu0 %v1965
      %1983 = vmatprep.subr.bf16.mxu0 0
      %1984 = vmatpush1.bf16.msra.mxu0 %v1966
      %1985 = vmatprep.subr.bf16.mxu0 0
      %1986 = vmatpush1.bf16.msra.mxu0 %v1967
      %1987 = vmatprep.subr.bf16.mxu0 0
      %1988 = vmatpush1.bf16.msra.mxu0 %v1968
      %1989 = vmatprep.subr.bf16.mxu0 0
      %1990 = vmatpush1.bf16.msra.mxu0 %v1969
      %1991 = vmatprep.subr.bf16.mxu0 0
      %1992 = vmatpush1.bf16.msra.mxu0 %v1970
      %1993 = vmatprep.subr.bf16.mxu0 0
      %1994 = vmatpush1.bf16.msra.mxu0 %v1971
      %1995 = vmatprep.subr.bf16.mxu0 0
      %1996 = vmatpush1.bf16.msra.mxu0 %v1972
      %1997 = vmatprep.subr.bf16.mxu0 0
      %1998 = vmatpush1.bf16.msra.mxu0 0
      %1999 = vmatprep.subr.bf16.mxu0 0
      %2000 = vmatpush1.bf16.msra.mxu0 0
      %2001 = vmatprep.subr.bf16.mxu0 0
      %2002 = vmatpush1.bf16.msra.mxu0 0
      %2003 = vmatprep.subr.bf16.mxu0 0
      %2004 = vmatpush1.bf16.msra.mxu0 0
      %2005 = vmatprep.subr.bf16.mxu0 0
      %2006 = vmatpush1.bf16.msra.mxu0 0
      %2007 = vmatprep.subr.bf16.mxu0 0
      %2008 = vmatpush1.bf16.msra.mxu0 0
      %2009 = vmatprep.subr.bf16.mxu0 0
      %2010 = vmatpush1.bf16.msra.mxu0 0
      %2011 = vmatprep.subr.bf16.mxu0 0
      %2012 = vmatpush1.bf16.msra.mxu0 0
      %2013 = vmatprep.mubr.bf16.mxu0 0
      %2014 = vmatmul.mubr.bf16.gmra.mrb[0].mxu0 %v1914
      %v2015 = vpop.f32.mrb[0].mxu0
      %v2016 = vadd.f32 0.0, %v2015
      %v2017 = vpop.f32.mrb[0].mxu0
      %v2018 = vpop.f32.mrb[0].mxu0
      %v2019 = vadd.f32 0.0, %v2018
      %v2020 = vpop.f32.mrb[0].mxu0
      %2021 = vmatprep.mubr.bf16.mxu0 0
      %2022 = vmatmul.mubr.bf16.gmra.mrb[0].mxu0 %v1915
      %v2023 = vpop.f32.mrb[0].mxu0
      %v2024 = vadd.f32 0.0, %v2023
      %v2025 = vpop.f32.mrb[0].mxu0
      %v2026 = vpop.f32.mrb[0].mxu0
      %v2027 = vadd.f32 0.0, %v2026
      %v2028 = vpop.f32.mrb[0].mxu0
      %2029 = vdwg.mxu0
      %v2030 = vadd.f32 %v1906, %v2016
      %v2031 = vadd.f32 %v1907, %v2019
      %v2032 = vadd.f32 %v1908, %v2024
      %v2033 = vadd.f32 %v1909, %v2027
      %v2034 = vld [vmem:[#allocation2 + $0x2b] sm:$0xff]
      %v2035 = vld [vmem:[#allocation2 + $0x33] sm:$0xff]
      %v2036 = vld [vmem:[#allocation2 + $0x3b] sm:$0xff]
      %v2037 = vld [vmem:[#allocation2 + $0x43] sm:$0x1f]
      %v2038 = vpack.c.bf16 %v2035, %v2034
      %v2039 = vpack.c.bf16 %v2037, %v2036
      %s2040 = scalar_lea.vmem %s3, 704
      %v2041 = vld [vmem:[%s2040] sm:$0xf]
      %v2042 = vld [vmem:[%s2040 + $0x4] sm:$0xf]
      %v2043 = vld [vmem:[%s2040 + $0x8] sm:$0xf]
      %v2044 = vld [vmem:[%s2040 + $0xc] sm:$0xf]
      %v2045 = vld [vmem:[%s2040 + $0x10] sm:$0xf]
      %v2046 = vld [vmem:[%s2040 + $0x14] sm:$0xf]
      %v2047 = vld [vmem:[%s2040 + $0x18] sm:$0xf]
      %v2048 = vld [vmem:[%s2040 + $0x1c] sm:$0xf]
      %v2049 = vld [vmem:[%s2040 + $0x20] sm:$0xf]
      %v2050 = vld [vmem:[%s2040 + $0x24] sm:$0xf]
      %v2051 = vld [vmem:[%s2040 + $0x28] sm:$0xf]
      %v2052 = vld [vmem:[%s2040 + $0x2c] sm:$0xf]
      %v2053 = vld [vmem:[%s2040 + $0x30] sm:$0xf]
      %v2054 = vld [vmem:[%s2040 + $0x34] sm:$0xf]
      %v2055 = vld [vmem:[%s2040 + $0x38] sm:$0xf]
      %v2056 = vld [vmem:[%s2040 + $0x3c] sm:$0xf]
      %v2073 = vunpack.c.l.b16 %v2041
      %v2074 = vunpack.c.l.b16 %v2042
      %v2075 = vunpack.c.l.b16 %v2043
      %v2076 = vunpack.c.l.b16 %v2044
      %v2077 = vunpack.c.l.b16 %v2045
      %v2078 = vunpack.c.l.b16 %v2046
      %v2079 = vunpack.c.l.b16 %v2047
      %v2080 = vunpack.c.l.b16 %v2048
      %v2081 = vunpack.c.l.b16 %v2049
      %v2082 = vunpack.c.l.b16 %v2050
      %v2083 = vunpack.c.l.b16 %v2051
      %v2084 = vunpack.c.l.b16 %v2052
      %v2085 = vunpack.c.l.b16 %v2053
      %v2086 = vunpack.c.l.b16 %v2054
      %v2087 = vunpack.c.l.b16 %v2055
      %v2088 = vunpack.c.l.b16 %v2056
      %v2089 = vpack.c.b16 %v2074, %v2073
      %v2090 = vpack.c.b16 %v2076, %v2075
      %v2091 = vpack.c.b16 %v2078, %v2077
      %v2092 = vpack.c.b16 %v2080, %v2079
      %v2093 = vpack.c.b16 %v2082, %v2081
      %v2094 = vpack.c.b16 %v2084, %v2083
      %v2095 = vpack.c.b16 %v2086, %v2085
      %v2096 = vpack.c.b16 %v2088, %v2087
      %2105 = vmatprep.subr.bf16.mxu0 0
      %2106 = vmatpush1.bf16.msra.mxu0 %v2089
      %2107 = vmatprep.subr.bf16.mxu0 0
      %2108 = vmatpush1.bf16.msra.mxu0 %v2090
      %2109 = vmatprep.subr.bf16.mxu0 0
      %2110 = vmatpush1.bf16.msra.mxu0 %v2091
      %2111 = vmatprep.subr.bf16.mxu0 0
      %2112 = vmatpush1.bf16.msra.mxu0 %v2092
      %2113 = vmatprep.subr.bf16.mxu0 0
      %2114 = vmatpush1.bf16.msra.mxu0 %v2093
      %2115 = vmatprep.subr.bf16.mxu0 0
      %2116 = vmatpush1.bf16.msra.mxu0 %v2094
      %2117 = vmatprep.subr.bf16.mxu0 0
      %2118 = vmatpush1.bf16.msra.mxu0 %v2095
      %2119 = vmatprep.subr.bf16.mxu0 0
      %2120 = vmatpush1.bf16.msra.mxu0 %v2096
      %2121 = vmatprep.subr.bf16.mxu0 0
      %2122 = vmatpush1.bf16.msra.mxu0 0
      %2123 = vmatprep.subr.bf16.mxu0 0
      %2124 = vmatpush1.bf16.msra.mxu0 0
      %2125 = vmatprep.subr.bf16.mxu0 0
      %2126 = vmatpush1.bf16.msra.mxu0 0
      %2127 = vmatprep.subr.bf16.mxu0 0
      %2128 = vmatpush1.bf16.msra.mxu0 0
      %2129 = vmatprep.subr.bf16.mxu0 0
      %2130 = vmatpush1.bf16.msra.mxu0 0
      %2131 = vmatprep.subr.bf16.mxu0 0
      %2132 = vmatpush1.bf16.msra.mxu0 0
      %2133 = vmatprep.subr.bf16.mxu0 0
      %2134 = vmatpush1.bf16.msra.mxu0 0
      %2135 = vmatprep.subr.bf16.mxu0 0
      %2136 = vmatpush1.bf16.msra.mxu0 0
      %2137 = vmatprep.mubr.bf16.mxu0 0
      %2138 = vmatmul.mubr.bf16.gmra.mrb[0].mxu0 %v2038
      %v2139 = vpop.f32.mrb[0].mxu0
      %v2140 = vadd.f32 0.0, %v2139
      %v2141 = vpop.f32.mrb[0].mxu0
      %v2142 = vpop.f32.mrb[0].mxu0
      %v2143 = vadd.f32 0.0, %v2142
      %v2144 = vpop.f32.mrb[0].mxu0
      %2145 = vmatprep.mubr.bf16.mxu0 0
      %2146 = vmatmul.mubr.bf16.gmra.mrb[0].mxu0 %v2039
      %v2147 = vpop.f32.mrb[0].mxu0
      %v2148 = vadd.f32 0.0, %v2147
      %v2149 = vpop.f32.mrb[0].mxu0
      %v2150 = vpop.f32.mrb[0].mxu0
      %v2151 = vadd.f32 0.0, %v2150
      %v2152 = vpop.f32.mrb[0].mxu0
      %2153 = vdwg.mxu0
      %v2154 = vadd.f32 %v2030, %v2140
      %v2155 = vadd.f32 %v2031, %v2143
      %v2156 = vadd.f32 %v2032, %v2148
      %v2157 = vadd.f32 %v2033, %v2151
      %v2158 = vld [vmem:[#allocation2 + $0x4e] sm:$0xff]
      %v2159 = vld [vmem:[#allocation2 + $0x56] sm:$0xff]
      %v2160 = vld [vmem:[#allocation2 + $0x5e] sm:$0xff]
      %v2161 = vld [vmem:[#allocation2 + $0x66] sm:$0x1f]
      %v2162 = vpack.c.bf16 %v2159, %v2158
      %v2163 = vpack.c.bf16 %v2161, %v2160
      %s2164 = scalar_lea.vmem %s3, 768
      %v2165 = vld [vmem:[%s2164] sm:$0xf]
      %v2166 = vld [vmem:[%s2164 + $0x4] sm:$0xf]
      %v2167 = vld [vmem:[%s2164 + $0x8] sm:$0xf]
      %v2168 = vld [vmem:[%s2164 + $0xc] sm:$0xf]
      %v2169 = vld [vmem:[%s2164 + $0x10] sm:$0xf]
      %v2170 = vld [vmem:[%s2164 + $0x14] sm:$0xf]
      %v2171 = vld [vmem:[%s2164 + $0x18] sm:$0xf]
      %v2172 = vld [vmem:[%s2164 + $0x1c] sm:$0xf]
      %v2173 = vld [vmem:[%s2164 + $0x20] sm:$0xf]
      %v2174 = vld [vmem:[%s2164 + $0x24] sm:$0xf]
      %v2175 = vld [vmem:[%s2164 + $0x28] sm:$0xf]
      %v2176 = vld [vmem:[%s2164 + $0x2c] sm:$0xf]
      %v2177 = vld [vmem:[%s2164 + $0x30] sm:$0xf]
      %v2178 = vld [vmem:[%s2164 + $0x34] sm:$0xf]
      %v2179 = vld [vmem:[%s2164 + $0x38] sm:$0xf]
      %v2180 = vld [vmem:[%s2164 + $0x3c] sm:$0xf]
      %v2197 = vunpack.c.l.b16 %v2165
      %v2198 = vunpack.c.l.b16 %v2166
      %v2199 = vunpack.c.l.b16 %v2167
      %v2200 = vunpack.c.l.b16 %v2168
      %v2201 = vunpack.c.l.b16 %v2169
      %v2202 = vunpack.c.l.b16 %v2170
      %v2203 = vunpack.c.l.b16 %v2171
      %v2204 = vunpack.c.l.b16 %v2172
      %v2205 = vunpack.c.l.b16 %v2173
      %v2206 = vunpack.c.l.b16 %v2174
      %v2207 = vunpack.c.l.b16 %v2175
      %v2208 = vunpack.c.l.b16 %v2176
      %v2209 = vunpack.c.l.b16 %v2177
      %v2210 = vunpack.c.l.b16 %v2178
      %v2211 = vunpack.c.l.b16 %v2179
      %v2212 = vunpack.c.l.b16 %v2180
      %v2213 = vpack.c.b16 %v2198, %v2197
      %v2214 = vpack.c.b16 %v2200, %v2199
      %v2215 = vpack.c.b16 %v2202, %v2201
      %v2216 = vpack.c.b16 %v2204, %v2203
      %v2217 = vpack.c.b16 %v2206, %v2205
      %v2218 = vpack.c.b16 %v2208, %v2207
      %v2219 = vpack.c.b16 %v2210, %v2209
      %v2220 = vpack.c.b16 %v2212, %v2211
      %2229 = vmatprep.subr.bf16.mxu0 0
      %2230 = vmatpush1.bf16.msra.mxu0 %v2213
      %2231 = vmatprep.subr.bf16.mxu0 0
      %2232 = vmatpush1.bf16.msra.mxu0 %v2214
      %2233 = vmatprep.subr.bf16.mxu0 0
      %2234 = vmatpush1.bf16.msra.mxu0 %v2215
      %2235 = vmatprep.subr.bf16.mxu0 0
      %2236 = vmatpush1.bf16.msra.mxu0 %v2216
      %2237 = vmatprep.subr.bf16.mxu0 0
      %2238 = vmatpush1.bf16.msra.mxu0 %v2217
      %2239 = vmatprep.subr.bf16.mxu0 0
      %2240 = vmatpush1.bf16.msra.mxu0 %v2218
      %2241 = vmatprep.subr.bf16.mxu0 0
      %2242 = vmatpush1.bf16.msra.mxu0 %v2219
      %2243 = vmatprep.subr.bf16.mxu0 0
      %2244 = vmatpush1.bf16.msra.mxu0 %v2220
      %2245 = vmatprep.subr.bf16.mxu0 0
      %2246 = vmatpush1.bf16.msra.mxu0 0
      %2247 = vmatprep.subr.bf16.mxu0 0
      %2248 = vmatpush1.bf16.msra.mxu0 0
      %2249 = vmatprep.subr.bf16.mxu0 0
      %2250 = vmatpush1.bf16.msra.mxu0 0
      %2251 = vmatprep.subr.bf16.mxu0 0
      %2252 = vmatpush1.bf16.msra.mxu0 0
      %2253 = vmatprep.subr.bf16.mxu0 0
      %2254 = vmatpush1.bf16.msra.mxu0 0
      %2255 = vmatprep.subr.bf16.mxu0 0
      %2256 = vmatpush1.bf16.msra.mxu0 0
      %2257 = vmatprep.subr.bf16.mxu0 0
      %2258 = vmatpush1.bf16.msra.mxu0 0
      %2259 = vmatprep.subr.bf16.mxu0 0
      %2260 = vmatpush1.bf16.msra.mxu0 0
      %2261 = vmatprep.mubr.bf16.mxu0 0
      %2262 = vmatmul.mubr.bf16.gmra.mrb[0].mxu0 %v2162
      %v2263 = vpop.f32.mrb[0].mxu0
      %v2264 = vadd.f32 0.0, %v2263
      %v2265 = vpop.f32.mrb[0].mxu0
      %v2266 = vpop.f32.mrb[0].mxu0
      %v2267 = vadd.f32 0.0, %v2266
      %v2268 = vpop.f32.mrb[0].mxu0
      %2269 = vmatprep.mubr.bf16.mxu0 0
      %2270 = vmatmul.mubr.bf16.gmra.mrb[0].mxu0 %v2163
      %v2271 = vpop.f32.mrb[0].mxu0
      %v2272 = vadd.f32 0.0, %v2271
      %v2273 = vpop.f32.mrb[0].mxu0
      %v2274 = vpop.f32.mrb[0].mxu0
      %v2275 = vadd.f32 0.0, %v2274
      %v2276 = vpop.f32.mrb[0].mxu0
      %2277 = vdwg.mxu0
      %v2278 = vadd.f32 %v2154, %v2264
      %v2279 = vadd.f32 %v2155, %v2267
      %v2280 = vadd.f32 %v2156, %v2272
      %v2281 = vadd.f32 %v2157, %v2275
      %v2282 = vld [vmem:[#allocation2 + $0x72] sm:$0xff]
      %v2283 = vld [vmem:[#allocation2 + $0x7a] sm:$0xff]
      %v2284 = vld [vmem:[#allocation2 + $0x82] sm:$0xff]
      %v2285 = vld [vmem:[#allocation2 + $0x8a] sm:$0x1f]
      %v2286 = vpack.c.bf16 %v2283, %v2282
      %v2287 = vpack.c.bf16 %v2285, %v2284
      %s2288 = scalar_lea.vmem %s3, 832
      %v2289 = vld [vmem:[%s2288] sm:$0xf]
      %v2290 = vld [vmem:[%s2288 + $0x4] sm:$0xf]
      %v2291 = vld [vmem:[%s2288 + $0x8] sm:$0xf]
      %v2292 = vld [vmem:[%s2288 + $0xc] sm:$0xf]
      %v2293 = vld [vmem:[%s2288 + $0x10] sm:$0xf]
      %v2294 = vld [vmem:[%s2288 + $0x14] sm:$0xf]
      %v2295 = vld [vmem:[%s2288 + $0x18] sm:$0xf]
      %v2296 = vld [vmem:[%s2288 + $0x1c] sm:$0xf]
      %v2297 = vld [vmem:[%s2288 + $0x20] sm:$0xf]
      %v2298 = vld [vmem:[%s2288 + $0x24] sm:$0xf]
      %v2299 = vld [vmem:[%s2288 + $0x28] sm:$0xf]
      %v2300 = vld [vmem:[%s2288 + $0x2c] sm:$0xf]
      %v2301 = vld [vmem:[%s2288 + $0x30] sm:$0xf]
      %v2302 = vld [vmem:[%s2288 + $0x34] sm:$0xf]
      %v2303 = vld [vmem:[%s2288 + $0x38] sm:$0xf]
      %v2304 = vld [vmem:[%s2288 + $0x3c] sm:$0xf]
      %v2321 = vunpack.c.l.b16 %v2289
      %v2322 = vunpack.c.l.b16 %v2290
      %v2323 = vunpack.c.l.b16 %v2291
      %v2324 = vunpack.c.l.b16 %v2292
      %v2325 = vunpack.c.l.b16 %v2293
      %v2326 = vunpack.c.l.b16 %v2294
      %v2327 = vunpack.c.l.b16 %v2295
      %v2328 = vunpack.c.l.b16 %v2296
      %v2329 = vunpack.c.l.b16 %v2297
      %v2330 = vunpack.c.l.b16 %v2298
      %v2331 = vunpack.c.l.b16 %v2299
      %v2332 = vunpack.c.l.b16 %v2300
      %v2333 = vunpack.c.l.b16 %v2301
      %v2334 = vunpack.c.l.b16 %v2302
      %v2335 = vunpack.c.l.b16 %v2303
      %v2336 = vunpack.c.l.b16 %v2304
      %v2337 = vpack.c.b16 %v2322, %v2321
      %v2338 = vpack.c.b16 %v2324, %v2323
      %v2339 = vpack.c.b16 %v2326, %v2325
      %v2340 = vpack.c.b16 %v2328, %v2327
      %v2341 = vpack.c.b16 %v2330, %v2329
      %v2342 = vpack.c.b16 %v2332, %v2331
      %v2343 = vpack.c.b16 %v2334, %v2333
      %v2344 = vpack.c.b16 %v2336, %v2335
      %2353 = vmatprep.subr.bf16.mxu0 0
      %2354 = vmatpush1.bf16.msra.mxu0 %v2337
      %2355 = vmatprep.subr.bf16.mxu0 0
      %2356 = vmatpush1.bf16.msra.mxu0 %v2338
      %2357 = vmatprep.subr.bf16.mxu0 0
      %2358 = vmatpush1.bf16.msra.mxu0 %v2339
      %2359 = vmatprep.subr.bf16.mxu0 0
      %2360 = vmatpush1.bf16.msra.mxu0 %v2340
      %2361 = vmatprep.subr.bf16.mxu0 0
      %2362 = vmatpush1.bf16.msra.mxu0 %v2341
      %2363 = vmatprep.subr.bf16.mxu0 0
      %2364 = vmatpush1.bf16.msra.mxu0 %v2342
      %2365 = vmatprep.subr.bf16.mxu0 0
      %2366 = vmatpush1.bf16.msra.mxu0 %v2343
      %2367 = vmatprep.subr.bf16.mxu0 0
      %2368 = vmatpush1.bf16.msra.mxu0 %v2344
      %2369 = vmatprep.subr.bf16.mxu0 0
      %2370 = vmatpush1.bf16.msra.mxu0 0
      %2371 = vmatprep.subr.bf16.mxu0 0
      %2372 = vmatpush1.bf16.msra.mxu0 0
      %2373 = vmatprep.subr.bf16.mxu0 0
      %2374 = vmatpush1.bf16.msra.mxu0 0
      %2375 = vmatprep.subr.bf16.mxu0 0
      %2376 = vmatpush1.bf16.msra.mxu0 0
      %2377 = vmatprep.subr.bf16.mxu0 0
      %2378 = vmatpush1.bf16.msra.mxu0 0
      %2379 = vmatprep.subr.bf16.mxu0 0
      %2380 = vmatpush1.bf16.msra.mxu0 0
      %2381 = vmatprep.subr.bf16.mxu0 0
      %2382 = vmatpush1.bf16.msra.mxu0 0
      %2383 = vmatprep.subr.bf16.mxu0 0
      %2384 = vmatpush1.bf16.msra.mxu0 0
      %2385 = vmatprep.mubr.bf16.mxu0 0
      %2386 = vmatmul.mubr.bf16.gmra.mrb[0].mxu0 %v2286
      %v2387 = vpop.f32.mrb[0].mxu0
      %v2388 = vadd.f32 0.0, %v2387
      %v2389 = vpop.f32.mrb[0].mxu0
      %v2390 = vpop.f32.mrb[0].mxu0
      %v2391 = vadd.f32 0.0, %v2390
      %v2392 = vpop.f32.mrb[0].mxu0
      %2393 = vmatprep.mubr.bf16.mxu0 0
      %2394 = vmatmul.mubr.bf16.gmra.mrb[0].mxu0 %v2287
      %v2395 = vpop.f32.mrb[0].mxu0
      %v2396 = vadd.f32 0.0, %v2395
      %v2397 = vpop.f32.mrb[0].mxu0
      %v2398 = vpop.f32.mrb[0].mxu0
      %v2399 = vadd.f32 0.0, %v2398
      %v2400 = vpop.f32.mrb[0].mxu0
      %2401 = vdwg.mxu0
      %v2402 = vadd.f32 %v2278, %v2388
      %v2403 = vadd.f32 %v2279, %v2391
      %v2404 = vadd.f32 %v2280, %v2396
      %v2405 = vadd.f32 %v2281, %v2399
      %v2406 = vld [vmem:[#allocation2 + $0x4f] sm:$0xff]
      %v2407 = vld [vmem:[#allocation2 + $0x57] sm:$0xff]
      %v2408 = vld [vmem:[#allocation2 + $0x5f] sm:$0xff]
      %v2409 = vld [vmem:[#allocation2 + $0x67] sm:$0x1f]
      %v2410 = vpack.c.bf16 %v2407, %v2406
      %v2411 = vpack.c.bf16 %v2409, %v2408
      %s2412 = scalar_lea.vmem %s3, 896
      %v2413 = vld [vmem:[%s2412] sm:$0xf]
      %v2414 = vld [vmem:[%s2412 + $0x4] sm:$0xf]
      %v2415 = vld [vmem:[%s2412 + $0x8] sm:$0xf]
      %v2416 = vld [vmem:[%s2412 + $0xc] sm:$0xf]
      %v2417 = vld [vmem:[%s2412 + $0x10] sm:$0xf]
      %v2418 = vld [vmem:[%s2412 + $0x14] sm:$0xf]
      %v2419 = vld [vmem:[%s2412 + $0x18] sm:$0xf]
      %v2420 = vld [vmem:[%s2412 + $0x1c] sm:$0xf]
      %v2421 = vld [vmem:[%s2412 + $0x20] sm:$0xf]
      %v2422 = vld [vmem:[%s2412 + $0x24] sm:$0xf]
      %v2423 = vld [vmem:[%s2412 + $0x28] sm:$0xf]
      %v2424 = vld [vmem:[%s2412 + $0x2c] sm:$0xf]
      %v2425 = vld [vmem:[%s2412 + $0x30] sm:$0xf]
      %v2426 = vld [vmem:[%s2412 + $0x34] sm:$0xf]
      %v2427 = vld [vmem:[%s2412 + $0x38] sm:$0xf]
      %v2428 = vld [vmem:[%s2412 + $0x3c] sm:$0xf]
      %v2445 = vunpack.c.l.b16 %v2413
      %v2446 = vunpack.c.l.b16 %v2414
      %v2447 = vunpack.c.l.b16 %v2415
      %v2448 = vunpack.c.l.b16 %v2416
      %v2449 = vunpack.c.l.b16 %v2417
      %v2450 = vunpack.c.l.b16 %v2418
      %v2451 = vunpack.c.l.b16 %v2419
      %v2452 = vunpack.c.l.b16 %v2420
      %v2453 = vunpack.c.l.b16 %v2421
      %v2454 = vunpack.c.l.b16 %v2422
      %v2455 = vunpack.c.l.b16 %v2423
      %v2456 = vunpack.c.l.b16 %v2424
      %v2457 = vunpack.c.l.b16 %v2425
      %v2458 = vunpack.c.l.b16 %v2426
      %v2459 = vunpack.c.l.b16 %v2427
      %v2460 = vunpack.c.l.b16 %v2428
      %v2461 = vpack.c.b16 %v2446, %v2445
      %v2462 = vpack.c.b16 %v2448, %v2447
      %v2463 = vpack.c.b16 %v2450, %v2449
      %v2464 = vpack.c.b16 %v2452, %v2451
      %v2465 = vpack.c.b16 %v2454, %v2453
      %v2466 = vpack.c.b16 %v2456, %v2455
      %v2467 = vpack.c.b16 %v2458, %v2457
      %v2468 = vpack.c.b16 %v2460, %v2459
      %2477 = vmatprep.subr.bf16.mxu0 0
      %2478 = vmatpush1.bf16.msra.mxu0 %v2461
      %2479 = vmatprep.subr.bf16.mxu0 0
      %2480 = vmatpush1.bf16.msra.mxu0 %v2462
      %2481 = vmatprep.subr.bf16.mxu0 0
      %2482 = vmatpush1.bf16.msra.mxu0 %v2463
      %2483 = vmatprep.subr.bf16.mxu0 0
      %2484 = vmatpush1.bf16.msra.mxu0 %v2464
      %2485 = vmatprep.subr.bf16.mxu0 0
      %2486 = vmatpush1.bf16.msra.mxu0 %v2465
      %2487 = vmatprep.subr.bf16.mxu0 0
      %2488 = vmatpush1.bf16.msra.mxu0 %v2466
      %2489 = vmatprep.subr.bf16.mxu0 0
      %2490 = vmatpush1.bf16.msra.mxu0 %v2467
      %2491 = vmatprep.subr.bf16.mxu0 0
      %2492 = vmatpush1.bf16.msra.mxu0 %v2468
      %2493 = vmatprep.subr.bf16.mxu0 0
      %2494 = vmatpush1.bf16.msra.mxu0 0
      %2495 = vmatprep.subr.bf16.mxu0 0
      %2496 = vmatpush1.bf16.msra.mxu0 0
      %2497 = vmatprep.subr.bf16.mxu0 0
      %2498 = vmatpush1.bf16.msra.mxu0 0
      %2499 = vmatprep.subr.bf16.mxu0 0
      %2500 = vmatpush1.bf16.msra.mxu0 0
      %2501 = vmatprep.subr.bf16.mxu0 0
      %2502 = vmatpush1.bf16.msra.mxu0 0
      %2503 = vmatprep.subr.bf16.mxu0 0
      %2504 = vmatpush1.bf16.msra.mxu0 0
      %2505 = vmatprep.subr.bf16.mxu0 0
      %2506 = vmatpush1.bf16.msra.mxu0 0
      %2507 = vmatprep.subr.bf16.mxu0 0
      %2508 = vmatpush1.bf16.msra.mxu0 0
      %2509 = vmatprep.mubr.bf16.mxu0 0
      %2510 = vmatmul.mubr.bf16.gmra.mrb[0].mxu0 %v2410
      %v2511 = vpop.f32.mrb[0].mxu0
      %v2512 = vadd.f32 0.0, %v2511
      %v2513 = vpop.f32.mrb[0].mxu0
      %v2514 = vpop.f32.mrb[0].mxu0
      %v2515 = vadd.f32 0.0, %v2514
      %v2516 = vpop.f32.mrb[0].mxu0
      %2517 = vmatprep.mubr.bf16.mxu0 0
      %2518 = vmatmul.mubr.bf16.gmra.mrb[0].mxu0 %v2411
      %v2519 = vpop.f32.mrb[0].mxu0
      %v2520 = vadd.f32 0.0, %v2519
      %v2521 = vpop.f32.mrb[0].mxu0
      %v2522 = vpop.f32.mrb[0].mxu0
      %v2523 = vadd.f32 0.0, %v2522
      %v2524 = vpop.f32.mrb[0].mxu0
      %2525 = vdwg.mxu0
      %v2526 = vadd.f32 %v2402, %v2512
      %v2527 = vadd.f32 %v2403, %v2515
      %v2528 = vadd.f32 %v2404, %v2520
      %v2529 = vadd.f32 %v2405, %v2523
      %v2530 = vld [vmem:[#allocation2 + $0x73] sm:$0xff]
      %v2531 = vld [vmem:[#allocation2 + $0x7b] sm:$0xff]
      %v2532 = vld [vmem:[#allocation2 + $0x83] sm:$0xff]
      %v2533 = vld [vmem:[#allocation2 + $0x8b] sm:$0x1f]
      %v2534 = vpack.c.bf16 %v2531, %v2530
      %v2535 = vpack.c.bf16 %v2533, %v2532
      %s2536 = scalar_lea.vmem %s3, 960
      %v2537 = vld [vmem:[%s2536] sm:$0xf]
      %v2538 = vld [vmem:[%s2536 + $0x4] sm:$0xf]
      %v2539 = vld [vmem:[%s2536 + $0x8] sm:$0xf]
      %v2540 = vld [vmem:[%s2536 + $0xc] sm:$0xf]
      %v2541 = vld [vmem:[%s2536 + $0x10] sm:$0xf]
      %v2542 = vld [vmem:[%s2536 + $0x14] sm:$0xf]
      %v2543 = vld [vmem:[%s2536 + $0x18] sm:$0xf]
      %v2544 = vld [vmem:[%s2536 + $0x1c] sm:$0xf]
      %v2545 = vld [vmem:[%s2536 + $0x20] sm:$0xf]
      %v2546 = vld [vmem:[%s2536 + $0x24] sm:$0xf]
      %v2547 = vld [vmem:[%s2536 + $0x28] sm:$0xf]
      %v2548 = vld [vmem:[%s2536 + $0x2c] sm:$0xf]
      %v2549 = vld [vmem:[%s2536 + $0x30] sm:$0xf]
      %v2550 = vld [vmem:[%s2536 + $0x34] sm:$0xf]
      %v2551 = vld [vmem:[%s2536 + $0x38] sm:$0xf]
      %v2552 = vld [vmem:[%s2536 + $0x3c] sm:$0xf]
      %v2569 = vunpack.c.l.b16 %v2537
      %v2570 = vunpack.c.l.b16 %v2538
      %v2571 = vunpack.c.l.b16 %v2539
      %v2572 = vunpack.c.l.b16 %v2540
      %v2573 = vunpack.c.l.b16 %v2541
      %v2574 = vunpack.c.l.b16 %v2542
      %v2575 = vunpack.c.l.b16 %v2543
      %v2576 = vunpack.c.l.b16 %v2544
      %v2577 = vunpack.c.l.b16 %v2545
      %v2578 = vunpack.c.l.b16 %v2546
      %v2579 = vunpack.c.l.b16 %v2547
      %v2580 = vunpack.c.l.b16 %v2548
      %v2581 = vunpack.c.l.b16 %v2549
      %v2582 = vunpack.c.l.b16 %v2550
      %v2583 = vunpack.c.l.b16 %v2551
      %v2584 = vunpack.c.l.b16 %v2552
      %v2585 = vpack.c.b16 %v2570, %v2569
      %v2586 = vpack.c.b16 %v2572, %v2571
      %v2587 = vpack.c.b16 %v2574, %v2573
      %v2588 = vpack.c.b16 %v2576, %v2575
      %v2589 = vpack.c.b16 %v2578, %v2577
      %v2590 = vpack.c.b16 %v2580, %v2579
      %v2591 = vpack.c.b16 %v2582, %v2581
      %v2592 = vpack.c.b16 %v2584, %v2583
      %2601 = vmatprep.subr.bf16.mxu0 0
      %2602 = vmatpush1.bf16.msra.mxu0 %v2585
      %2603 = vmatprep.subr.bf16.mxu0 0
      %2604 = vmatpush1.bf16.msra.mxu0 %v2586
      %2605 = vmatprep.subr.bf16.mxu0 0
      %2606 = vmatpush1.bf16.msra.mxu0 %v2587
      %2607 = vmatprep.subr.bf16.mxu0 0
      %2608 = vmatpush1.bf16.msra.mxu0 %v2588
      %2609 = vmatprep.subr.bf16.mxu0 0
      %2610 = vmatpush1.bf16.msra.mxu0 %v2589
      %2611 = vmatprep.subr.bf16.mxu0 0
      %2612 = vmatpush1.bf16.msra.mxu0 %v2590
      %2613 = vmatprep.subr.bf16.mxu0 0
      %2614 = vmatpush1.bf16.msra.mxu0 %v2591
      %2615 = vmatprep.subr.bf16.mxu0 0
      %2616 = vmatpush1.bf16.msra.mxu0 %v2592
      %2617 = vmatprep.subr.bf16.mxu0 0
      %2618 = vmatpush1.bf16.msra.mxu0 0
      %2619 = vmatprep.subr.bf16.mxu0 0
      %2620 = vmatpush1.bf16.msra.mxu0 0
      %2621 = vmatprep.subr.bf16.mxu0 0
      %2622 = vmatpush1.bf16.msra.mxu0 0
      %2623 = vmatprep.subr.bf16.mxu0 0
      %2624 = vmatpush1.bf16.msra.mxu0 0
      %2625 = vmatprep.subr.bf16.mxu0 0
      %2626 = vmatpush1.bf16.msra.mxu0 0
      %2627 = vmatprep.subr.bf16.mxu0 0
      %2628 = vmatpush1.bf16.msra.mxu0 0
      %2629 = vmatprep.subr.bf16.mxu0 0
      %2630 = vmatpush1.bf16.msra.mxu0 0
      %2631 = vmatprep.subr.bf16.mxu0 0
      %2632 = vmatpush1.bf16.msra.mxu0 0
      %2633 = vmatprep.mubr.bf16.mxu0 0
      %2634 = vmatmul.mubr.bf16.gmra.mrb[0].mxu0 %v2534
      %v2635 = vpop.f32.mrb[0].mxu0
      %v2636 = vadd.f32 0.0, %v2635
      %v2637 = vpop.f32.mrb[0].mxu0
      %v2638 = vpop.f32.mrb[0].mxu0
      %v2639 = vadd.f32 0.0, %v2638
      %v2640 = vpop.f32.mrb[0].mxu0
      %2641 = vmatprep.mubr.bf16.mxu0 0
      %2642 = vmatmul.mubr.bf16.gmra.mrb[0].mxu0 %v2535
      %v2643 = vpop.f32.mrb[0].mxu0
      %v2644 = vadd.f32 0.0, %v2643
      %v2645 = vpop.f32.mrb[0].mxu0
      %v2646 = vpop.f32.mrb[0].mxu0
      %v2647 = vadd.f32 0.0, %v2646
      %v2648 = vpop.f32.mrb[0].mxu0
      %2649 = vdwg.mxu0
      %v2650 = vadd.f32 %v2526, %v2636
      %v2651 = vadd.f32 %v2527, %v2639
      %v2652 = vadd.f32 %v2528, %v2644
      %v2653 = vadd.f32 %v2529, %v2647
      %v2654 = vmax.f32 %v2650, 0.0
      %v2655 = vmax.f32 %v2651, 0.0
      %v2656 = vmax.f32 %v2652, 0.0
      %v2657 = vmax.f32 %v2653, 0.0
      %vm2658 = vcmask 1044480
      %v2659 = vsel %vm2658, %v2657, 0.0
      %2660 = vst [vmem:[#allocation3] sm:$0xff] %v2654
      %2661 = vst [vmem:[#allocation3 + $0x8] sm:$0xff] %v2655
      %2662 = vst [vmem:[#allocation3 + $0x10] sm:$0xff] %v2656
      %2663 = vst [vmem:[#allocation3 + $0x18] sm:$0xff] %v2659
      %v2664 = vld [vmem:[%s6] sm:$0x1]
      %v2666 = vlaneseq
      %v2667 = vshrl.u32 %v2666, 7
      %v2668 = vsub.s32 0, %v2667
      %v2669 = vrot.slane %v2664, %v2668
      %v2671 = vld [vmem:[#allocation3] sm:$0xff]
      %v2672 = vld [vmem:[#allocation3 + $0x8] sm:$0x7f]
      %v2673 = vpack.c.bf16 %v2672, %v2671
      %v2674 = vld [vmem:[%s5] sm:$0xf]
      %v2675 = vld [vmem:[%s5 + $0x4] sm:$0xf]
      %v2676 = vld [vmem:[%s5 + $0x8] sm:$0xf]
      %v2677 = vld [vmem:[%s5 + $0xc] sm:$0xf]
      %v2678 = vld [vmem:[%s5 + $0x10] sm:$0xf]
      %v2679 = vld [vmem:[%s5 + $0x14] sm:$0xf]
      %v2680 = vld [vmem:[%s5 + $0x18] sm:$0xf]
      %v2681 = vld [vmem:[%s5 + $0x1c] sm:$0xf]
      %v2682 = vld [vmem:[%s5 + $0x20] sm:$0xf]
      %v2683 = vld [vmem:[%s5 + $0x24] sm:$0xf]
      %v2684 = vld [vmem:[%s5 + $0x28] sm:$0xf]
      %v2685 = vld [vmem:[%s5 + $0x2c] sm:$0xf]
      %v2686 = vld [vmem:[%s5 + $0x30] sm:$0xf]
      %v2687 = vld [vmem:[%s5 + $0x34] sm:$0xf]
      %v2688 = vld [vmem:[%s5 + $0x38] sm:$0xf]
      %v2689 = vld [vmem:[%s5 + $0x3c] sm:$0xf]
      %v2706 = vunpack.c.l.b16 %v2674
      %v2707 = vunpack.c.l.b16 %v2675
      %v2708 = vunpack.c.l.b16 %v2676
      %v2709 = vunpack.c.l.b16 %v2677
      %v2710 = vunpack.c.l.b16 %v2678
      %v2711 = vunpack.c.l.b16 %v2679
      %v2712 = vunpack.c.l.b16 %v2680
      %v2713 = vunpack.c.l.b16 %v2681
      %v2714 = vunpack.c.l.b16 %v2682
      %v2715 = vunpack.c.l.b16 %v2683
      %v2716 = vunpack.c.l.b16 %v2684
      %v2717 = vunpack.c.l.b16 %v2685
      %v2718 = vunpack.c.l.b16 %v2686
      %v2719 = vunpack.c.l.b16 %v2687
      %v2720 = vunpack.c.l.b16 %v2688
      %v2721 = vunpack.c.l.b16 %v2689
      %v2722 = vpack.c.b16 %v2707, %v2706
      %v2723 = vpack.c.b16 %v2709, %v2708
      %v2724 = vpack.c.b16 %v2711, %v2710
      %v2725 = vpack.c.b16 %v2713, %v2712
      %v2726 = vpack.c.b16 %v2715, %v2714
      %v2727 = vpack.c.b16 %v2717, %v2716
      %v2728 = vpack.c.b16 %v2719, %v2718
      %v2729 = vpack.c.b16 %v2721, %v2720
      %2738 = vmatprep.subr.bf16.mxu0 0
      %2739 = vmatpush1.bf16.msra.mxu0 %v2722
      %2740 = vmatprep.subr.bf16.mxu0 0
      %2741 = vmatpush1.bf16.msra.mxu0 %v2723
      %2742 = vmatprep.subr.bf16.mxu0 0
      %2743 = vmatpush1.bf16.msra.mxu0 %v2724
      %2744 = vmatprep.subr.bf16.mxu0 0
      %2745 = vmatpush1.bf16.msra.mxu0 %v2725
      %2746 = vmatprep.subr.bf16.mxu0 0
      %2747 = vmatpush1.bf16.msra.mxu0 %v2726
      %2748 = vmatprep.subr.bf16.mxu0 0
      %2749 = vmatpush1.bf16.msra.mxu0 %v2727
      %2750 = vmatprep.subr.bf16.mxu0 0
      %2751 = vmatpush1.bf16.msra.mxu0 %v2728
      %2752 = vmatprep.subr.bf16.mxu0 0
      %2753 = vmatpush1.bf16.msra.mxu0 %v2729
      %2754 = vmatprep.subr.bf16.mxu0 0
      %2755 = vmatpush1.bf16.msra.mxu0 0
      %2756 = vmatprep.subr.bf16.mxu0 0
      %2757 = vmatpush1.bf16.msra.mxu0 0
      %2758 = vmatprep.subr.bf16.mxu0 0
      %2759 = vmatpush1.bf16.msra.mxu0 0
      %2760 = vmatprep.subr.bf16.mxu0 0
      %2761 = vmatpush1.bf16.msra.mxu0 0
      %2762 = vmatprep.subr.bf16.mxu0 0
      %2763 = vmatpush1.bf16.msra.mxu0 0
      %2764 = vmatprep.subr.bf16.mxu0 0
      %2765 = vmatpush1.bf16.msra.mxu0 0
      %2766 = vmatprep.subr.bf16.mxu0 0
      %2767 = vmatpush1.bf16.msra.mxu0 0
      %2768 = vmatprep.subr.bf16.mxu0 0
      %2769 = vmatpush1.bf16.msra.mxu0 0
      %2770 = vmatprep.mubr.bf16.mxu0 0
      %2771 = vmatmul.mubr.bf16.gmra.mrb[0].mxu0 %v2673
      %v2772 = vpop.f32.mrb[0].mxu0
      %v2773 = vadd.f32 0.0, %v2772
      %v2774 = vpop.f32.mrb[0].mxu0
      %v2775 = vpop.f32.mrb[0].mxu0
      %v2776 = vadd.f32 0.0, %v2775
      %v2777 = vpop.f32.mrb[0].mxu0
      %2778 = vdwg.mxu0
      %v2779 = vadd.f32 %v2669, %v2773
      %v2780 = vadd.f32 %v2669, %v2776
      %v2781 = vld [vmem:[#allocation3 + $0x1] sm:$0xff]
      %v2782 = vld [vmem:[#allocation3 + $0x9] sm:$0x7f]
      %v2783 = vpack.c.bf16 %v2782, %v2781
      %s2784 = scalar_lea.vmem %s5, 64
      %v2785 = vld [vmem:[%s2784] sm:$0xf]
      %v2786 = vld [vmem:[%s2784 + $0x4] sm:$0xf]
      %v2787 = vld [vmem:[%s2784 + $0x8] sm:$0xf]
      %v2788 = vld [vmem:[%s2784 + $0xc] sm:$0xf]
      %v2789 = vld [vmem:[%s2784 + $0x10] sm:$0xf]
      %v2790 = vld [vmem:[%s2784 + $0x14] sm:$0xf]
      %v2791 = vld [vmem:[%s2784 + $0x18] sm:$0xf]
      %v2792 = vld [vmem:[%s2784 + $0x1c] sm:$0xf]
      %v2793 = vld [vmem:[%s2784 + $0x20] sm:$0xf]
      %v2794 = vld [vmem:[%s2784 + $0x24] sm:$0xf]
      %v2795 = vld [vmem:[%s2784 + $0x28] sm:$0xf]
      %v2796 = vld [vmem:[%s2784 + $0x2c] sm:$0xf]
      %v2797 = vld [vmem:[%s2784 + $0x30] sm:$0xf]
      %v2798 = vld [vmem:[%s2784 + $0x34] sm:$0xf]
      %v2799 = vld [vmem:[%s2784 + $0x38] sm:$0xf]
      %v2800 = vld [vmem:[%s2784 + $0x3c] sm:$0xf]
      %v2817 = vunpack.c.l.b16 %v2785
      %v2818 = vunpack.c.l.b16 %v2786
      %v2819 = vunpack.c.l.b16 %v2787
      %v2820 = vunpack.c.l.b16 %v2788
      %v2821 = vunpack.c.l.b16 %v2789
      %v2822 = vunpack.c.l.b16 %v2790
      %v2823 = vunpack.c.l.b16 %v2791
      %v2824 = vunpack.c.l.b16 %v2792
      %v2825 = vunpack.c.l.b16 %v2793
      %v2826 = vunpack.c.l.b16 %v2794
      %v2827 = vunpack.c.l.b16 %v2795
      %v2828 = vunpack.c.l.b16 %v2796
      %v2829 = vunpack.c.l.b16 %v2797
      %v2830 = vunpack.c.l.b16 %v2798
      %v2831 = vunpack.c.l.b16 %v2799
      %v2832 = vunpack.c.l.b16 %v2800
      %v2833 = vpack.c.b16 %v2818, %v2817
      %v2834 = vpack.c.b16 %v2820, %v2819
      %v2835 = vpack.c.b16 %v2822, %v2821
      %v2836 = vpack.c.b16 %v2824, %v2823
      %v2837 = vpack.c.b16 %v2826, %v2825
      %v2838 = vpack.c.b16 %v2828, %v2827
      %v2839 = vpack.c.b16 %v2830, %v2829
      %v2840 = vpack.c.b16 %v2832, %v2831
      %2849 = vmatprep.subr.bf16.mxu0 0
      %2850 = vmatpush1.bf16.msra.mxu0 %v2833
      %2851 = vmatprep.subr.bf16.mxu0 0
      %2852 = vmatpush1.bf16.msra.mxu0 %v2834
      %2853 = vmatprep.subr.bf16.mxu0 0
      %2854 = vmatpush1.bf16.msra.mxu0 %v2835
      %2855 = vmatprep.subr.bf16.mxu0 0
      %2856 = vmatpush1.bf16.msra.mxu0 %v2836
      %2857 = vmatprep.subr.bf16.mxu0 0
      %2858 = vmatpush1.bf16.msra.mxu0 %v2837
      %2859 = vmatprep.subr.bf16.mxu0 0
      %2860 = vmatpush1.bf16.msra.mxu0 %v2838
      %2861 = vmatprep.subr.bf16.mxu0 0
      %2862 = vmatpush1.bf16.msra.mxu0 %v2839
      %2863 = vmatprep.subr.bf16.mxu0 0
      %2864 = vmatpush1.bf16.msra.mxu0 %v2840
      %2865 = vmatprep.subr.bf16.mxu0 0
      %2866 = vmatpush1.bf16.msra.mxu0 0
      %2867 = vmatprep.subr.bf16.mxu0 0
      %2868 = vmatpush1.bf16.msra.mxu0 0
      %2869 = vmatprep.subr.bf16.mxu0 0
      %2870 = vmatpush1.bf16.msra.mxu0 0
      %2871 = vmatprep.subr.bf16.mxu0 0
      %2872 = vmatpush1.bf16.msra.mxu0 0
      %2873 = vmatprep.subr.bf16.mxu0 0
      %2874 = vmatpush1.bf16.msra.mxu0 0
      %2875 = vmatprep.subr.bf16.mxu0 0
      %2876 = vmatpush1.bf16.msra.mxu0 0
      %2877 = vmatprep.subr.bf16.mxu0 0
      %2878 = vmatpush1.bf16.msra.mxu0 0
      %2879 = vmatprep.subr.bf16.mxu0 0
      %2880 = vmatpush1.bf16.msra.mxu0 0
      %2881 = vmatprep.mubr.bf16.mxu0 0
      %2882 = vmatmul.mubr.bf16.gmra.mrb[0].mxu0 %v2783
      %v2883 = vpop.f32.mrb[0].mxu0
      %v2884 = vadd.f32 0.0, %v2883
      %v2885 = vpop.f32.mrb[0].mxu0
      %v2886 = vpop.f32.mrb[0].mxu0
      %v2887 = vadd.f32 0.0, %v2886
      %v2888 = vpop.f32.mrb[0].mxu0
      %2889 = vdwg.mxu0
      %v2890 = vadd.f32 %v2779, %v2884
      %v2891 = vadd.f32 %v2780, %v2887
      %v2892 = vld [vmem:[#allocation3 + $0x2] sm:$0xff]
      %v2893 = vld [vmem:[#allocation3 + $0xa] sm:$0x7f]
      %v2894 = vpack.c.bf16 %v2893, %v2892
      %s2895 = scalar_lea.vmem %s5, 128
      %v2896 = vld [vmem:[%s2895] sm:$0xf]
      %v2897 = vld [vmem:[%s2895 + $0x4] sm:$0xf]
      %v2898 = vld [vmem:[%s2895 + $0x8] sm:$0xf]
      %v2899 = vld [vmem:[%s2895 + $0xc] sm:$0xf]
      %v2900 = vld [vmem:[%s2895 + $0x10] sm:$0xf]
      %v2901 = vld [vmem:[%s2895 + $0x14] sm:$0xf]
      %v2902 = vld [vmem:[%s2895 + $0x18] sm:$0xf]
      %v2903 = vld [vmem:[%s2895 + $0x1c] sm:$0xf]
      %v2904 = vld [vmem:[%s2895 + $0x20] sm:$0xf]
      %v2905 = vld [vmem:[%s2895 + $0x24] sm:$0xf]
      %v2906 = vld [vmem:[%s2895 + $0x28] sm:$0xf]
      %v2907 = vld [vmem:[%s2895 + $0x2c] sm:$0xf]
      %v2908 = vld [vmem:[%s2895 + $0x30] sm:$0xf]
      %v2909 = vld [vmem:[%s2895 + $0x34] sm:$0xf]
      %v2910 = vld [vmem:[%s2895 + $0x38] sm:$0xf]
      %v2911 = vld [vmem:[%s2895 + $0x3c] sm:$0xf]
      %v2928 = vunpack.c.l.b16 %v2896
      %v2929 = vunpack.c.l.b16 %v2897
      %v2930 = vunpack.c.l.b16 %v2898
      %v2931 = vunpack.c.l.b16 %v2899
      %v2932 = vunpack.c.l.b16 %v2900
      %v2933 = vunpack.c.l.b16 %v2901
      %v2934 = vunpack.c.l.b16 %v2902
      %v2935 = vunpack.c.l.b16 %v2903
      %v2936 = vunpack.c.l.b16 %v2904
      %v2937 = vunpack.c.l.b16 %v2905
      %v2938 = vunpack.c.l.b16 %v2906
      %v2939 = vunpack.c.l.b16 %v2907
      %v2940 = vunpack.c.l.b16 %v2908
      %v2941 = vunpack.c.l.b16 %v2909
      %v2942 = vunpack.c.l.b16 %v2910
      %v2943 = vunpack.c.l.b16 %v2911
      %v2944 = vpack.c.b16 %v2929, %v2928
      %v2945 = vpack.c.b16 %v2931, %v2930
      %v2946 = vpack.c.b16 %v2933, %v2932
      %v2947 = vpack.c.b16 %v2935, %v2934
      %v2948 = vpack.c.b16 %v2937, %v2936
      %v2949 = vpack.c.b16 %v2939, %v2938
      %v2950 = vpack.c.b16 %v2941, %v2940
      %v2951 = vpack.c.b16 %v2943, %v2942
      %2960 = vmatprep.subr.bf16.mxu0 0
      %2961 = vmatpush1.bf16.msra.mxu0 %v2944
      %2962 = vmatprep.subr.bf16.mxu0 0
      %2963 = vmatpush1.bf16.msra.mxu0 %v2945
      %2964 = vmatprep.subr.bf16.mxu0 0
      %2965 = vmatpush1.bf16.msra.mxu0 %v2946
      %2966 = vmatprep.subr.bf16.mxu0 0
      %2967 = vmatpush1.bf16.msra.mxu0 %v2947
      %2968 = vmatprep.subr.bf16.mxu0 0
      %2969 = vmatpush1.bf16.msra.mxu0 %v2948
      %2970 = vmatprep.subr.bf16.mxu0 0
      %2971 = vmatpush1.bf16.msra.mxu0 %v2949
      %2972 = vmatprep.subr.bf16.mxu0 0
      %2973 = vmatpush1.bf16.msra.mxu0 %v2950
      %2974 = vmatprep.subr.bf16.mxu0 0
      %2975 = vmatpush1.bf16.msra.mxu0 %v2951
      %2976 = vmatprep.subr.bf16.mxu0 0
      %2977 = vmatpush1.bf16.msra.mxu0 0
      %2978 = vmatprep.subr.bf16.mxu0 0
      %2979 = vmatpush1.bf16.msra.mxu0 0
      %2980 = vmatprep.subr.bf16.mxu0 0
      %2981 = vmatpush1.bf16.msra.mxu0 0
      %2982 = vmatprep.subr.bf16.mxu0 0
      %2983 = vmatpush1.bf16.msra.mxu0 0
      %2984 = vmatprep.subr.bf16.mxu0 0
      %2985 = vmatpush1.bf16.msra.mxu0 0
      %2986 = vmatprep.subr.bf16.mxu0 0
      %2987 = vmatpush1.bf16.msra.mxu0 0
      %2988 = vmatprep.subr.bf16.mxu0 0
      %2989 = vmatpush1.bf16.msra.mxu0 0
      %2990 = vmatprep.subr.bf16.mxu0 0
      %2991 = vmatpush1.bf16.msra.mxu0 0
      %2992 = vmatprep.mubr.bf16.mxu0 0
      %2993 = vmatmul.mubr.bf16.gmra.mrb[0].mxu0 %v2894
      %v2994 = vpop.f32.mrb[0].mxu0
      %v2995 = vadd.f32 0.0, %v2994
      %v2996 = vpop.f32.mrb[0].mxu0
      %v2997 = vpop.f32.mrb[0].mxu0
      %v2998 = vadd.f32 0.0, %v2997
      %v2999 = vpop.f32.mrb[0].mxu0
      %3000 = vdwg.mxu0
      %v3001 = vadd.f32 %v2890, %v2995
      %v3002 = vadd.f32 %v2891, %v2998
      %v3003 = vld [vmem:[#allocation3 + $0x6] sm:$0xff]
      %v3004 = vld [vmem:[#allocation3 + $0xe] sm:$0x7f]
      %v3005 = vpack.c.bf16 %v3004, %v3003
      %s3006 = scalar_lea.vmem %s5, 192
      %v3007 = vld [vmem:[%s3006] sm:$0xf]
      %v3008 = vld [vmem:[%s3006 + $0x4] sm:$0xf]
      %v3009 = vld [vmem:[%s3006 + $0x8] sm:$0xf]
      %v3010 = vld [vmem:[%s3006 + $0xc] sm:$0xf]
      %v3011 = vld [vmem:[%s3006 + $0x10] sm:$0xf]
      %v3012 = vld [vmem:[%s3006 + $0x14] sm:$0xf]
      %v3013 = vld [vmem:[%s3006 + $0x18] sm:$0xf]
      %v3014 = vld [vmem:[%s3006 + $0x1c] sm:$0xf]
      %v3015 = vld [vmem:[%s3006 + $0x20] sm:$0xf]
      %v3016 = vld [vmem:[%s3006 + $0x24] sm:$0xf]
      %v3017 = vld [vmem:[%s3006 + $0x28] sm:$0xf]
      %v3018 = vld [vmem:[%s3006 + $0x2c] sm:$0xf]
      %v3019 = vld [vmem:[%s3006 + $0x30] sm:$0xf]
      %v3020 = vld [vmem:[%s3006 + $0x34] sm:$0xf]
      %v3021 = vld [vmem:[%s3006 + $0x38] sm:$0xf]
      %v3022 = vld [vmem:[%s3006 + $0x3c] sm:$0xf]
      %v3039 = vunpack.c.l.b16 %v3007
      %v3040 = vunpack.c.l.b16 %v3008
      %v3041 = vunpack.c.l.b16 %v3009
      %v3042 = vunpack.c.l.b16 %v3010
      %v3043 = vunpack.c.l.b16 %v3011
      %v3044 = vunpack.c.l.b16 %v3012
      %v3045 = vunpack.c.l.b16 %v3013
      %v3046 = vunpack.c.l.b16 %v3014
      %v3047 = vunpack.c.l.b16 %v3015
      %v3048 = vunpack.c.l.b16 %v3016
      %v3049 = vunpack.c.l.b16 %v3017
      %v3050 = vunpack.c.l.b16 %v3018
      %v3051 = vunpack.c.l.b16 %v3019
      %v3052 = vunpack.c.l.b16 %v3020
      %v3053 = vunpack.c.l.b16 %v3021
      %v3054 = vunpack.c.l.b16 %v3022
      %v3055 = vpack.c.b16 %v3040, %v3039
      %v3056 = vpack.c.b16 %v3042, %v3041
      %v3057 = vpack.c.b16 %v3044, %v3043
      %v3058 = vpack.c.b16 %v3046, %v3045
      %v3059 = vpack.c.b16 %v3048, %v3047
      %v3060 = vpack.c.b16 %v3050, %v3049
      %v3061 = vpack.c.b16 %v3052, %v3051
      %v3062 = vpack.c.b16 %v3054, %v3053
      %3071 = vmatprep.subr.bf16.mxu0 0
      %3072 = vmatpush1.bf16.msra.mxu0 %v3055
      %3073 = vmatprep.subr.bf16.mxu0 0
      %3074 = vmatpush1.bf16.msra.mxu0 %v3056
      %3075 = vmatprep.subr.bf16.mxu0 0
      %3076 = vmatpush1.bf16.msra.mxu0 %v3057
      %3077 = vmatprep.subr.bf16.mxu0 0
      %3078 = vmatpush1.bf16.msra.mxu0 %v3058
      %3079 = vmatprep.subr.bf16.mxu0 0
      %3080 = vmatpush1.bf16.msra.mxu0 %v3059
      %3081 = vmatprep.subr.bf16.mxu0 0
      %3082 = vmatpush1.bf16.msra.mxu0 %v3060
      %3083 = vmatprep.subr.bf16.mxu0 0
      %3084 = vmatpush1.bf16.msra.mxu0 %v3061
      %3085 = vmatprep.subr.bf16.mxu0 0
      %3086 = vmatpush1.bf16.msra.mxu0 %v3062
      %3087 = vmatprep.subr.bf16.mxu0 0
      %3088 = vmatpush1.bf16.msra.mxu0 0
      %3089 = vmatprep.subr.bf16.mxu0 0
      %3090 = vmatpush1.bf16.msra.mxu0 0
      %3091 = vmatprep.subr.bf16.mxu0 0
      %3092 = vmatpush1.bf16.msra.mxu0 0
      %3093 = vmatprep.subr.bf16.mxu0 0
      %3094 = vmatpush1.bf16.msra.mxu0 0
      %3095 = vmatprep.subr.bf16.mxu0 0
      %3096 = vmatpush1.bf16.msra.mxu0 0
      %3097 = vmatprep.subr.bf16.mxu0 0
      %3098 = vmatpush1.bf16.msra.mxu0 0
      %3099 = vmatprep.subr.bf16.mxu0 0
      %3100 = vmatpush1.bf16.msra.mxu0 0
      %3101 = vmatprep.subr.bf16.mxu0 0
      %3102 = vmatpush1.bf16.msra.mxu0 0
      %3103 = vmatprep.mubr.bf16.mxu0 0
      %3104 = vmatmul.mubr.bf16.gmra.mrb[0].mxu0 %v3005
      %v3105 = vpop.f32.mrb[0].mxu0
      %v3106 = vadd.f32 0.0, %v3105
      %v3107 = vpop.f32.mrb[0].mxu0
      %v3108 = vpop.f32.mrb[0].mxu0
      %v3109 = vadd.f32 0.0, %v3108
      %v3110 = vpop.f32.mrb[0].mxu0
      %3111 = vdwg.mxu0
      %v3112 = vadd.f32 %v3001, %v3106
      %v3113 = vadd.f32 %v3002, %v3109
      %v3114 = vld [vmem:[#allocation3 + $0x7] sm:$0xff]
      %v3115 = vld [vmem:[#allocation3 + $0xf] sm:$0x7f]
      %v3116 = vpack.c.bf16 %v3115, %v3114
      %s3117 = scalar_lea.vmem %s5, 256
      %v3118 = vld [vmem:[%s3117] sm:$0xf]
      %v3119 = vld [vmem:[%s3117 + $0x4] sm:$0xf]
      %v3120 = vld [vmem:[%s3117 + $0x8] sm:$0xf]
      %v3121 = vld [vmem:[%s3117 + $0xc] sm:$0xf]
      %v3122 = vld [vmem:[%s3117 + $0x10] sm:$0xf]
      %v3123 = vld [vmem:[%s3117 + $0x14] sm:$0xf]
      %v3124 = vld [vmem:[%s3117 + $0x18] sm:$0xf]
      %v3125 = vld [vmem:[%s3117 + $0x1c] sm:$0xf]
      %v3126 = vld [vmem:[%s3117 + $0x20] sm:$0xf]
      %v3127 = vld [vmem:[%s3117 + $0x24] sm:$0xf]
      %v3128 = vld [vmem:[%s3117 + $0x28] sm:$0xf]
      %v3129 = vld [vmem:[%s3117 + $0x2c] sm:$0xf]
      %v3130 = vld [vmem:[%s3117 + $0x30] sm:$0xf]
      %v3131 = vld [vmem:[%s3117 + $0x34] sm:$0xf]
      %v3132 = vld [vmem:[%s3117 + $0x38] sm:$0xf]
      %v3133 = vld [vmem:[%s3117 + $0x3c] sm:$0xf]
      %v3150 = vunpack.c.l.b16 %v3118
      %v3151 = vunpack.c.l.b16 %v3119
      %v3152 = vunpack.c.l.b16 %v3120
      %v3153 = vunpack.c.l.b16 %v3121
      %v3154 = vunpack.c.l.b16 %v3122
      %v3155 = vunpack.c.l.b16 %v3123
      %v3156 = vunpack.c.l.b16 %v3124
      %v3157 = vunpack.c.l.b16 %v3125
      %v3158 = vunpack.c.l.b16 %v3126
      %v3159 = vunpack.c.l.b16 %v3127
      %v3160 = vunpack.c.l.b16 %v3128
      %v3161 = vunpack.c.l.b16 %v3129
      %v3162 = vunpack.c.l.b16 %v3130
      %v3163 = vunpack.c.l.b16 %v3131
      %v3164 = vunpack.c.l.b16 %v3132
      %v3165 = vunpack.c.l.b16 %v3133
      %v3166 = vpack.c.b16 %v3151, %v3150
      %v3167 = vpack.c.b16 %v3153, %v3152
      %v3168 = vpack.c.b16 %v3155, %v3154
      %v3169 = vpack.c.b16 %v3157, %v3156
      %v3170 = vpack.c.b16 %v3159, %v3158
      %v3171 = vpack.c.b16 %v3161, %v3160
      %v3172 = vpack.c.b16 %v3163, %v3162
      %v3173 = vpack.c.b16 %v3165, %v3164
      %3182 = vmatprep.subr.bf16.mxu0 0
      %3183 = vmatpush1.bf16.msra.mxu0 %v3166
      %3184 = vmatprep.subr.bf16.mxu0 0
      %3185 = vmatpush1.bf16.msra.mxu0 %v3167
      %3186 = vmatprep.subr.bf16.mxu0 0
      %3187 = vmatpush1.bf16.msra.mxu0 %v3168
      %3188 = vmatprep.subr.bf16.mxu0 0
      %3189 = vmatpush1.bf16.msra.mxu0 %v3169
      %3190 = vmatprep.subr.bf16.mxu0 0
      %3191 = vmatpush1.bf16.msra.mxu0 %v3170
      %3192 = vmatprep.subr.bf16.mxu0 0
      %3193 = vmatpush1.bf16.msra.mxu0 %v3171
      %3194 = vmatprep.subr.bf16.mxu0 0
      %3195 = vmatpush1.bf16.msra.mxu0 %v3172
      %3196 = vmatprep.subr.bf16.mxu0 0
      %3197 = vmatpush1.bf16.msra.mxu0 %v3173
      %3198 = vmatprep.subr.bf16.mxu0 0
      %3199 = vmatpush1.bf16.msra.mxu0 0
      %3200 = vmatprep.subr.bf16.mxu0 0
      %3201 = vmatpush1.bf16.msra.mxu0 0
      %3202 = vmatprep.subr.bf16.mxu0 0
      %3203 = vmatpush1.bf16.msra.mxu0 0
      %3204 = vmatprep.subr.bf16.mxu0 0
      %3205 = vmatpush1.bf16.msra.mxu0 0
      %3206 = vmatprep.subr.bf16.mxu0 0
      %3207 = vmatpush1.bf16.msra.mxu0 0
      %3208 = vmatprep.subr.bf16.mxu0 0
      %3209 = vmatpush1.bf16.msra.mxu0 0
      %3210 = vmatprep.subr.bf16.mxu0 0
      %3211 = vmatpush1.bf16.msra.mxu0 0
      %3212 = vmatprep.subr.bf16.mxu0 0
      %3213 = vmatpush1.bf16.msra.mxu0 0
      %3214 = vmatprep.mubr.bf16.mxu0 0
      %3215 = vmatmul.mubr.bf16.gmra.mrb[0].mxu0 %v3116
      %v3216 = vpop.f32.mrb[0].mxu0
      %v3217 = vadd.f32 0.0, %v3216
      %v3218 = vpop.f32.mrb[0].mxu0
      %v3219 = vpop.f32.mrb[0].mxu0
      %v3220 = vadd.f32 0.0, %v3219
      %v3221 = vpop.f32.mrb[0].mxu0
      %3222 = vdwg.mxu0
      %v3223 = vadd.f32 %v3112, %v3217
      %v3224 = vadd.f32 %v3113, %v3220
      %v3225 = vld [vmem:[#allocation3 + $0x8] sm:$0xff]
      %v3226 = vld [vmem:[#allocation3 + $0x10] sm:$0x7f]
      %v3227 = vpack.c.bf16 %v3226, %v3225
      %s3228 = scalar_lea.vmem %s5, 320
      %v3229 = vld [vmem:[%s3228] sm:$0xf]
      %v3230 = vld [vmem:[%s3228 + $0x4] sm:$0xf]
      %v3231 = vld [vmem:[%s3228 + $0x8] sm:$0xf]
      %v3232 = vld [vmem:[%s3228 + $0xc] sm:$0xf]
      %v3233 = vld [vmem:[%s3228 + $0x10] sm:$0xf]
      %v3234 = vld [vmem:[%s3228 + $0x14] sm:$0xf]
      %v3235 = vld [vmem:[%s3228 + $0x18] sm:$0xf]
      %v3236 = vld [vmem:[%s3228 + $0x1c] sm:$0xf]
      %v3237 = vld [vmem:[%s3228 + $0x20] sm:$0xf]
      %v3238 = vld [vmem:[%s3228 + $0x24] sm:$0xf]
      %v3239 = vld [vmem:[%s3228 + $0x28] sm:$0xf]
      %v3240 = vld [vmem:[%s3228 + $0x2c] sm:$0xf]
      %v3241 = vld [vmem:[%s3228 + $0x30] sm:$0xf]
      %v3242 = vld [vmem:[%s3228 + $0x34] sm:$0xf]
      %v3243 = vld [vmem:[%s3228 + $0x38] sm:$0xf]
      %v3244 = vld [vmem:[%s3228 + $0x3c] sm:$0xf]
      %v3261 = vunpack.c.l.b16 %v3229
      %v3262 = vunpack.c.l.b16 %v3230
      %v3263 = vunpack.c.l.b16 %v3231
      %v3264 = vunpack.c.l.b16 %v3232
      %v3265 = vunpack.c.l.b16 %v3233
      %v3266 = vunpack.c.l.b16 %v3234
      %v3267 = vunpack.c.l.b16 %v3235
      %v3268 = vunpack.c.l.b16 %v3236
      %v3269 = vunpack.c.l.b16 %v3237
      %v3270 = vunpack.c.l.b16 %v3238
      %v3271 = vunpack.c.l.b16 %v3239
      %v3272 = vunpack.c.l.b16 %v3240
      %v3273 = vunpack.c.l.b16 %v3241
      %v3274 = vunpack.c.l.b16 %v3242
      %v3275 = vunpack.c.l.b16 %v3243
      %v3276 = vunpack.c.l.b16 %v3244
      %v3277 = vpack.c.b16 %v3262, %v3261
      %v3278 = vpack.c.b16 %v3264, %v3263
      %v3279 = vpack.c.b16 %v3266, %v3265
      %v3280 = vpack.c.b16 %v3268, %v3267
      %v3281 = vpack.c.b16 %v3270, %v3269
      %v3282 = vpack.c.b16 %v3272, %v3271
      %v3283 = vpack.c.b16 %v3274, %v3273
      %v3284 = vpack.c.b16 %v3276, %v3275
      %3293 = vmatprep.subr.bf16.mxu0 0
      %3294 = vmatpush1.bf16.msra.mxu0 %v3277
      %3295 = vmatprep.subr.bf16.mxu0 0
      %3296 = vmatpush1.bf16.msra.mxu0 %v3278
      %3297 = vmatprep.subr.bf16.mxu0 0
      %3298 = vmatpush1.bf16.msra.mxu0 %v3279
      %3299 = vmatprep.subr.bf16.mxu0 0
      %3300 = vmatpush1.bf16.msra.mxu0 %v3280
      %3301 = vmatprep.subr.bf16.mxu0 0
      %3302 = vmatpush1.bf16.msra.mxu0 %v3281
      %3303 = vmatprep.subr.bf16.mxu0 0
      %3304 = vmatpush1.bf16.msra.mxu0 %v3282
      %3305 = vmatprep.subr.bf16.mxu0 0
      %3306 = vmatpush1.bf16.msra.mxu0 %v3283
      %3307 = vmatprep.subr.bf16.mxu0 0
      %3308 = vmatpush1.bf16.msra.mxu0 %v3284
      %3309 = vmatprep.subr.bf16.mxu0 0
      %3310 = vmatpush1.bf16.msra.mxu0 0
      %3311 = vmatprep.subr.bf16.mxu0 0
      %3312 = vmatpush1.bf16.msra.mxu0 0
      %3313 = vmatprep.subr.bf16.mxu0 0
      %3314 = vmatpush1.bf16.msra.mxu0 0
      %3315 = vmatprep.subr.bf16.mxu0 0
      %3316 = vmatpush1.bf16.msra.mxu0 0
      %3317 = vmatprep.subr.bf16.mxu0 0
      %3318 = vmatpush1.bf16.msra.mxu0 0
      %3319 = vmatprep.subr.bf16.mxu0 0
      %3320 = vmatpush1.bf16.msra.mxu0 0
      %3321 = vmatprep.subr.bf16.mxu0 0
      %3322 = vmatpush1.bf16.msra.mxu0 0
      %3323 = vmatprep.subr.bf16.mxu0 0
      %3324 = vmatpush1.bf16.msra.mxu0 0
      %3325 = vmatprep.mubr.bf16.mxu0 0
      %3326 = vmatmul.mubr.bf16.gmra.mrb[0].mxu0 %v3227
      %v3327 = vpop.f32.mrb[0].mxu0
      %v3328 = vadd.f32 0.0, %v3327
      %v3329 = vpop.f32.mrb[0].mxu0
      %v3330 = vpop.f32.mrb[0].mxu0
      %v3331 = vadd.f32 0.0, %v3330
      %v3332 = vpop.f32.mrb[0].mxu0
      %3333 = vdwg.mxu0
      %v3334 = vadd.f32 %v3223, %v3328
      %v3335 = vadd.f32 %v3224, %v3331
      %v3336 = vld [vmem:[#allocation3 + $0xc] sm:$0xff]
      %v3337 = vld [vmem:[#allocation3 + $0x14] sm:$0x7f]
      %v3338 = vpack.c.bf16 %v3337, %v3336
      %s3339 = scalar_lea.vmem %s5, 384
      %v3340 = vld [vmem:[%s3339] sm:$0xf]
      %v3341 = vld [vmem:[%s3339 + $0x4] sm:$0xf]
      %v3342 = vld [vmem:[%s3339 + $0x8] sm:$0xf]
      %v3343 = vld [vmem:[%s3339 + $0xc] sm:$0xf]
      %v3344 = vld [vmem:[%s3339 + $0x10] sm:$0xf]
      %v3345 = vld [vmem:[%s3339 + $0x14] sm:$0xf]
      %v3346 = vld [vmem:[%s3339 + $0x18] sm:$0xf]
      %v3347 = vld [vmem:[%s3339 + $0x1c] sm:$0xf]
      %v3348 = vld [vmem:[%s3339 + $0x20] sm:$0xf]
      %v3349 = vld [vmem:[%s3339 + $0x24] sm:$0xf]
      %v3350 = vld [vmem:[%s3339 + $0x28] sm:$0xf]
      %v3351 = vld [vmem:[%s3339 + $0x2c] sm:$0xf]
      %v3352 = vld [vmem:[%s3339 + $0x30] sm:$0xf]
      %v3353 = vld [vmem:[%s3339 + $0x34] sm:$0xf]
      %v3354 = vld [vmem:[%s3339 + $0x38] sm:$0xf]
      %v3355 = vld [vmem:[%s3339 + $0x3c] sm:$0xf]
      %v3372 = vunpack.c.l.b16 %v3340
      %v3373 = vunpack.c.l.b16 %v3341
      %v3374 = vunpack.c.l.b16 %v3342
      %v3375 = vunpack.c.l.b16 %v3343
      %v3376 = vunpack.c.l.b16 %v3344
      %v3377 = vunpack.c.l.b16 %v3345
      %v3378 = vunpack.c.l.b16 %v3346
      %v3379 = vunpack.c.l.b16 %v3347
      %v3380 = vunpack.c.l.b16 %v3348
      %v3381 = vunpack.c.l.b16 %v3349
      %v3382 = vunpack.c.l.b16 %v3350
      %v3383 = vunpack.c.l.b16 %v3351
      %v3384 = vunpack.c.l.b16 %v3352
      %v3385 = vunpack.c.l.b16 %v3353
      %v3386 = vunpack.c.l.b16 %v3354
      %v3387 = vunpack.c.l.b16 %v3355
      %v3388 = vpack.c.b16 %v3373, %v3372
      %v3389 = vpack.c.b16 %v3375, %v3374
      %v3390 = vpack.c.b16 %v3377, %v3376
      %v3391 = vpack.c.b16 %v3379, %v3378
      %v3392 = vpack.c.b16 %v3381, %v3380
      %v3393 = vpack.c.b16 %v3383, %v3382
      %v3394 = vpack.c.b16 %v3385, %v3384
      %v3395 = vpack.c.b16 %v3387, %v3386
      %3404 = vmatprep.subr.bf16.mxu0 0
      %3405 = vmatpush1.bf16.msra.mxu0 %v3388
      %3406 = vmatprep.subr.bf16.mxu0 0
      %3407 = vmatpush1.bf16.msra.mxu0 %v3389
      %3408 = vmatprep.subr.bf16.mxu0 0
      %3409 = vmatpush1.bf16.msra.mxu0 %v3390
      %3410 = vmatprep.subr.bf16.mxu0 0
      %3411 = vmatpush1.bf16.msra.mxu0 %v3391
      %3412 = vmatprep.subr.bf16.mxu0 0
      %3413 = vmatpush1.bf16.msra.mxu0 %v3392
      %3414 = vmatprep.subr.bf16.mxu0 0
      %3415 = vmatpush1.bf16.msra.mxu0 %v3393
      %3416 = vmatprep.subr.bf16.mxu0 0
      %3417 = vmatpush1.bf16.msra.mxu0 %v3394
      %3418 = vmatprep.subr.bf16.mxu0 0
      %3419 = vmatpush1.bf16.msra.mxu0 %v3395
      %3420 = vmatprep.subr.bf16.mxu0 0
      %3421 = vmatpush1.bf16.msra.mxu0 0
      %3422 = vmatprep.subr.bf16.mxu0 0
      %3423 = vmatpush1.bf16.msra.mxu0 0
      %3424 = vmatprep.subr.bf16.mxu0 0
      %3425 = vmatpush1.bf16.msra.mxu0 0
      %3426 = vmatprep.subr.bf16.mxu0 0
      %3427 = vmatpush1.bf16.msra.mxu0 0
      %3428 = vmatprep.subr.bf16.mxu0 0
      %3429 = vmatpush1.bf16.msra.mxu0 0
      %3430 = vmatprep.subr.bf16.mxu0 0
      %3431 = vmatpush1.bf16.msra.mxu0 0
      %3432 = vmatprep.subr.bf16.mxu0 0
      %3433 = vmatpush1.bf16.msra.mxu0 0
      %3434 = vmatprep.subr.bf16.mxu0 0
      %3435 = vmatpush1.bf16.msra.mxu0 0
      %3436 = vmatprep.mubr.bf16.mxu0 0
      %3437 = vmatmul.mubr.bf16.gmra.mrb[0].mxu0 %v3338
      %v3438 = vpop.f32.mrb[0].mxu0
      %v3439 = vadd.f32 0.0, %v3438
      %v3440 = vpop.f32.mrb[0].mxu0
      %v3441 = vpop.f32.mrb[0].mxu0
      %v3442 = vadd.f32 0.0, %v3441
      %v3443 = vpop.f32.mrb[0].mxu0
      %3444 = vdwg.mxu0
      %v3445 = vadd.f32 %v3334, %v3439
      %v3446 = vadd.f32 %v3335, %v3442
      %v3447 = vld [vmem:[#allocation3 + $0xd] sm:$0xff]
      %v3448 = vld [vmem:[#allocation3 + $0x15] sm:$0x7f]
      %v3449 = vpack.c.bf16 %v3448, %v3447
      %s3450 = scalar_lea.vmem %s5, 448
      %v3451 = vld [vmem:[%s3450] sm:$0xf]
      %v3452 = vld [vmem:[%s3450 + $0x4] sm:$0xf]
      %v3453 = vld [vmem:[%s3450 + $0x8] sm:$0xf]
      %v3454 = vld [vmem:[%s3450 + $0xc] sm:$0xf]
      %v3455 = vld [vmem:[%s3450 + $0x10] sm:$0xf]
      %v3456 = vld [vmem:[%s3450 + $0x14] sm:$0xf]
      %v3457 = vld [vmem:[%s3450 + $0x18] sm:$0xf]
      %v3458 = vld [vmem:[%s3450 + $0x1c] sm:$0xf]
      %v3459 = vld [vmem:[%s3450 + $0x20] sm:$0xf]
      %v3460 = vld [vmem:[%s3450 + $0x24] sm:$0xf]
      %v3461 = vld [vmem:[%s3450 + $0x28] sm:$0xf]
      %v3462 = vld [vmem:[%s3450 + $0x2c] sm:$0xf]
      %v3463 = vld [vmem:[%s3450 + $0x30] sm:$0xf]
      %v3464 = vld [vmem:[%s3450 + $0x34] sm:$0xf]
      %v3465 = vld [vmem:[%s3450 + $0x38] sm:$0xf]
      %v3466 = vld [vmem:[%s3450 + $0x3c] sm:$0xf]
      %v3483 = vunpack.c.l.b16 %v3451
      %v3484 = vunpack.c.l.b16 %v3452
      %v3485 = vunpack.c.l.b16 %v3453
      %v3486 = vunpack.c.l.b16 %v3454
      %v3487 = vunpack.c.l.b16 %v3455
      %v3488 = vunpack.c.l.b16 %v3456
      %v3489 = vunpack.c.l.b16 %v3457
      %v3490 = vunpack.c.l.b16 %v3458
      %v3491 = vunpack.c.l.b16 %v3459
      %v3492 = vunpack.c.l.b16 %v3460
      %v3493 = vunpack.c.l.b16 %v3461
      %v3494 = vunpack.c.l.b16 %v3462
      %v3495 = vunpack.c.l.b16 %v3463
      %v3496 = vunpack.c.l.b16 %v3464
      %v3497 = vunpack.c.l.b16 %v3465
      %v3498 = vunpack.c.l.b16 %v3466
      %v3499 = vpack.c.b16 %v3484, %v3483
      %v3500 = vpack.c.b16 %v3486, %v3485
      %v3501 = vpack.c.b16 %v3488, %v3487
      %v3502 = vpack.c.b16 %v3490, %v3489
      %v3503 = vpack.c.b16 %v3492, %v3491
      %v3504 = vpack.c.b16 %v3494, %v3493
      %v3505 = vpack.c.b16 %v3496, %v3495
      %v3506 = vpack.c.b16 %v3498, %v3497
      %3515 = vmatprep.subr.bf16.mxu0 0
      %3516 = vmatpush1.bf16.msra.mxu0 %v3499
      %3517 = vmatprep.subr.bf16.mxu0 0
      %3518 = vmatpush1.bf16.msra.mxu0 %v3500
      %3519 = vmatprep.subr.bf16.mxu0 0
      %3520 = vmatpush1.bf16.msra.mxu0 %v3501
      %3521 = vmatprep.subr.bf16.mxu0 0
      %3522 = vmatpush1.bf16.msra.mxu0 %v3502
      %3523 = vmatprep.subr.bf16.mxu0 0
      %3524 = vmatpush1.bf16.msra.mxu0 %v3503
      %3525 = vmatprep.subr.bf16.mxu0 0
      %3526 = vmatpush1.bf16.msra.mxu0 %v3504
      %3527 = vmatprep.subr.bf16.mxu0 0
      %3528 = vmatpush1.bf16.msra.mxu0 %v3505
      %3529 = vmatprep.subr.bf16.mxu0 0
      %3530 = vmatpush1.bf16.msra.mxu0 %v3506
      %3531 = vmatprep.subr.bf16.mxu0 0
      %3532 = vmatpush1.bf16.msra.mxu0 0
      %3533 = vmatprep.subr.bf16.mxu0 0
      %3534 = vmatpush1.bf16.msra.mxu0 0
      %3535 = vmatprep.subr.bf16.mxu0 0
      %3536 = vmatpush1.bf16.msra.mxu0 0
      %3537 = vmatprep.subr.bf16.mxu0 0
      %3538 = vmatpush1.bf16.msra.mxu0 0
      %3539 = vmatprep.subr.bf16.mxu0 0
      %3540 = vmatpush1.bf16.msra.mxu0 0
      %3541 = vmatprep.subr.bf16.mxu0 0
      %3542 = vmatpush1.bf16.msra.mxu0 0
      %3543 = vmatprep.subr.bf16.mxu0 0
      %3544 = vmatpush1.bf16.msra.mxu0 0
      %3545 = vmatprep.subr.bf16.mxu0 0
      %3546 = vmatpush1.bf16.msra.mxu0 0
      %3547 = vmatprep.mubr.bf16.mxu0 0
      %3548 = vmatmul.mubr.bf16.gmra.mrb[0].mxu0 %v3449
      %v3549 = vpop.f32.mrb[0].mxu0
      %v3550 = vadd.f32 0.0, %v3549
      %v3551 = vpop.f32.mrb[0].mxu0
      %v3552 = vpop.f32.mrb[0].mxu0
      %v3553 = vadd.f32 0.0, %v3552
      %v3554 = vpop.f32.mrb[0].mxu0
      %3555 = vdwg.mxu0
      %v3556 = vadd.f32 %v3445, %v3550
      %v3557 = vadd.f32 %v3446, %v3553
      %v3558 = vld [vmem:[#allocation3 + $0xe] sm:$0xff]
      %v3559 = vld [vmem:[#allocation3 + $0x16] sm:$0x7f]
      %v3560 = vpack.c.bf16 %v3559, %v3558
      %s3561 = scalar_lea.vmem %s5, 512
      %v3562 = vld [vmem:[%s3561] sm:$0xf]
      %v3563 = vld [vmem:[%s3561 + $0x4] sm:$0xf]
      %v3564 = vld [vmem:[%s3561 + $0x8] sm:$0xf]
      %v3565 = vld [vmem:[%s3561 + $0xc] sm:$0xf]
      %v3566 = vld [vmem:[%s3561 + $0x10] sm:$0xf]
      %v3567 = vld [vmem:[%s3561 + $0x14] sm:$0xf]
      %v3568 = vld [vmem:[%s3561 + $0x18] sm:$0xf]
      %v3569 = vld [vmem:[%s3561 + $0x1c] sm:$0xf]
      %v3570 = vld [vmem:[%s3561 + $0x20] sm:$0xf]
      %v3571 = vld [vmem:[%s3561 + $0x24] sm:$0xf]
      %v3572 = vld [vmem:[%s3561 + $0x28] sm:$0xf]
      %v3573 = vld [vmem:[%s3561 + $0x2c] sm:$0xf]
      %v3574 = vld [vmem:[%s3561 + $0x30] sm:$0xf]
      %v3575 = vld [vmem:[%s3561 + $0x34] sm:$0xf]
      %v3576 = vld [vmem:[%s3561 + $0x38] sm:$0xf]
      %v3577 = vld [vmem:[%s3561 + $0x3c] sm:$0xf]
      %v3594 = vunpack.c.l.b16 %v3562
      %v3595 = vunpack.c.l.b16 %v3563
      %v3596 = vunpack.c.l.b16 %v3564
      %v3597 = vunpack.c.l.b16 %v3565
      %v3598 = vunpack.c.l.b16 %v3566
      %v3599 = vunpack.c.l.b16 %v3567
      %v3600 = vunpack.c.l.b16 %v3568
      %v3601 = vunpack.c.l.b16 %v3569
      %v3602 = vunpack.c.l.b16 %v3570
      %v3603 = vunpack.c.l.b16 %v3571
      %v3604 = vunpack.c.l.b16 %v3572
      %v3605 = vunpack.c.l.b16 %v3573
      %v3606 = vunpack.c.l.b16 %v3574
      %v3607 = vunpack.c.l.b16 %v3575
      %v3608 = vunpack.c.l.b16 %v3576
      %v3609 = vunpack.c.l.b16 %v3577
      %v3610 = vpack.c.b16 %v3595, %v3594
      %v3611 = vpack.c.b16 %v3597, %v3596
      %v3612 = vpack.c.b16 %v3599, %v3598
      %v3613 = vpack.c.b16 %v3601, %v3600
      %v3614 = vpack.c.b16 %v3603, %v3602
      %v3615 = vpack.c.b16 %v3605, %v3604
      %v3616 = vpack.c.b16 %v3607, %v3606
      %v3617 = vpack.c.b16 %v3609, %v3608
      %3626 = vmatprep.subr.bf16.mxu0 0
      %3627 = vmatpush1.bf16.msra.mxu0 %v3610
      %3628 = vmatprep.subr.bf16.mxu0 0
      %3629 = vmatpush1.bf16.msra.mxu0 %v3611
      %3630 = vmatprep.subr.bf16.mxu0 0
      %3631 = vmatpush1.bf16.msra.mxu0 %v3612
      %3632 = vmatprep.subr.bf16.mxu0 0
      %3633 = vmatpush1.bf16.msra.mxu0 %v3613
      %3634 = vmatprep.subr.bf16.mxu0 0
      %3635 = vmatpush1.bf16.msra.mxu0 %v3614
      %3636 = vmatprep.subr.bf16.mxu0 0
      %3637 = vmatpush1.bf16.msra.mxu0 %v3615
      %3638 = vmatprep.subr.bf16.mxu0 0
      %3639 = vmatpush1.bf16.msra.mxu0 %v3616
      %3640 = vmatprep.subr.bf16.mxu0 0
      %3641 = vmatpush1.bf16.msra.mxu0 %v3617
      %3642 = vmatprep.subr.bf16.mxu0 0
      %3643 = vmatpush1.bf16.msra.mxu0 0
      %3644 = vmatprep.subr.bf16.mxu0 0
      %3645 = vmatpush1.bf16.msra.mxu0 0
      %3646 = vmatprep.subr.bf16.mxu0 0
      %3647 = vmatpush1.bf16.msra.mxu0 0
      %3648 = vmatprep.subr.bf16.mxu0 0
      %3649 = vmatpush1.bf16.msra.mxu0 0
      %3650 = vmatprep.subr.bf16.mxu0 0
      %3651 = vmatpush1.bf16.msra.mxu0 0
      %3652 = vmatprep.subr.bf16.mxu0 0
      %3653 = vmatpush1.bf16.msra.mxu0 0
      %3654 = vmatprep.subr.bf16.mxu0 0
      %3655 = vmatpush1.bf16.msra.mxu0 0
      %3656 = vmatprep.subr.bf16.mxu0 0
      %3657 = vmatpush1.bf16.msra.mxu0 0
      %3658 = vmatprep.mubr.bf16.mxu0 0
      %3659 = vmatmul.mubr.bf16.gmra.mrb[0].mxu0 %v3560
      %v3660 = vpop.f32.mrb[0].mxu0
      %v3661 = vadd.f32 0.0, %v3660
      %v3662 = vpop.f32.mrb[0].mxu0
      %v3663 = vpop.f32.mrb[0].mxu0
      %v3664 = vadd.f32 0.0, %v3663
      %v3665 = vpop.f32.mrb[0].mxu0
      %3666 = vdwg.mxu0
      %v3667 = vadd.f32 %v3556, %v3661
      %v3668 = vadd.f32 %v3557, %v3664
      %v3669 = vmax.f32 %v3667, 0.0
      %v3670 = vmax.f32 %v3668, 0.0
      %v3673 = vrot.slane %v3669, 3
      %v3674 = vrot.slane %v3670, 3
      %v3675 = vsel %vm2658, %v3673, %v3674
      %v3677 = vrot.slane %v3670, 6
      %vm3679 = vcmask 1042432
      %v3680 = vsel %vm3679, %v3669, %v3675
      %vm3681 = vcmask 1045504
      %v3682 = vsel %vm3681, %v3680, %v3677
      %vm3683 = vcmask 1040384
      %v3684 = vsel %vm3683, %v3677, 0.0
      %3685 = vst [vmem:[%s278] sm:$0xff] %v3682
      %3686 = vst [vmem:[%s278 + $0x8] sm:$0xff] %v3684
      %p3687 = scmp.lt.s32.totalorder %s18, 1
      %s3688 = scalar_select %p3687, %s18, 1
      %s3689 = smul.addr %s3688, 2
      %s3690 = smul.addr %s3689, 8
      %s3691 = scalar_lea.vmem %s7, %s3690
      // Predicated region
      $region49: #{_lambda_.1} parent=47 // pred_check
        %p3692 = pneg %p188
      $region50: #{_lambda_.1} parent=47 // pred_check_branch
        %3694 = sbr.rel (%p3692) target = $region52
      $region51: #{_lambda_.1} parent=47 // pred_region
        _
      $region52: #{_lambda_.1} parent=47 // pred_fallthru
        _
    $region48: #{_lambda_.1} parent=5 // pred_fallthru
      _
    %p3695 = scmp.le.s32.totalorder 2, %s13
    // Predicated region
    $region53: #{_lambda_.1} parent=5 // pred_check
      %p3696 = pneg %p3695
    $region54: #{_lambda_.1} parent=5 // pred_check_branch
      %3698 = sbr.rel (%p3696) target = $region56
    $region55: #{_lambda_.1} parent=5 // pred_region
      %s3699 = ssub.s32 %s13, 2
      // Predicated region
      $region57: #{_lambda_.1} parent=55 // pred_check
        %p3700 = pneg %p194
      $region58: #{_lambda_.1} parent=55 // pred_check_branch
        %3702 = sbr.rel (%p3700) target = $region60
      $region59: #{_lambda_.1} parent=55 // pred_region
        %p3703 = scmp.lt.s32.totalorder %s19, 1
        %s3704 = scalar_select %p3703, %s19, 1
        %s3705 = smul.addr %s3704, 2
        %s3706 = smul.addr %s3705, 8
        %s3707 = scalar_lea.vmem %s7, %s3706
      $region60: #{_lambda_.1} parent=55 // pred_fallthru
        _
    $region56: #{_lambda_.1} parent=5 // pred_fallthru
      _
  $region6: #{_lambda_.1} parent=0 // loop_footer
    %s17 = sadd.s32 1, %s13
  $region7: #{_lambda_.1} parent=0 // loop_footer_branch
    %12 = sbr.rel target = $region3
  $region8: #{_lambda_.1} parent=0 // loop_exit
    _

</llo_original>
